<compile_context>
chip_gen: v6e
topology: v6e:2x2x1
jax: 0.10.0
libtpu: 0.0.40
codegen_flags: <defaults>
</compile_context>

<pallas_src>
import functools

import jax
import jax.numpy as jnp
import numpy as np
from jax import lax
from jax.experimental import pallas as pl
from jax.experimental.pallas import tpu as pltpu


# ----------------------------------------------------------------------------
# In-kernel helpers
# ----------------------------------------------------------------------------
def _mlp_split_first(a, b, wrefs):
    """MLP applied to cat(a, b) with the first weight pre-split (no lane concat).

    wrefs = [w0a, w0b, b0, w1, b1, ..., wL, bL]
    """
    h = (jnp.dot(a, wrefs[0][...], preferred_element_type=jnp.float32)
         + jnp.dot(b, wrefs[1][...], preferred_element_type=jnp.float32)
         + wrefs[2][...])
    rest = wrefs[3:]
    for i in range(len(rest) // 2):
        h = jnp.maximum(h, 0.0)
        h = (jnp.dot(h, rest[2 * i][...], preferred_element_type=jnp.float32)
             + rest[2 * i + 1][...])
    return h


def _softmax_lastdim(logits):
    logits = logits - jnp.max(logits, axis=-1, keepdims=True)
    e = jnp.exp(logits)
    return e / jnp.sum(e, axis=-1, keepdims=True)


# ----------------------------------------------------------------------------
# Fused kernel: encoder -> message-passing loop -> decoder (one grid step = one
# batch element; latents stay on-core the whole time).
# ----------------------------------------------------------------------------
def _fused_gen_kernel(mp_steps, n_per, x_ref, xs_ref, q_ref, embt_ref, *rest):
    out_ref = rest[-1]
    w = rest[:-1]

    # parse the flat weight-ref list: [msg_mlp, node_mlp] * mp_steps + [dec_mlp]
    gn_w = []
    idx = 0
    for _ in range(mp_steps):
        gn_w.append((w[idx:idx + n_per], w[idx + n_per:idx + 2 * n_per]))
        idx += 2 * n_per
    dec_w = w[idx:idx + n_per]

    x = x_ref[0]           # (N, dx)
    xs = xs_ref[0]         # (N, D) == cat(x, s)
    q = q_ref[0]           # (M, dx)
    embt = embt_ref[...]   # (dx, K)

    # ---- encoder: latents = softmax(x @ emb^T)^T @ cat(x, s) ----------------
    scores = _softmax_lastdim(
        jnp.dot(x, embt, preferred_element_type=jnp.float32))           # (N, K)
    # contract over N directly; no explicit scores.T materialization
    latents = lax.dot_general(scores, xs, (((0,), (0,)), ((), ())),
                              preferred_element_type=jnp.float32)       # (K, D)
    k_nodes = latents.shape[0]

    # ---- message passing on the bidirectional ring (XLU sublane rolls) ------
    # For receiver j:  inbox[j] = f(nodes[j], nodes[j-1]) + f(nodes[j], nodes[j+1])
    # (f = message MLP on cat(recv, send)).  The sum is symmetric in the two
    # neighbours, so the roll direction convention is irrelevant.
    for m_refs, n_refs in gn_w:
        nbr_a = pltpu.roll(latents, 1, axis=0)                 # one neighbour
        nbr_b = pltpu.roll(latents, k_nodes - 1, axis=0)       # the other one
        recv = jnp.concatenate([latents, latents], axis=0)     # (2K, D) receiver feats
        send = jnp.concatenate([nbr_a, nbr_b], axis=0)         # (2K, D) sender feats
        msgs = _mlp_split_first(recv, send, m_refs)            # (2K, D)
        inbox = msgs[:k_nodes] + msgs[k_nodes:]                # scatter-add by receiver
        latents = latents + _mlp_split_first(latents, inbox, n_refs)

    # ---- decoder: MLP(cat(softmax(q @ emb^T) @ latents, q)) -----------------
    scores_q = _softmax_lastdim(
        jnp.dot(q, embt, preferred_element_type=jnp.float32))           # (M, K)
    z = jnp.dot(scores_q, latents, preferred_element_type=jnp.float32)  # (M, D)
    # TODO(synk): output is only (M, dy)=(8,2) per step -> masked stores; a
    # lane-dense repack is not worth the relayout at this size.
    out_ref[0] = _mlp_split_first(z, q, dec_w)


# ----------------------------------------------------------------------------
# Parameter construction / wrapper
# ----------------------------------------------------------------------------
def mlp_params(key, d_in, d_out, d_h, nlayers):
    """[W0, b0, W1, b1, ..., WL, bL] — (Linear, ReLU) x nlayers then final Linear."""
    dims = [d_in] + [d_h] * nlayers + [d_out]
    params = []
    for i in range(len(dims) - 1):
        key, kw, kb = jax.random.split(key, 3)
        scale = 1.0 / np.sqrt(dims[i])
        params.append(jax.random.normal(kw, (dims[i], dims[i + 1]), jnp.float32) * scale)
        params.append(jax.random.normal(kb, (1, dims[i + 1]), jnp.float32) * 0.1)
    return params


def split_first(params, d_split):
    w0, b0 = params[0], params[1]
    return [w0[:d_split], w0[d_split:], b0] + list(params[2:])


def gen_forward(x, s, q, emb, gn_params, dec_params):
    B, N, dx = x.shape
    dy = s.shape[-1]
    M = q.shape[1]
    D = dx + dy

    emb_t = jnp.asarray(emb).T                       # (dx, K)
    xs = jnp.concatenate([x, s], axis=-1)            # (B, N, D) one-time glue

    weights = []
    for mp, npar in gn_params:
        weights += split_first(mp, D)
        weights += split_first(npar, D)
    dec_split = split_first(dec_params, D)
    weights += dec_split
    n_per = len(dec_split)

    kernel = functools.partial(_fused_gen_kernel, len(gn_params), n_per)

    in_specs = [pl.BlockSpec((1, N, dx), lambda b: (b, 0, 0)),
                pl.BlockSpec((1, N, D), lambda b: (b, 0, 0)),
                pl.BlockSpec((1, M, dx), lambda b: (b, 0, 0)),
                pl.BlockSpec(emb_t.shape, lambda b: (0, 0))]
    # grid-invariant index maps -> weights are DMA'd once and stay VMEM-resident
    in_specs += [pl.BlockSpec(w.shape, lambda b: (0, 0)) for w in weights]

    return pl.pallas_call(
        kernel,
        out_shape=jax.ShapeDtypeStruct((B, M, dy), jnp.float32),
        grid=(B,),
        in_specs=in_specs,
        out_specs=pl.BlockSpec((1, M, dy), lambda b: (b, 0, 0)),
        compiler_params=pltpu.CompilerParams(
            dimension_semantics=("parallel",)),   # v7x: one batch element per TC
    )(x, xs, q, emb_t, *weights)


# ----------------------------------------------------------------------------
# Pure-JAX reference (mirrors the PyTorch forward, one-hot/index semantics)
# ----------------------------------------------------------------------------
def mlp_ref(h, params):
    n = len(params) // 2
    for i in range(n):
        h = h @ params[2 * i] + params[2 * i + 1]
        if i < n - 1:
            h = jax.nn.relu(h)
    return h


def forward_ref(x, s, q, emb, senders, receivers, gn_params, dec_params):
    scores = jax.nn.softmax(jnp.einsum('bnd,kd->bnk', x, emb), axis=-1)
    latents = jnp.einsum('bnk,bnd->bkd', scores, jnp.concatenate([x, s], -1))
    for mp, npar in gn_params:
        messages = mlp_ref(jnp.concatenate([latents[:, receivers],
                                            latents[:, senders]], -1), mp)
        inbox = jnp.zeros_like(latents).at[:, receivers].add(messages)
        latents = latents + mlp_ref(jnp.concatenate([latents, inbox], -1), npar)
    scores_q = jax.nn.softmax(jnp.einsum('bmd,kd->bmk', q, emb), axis=-1)
    z = jnp.einsum('bmk,bkd->bmd', scores_q, latents)
    return mlp_ref(jnp.concatenate([z, q], -1), dec_params)


# ----------------------------------------------------------------------------
if __name__ == "__main__":
    B, N, M = 2, 16, 8
    DIM_X, DIM_Y, DIM_H = 4, 2, 32
    NLAYERS = 2
    MP_STEPS = 2
    K_NODES = 8
    D = DIM_X + DIM_Y

    # Fixed bidirectional ring graph over the K latent nodes (reference only).
    senders_np = np.concatenate([np.arange(K_NODES), np.arange(K_NODES)]).astype(np.int32)
    receivers_np = np.concatenate([(np.arange(K_NODES) + 1) % K_NODES,
                                   (np.arange(K_NODES) - 1) % K_NODES]).astype(np.int32)

    key = jax.random.PRNGKey(0)
    keys = jax.random.split(key, 8)
    x = jax.random.normal(keys[0], (B, N, DIM_X), jnp.float32)
    s = jax.random.normal(keys[1], (B, N, DIM_Y), jnp.float32)
    q = jax.random.normal(keys[2], (B, M, DIM_X), jnp.float32)
    emb = jax.random.normal(keys[3], (K_NODES, DIM_X), jnp.float32)

    gn_params = []
    kk = keys[4]
    for _ in range(MP_STEPS):   # share_blocks=False: independent params per step
        kk, k1, k2 = jax.random.split(kk, 3)
        gn_params.append((mlp_params(k1, 2 * D, D, DIM_H, NLAYERS),
                          mlp_params(k2, 2 * D, D, DIM_H, NLAYERS)))
    dec_params = mlp_params(keys[5], 2 * DIM_X + DIM_Y, DIM_Y, DIM_H, NLAYERS)

    out = gen_forward(x, s, q, emb, gn_params, dec_params)
    out = jax.block_until_ready(out)
    assert out.shape == (B, M, DIM_Y)

    ref = forward_ref(x, s, q, emb, jnp.asarray(senders_np), jnp.asarray(receivers_np),
                      gn_params, dec_params)
    np.testing.assert_allclose(np.asarray(out), np.asarray(ref), rtol=1e-4, atol=1e-4)
    print("KERNEL_OK")
</pallas_src>

<mosaic_0001>
module attributes {stable_mosaic.version = 11 : i64} {
  func.func @_fused_gen_kernel(%arg0: i32, %arg1: memref<1x16x4xf32, #tpu.memory_space<vmem>>, %arg2: memref<1x16x6xf32, #tpu.memory_space<vmem>>, %arg3: memref<1x8x4xf32, #tpu.memory_space<vmem>>, %arg4: memref<4x8xf32, #tpu.memory_space<vmem>>, %arg5: memref<6x32xf32, #tpu.memory_space<vmem>>, %arg6: memref<6x32xf32, #tpu.memory_space<vmem>>, %arg7: memref<1x32xf32, #tpu.memory_space<vmem>>, %arg8: memref<32x32xf32, #tpu.memory_space<vmem>>, %arg9: memref<1x32xf32, #tpu.memory_space<vmem>>, %arg10: memref<32x6xf32, #tpu.memory_space<vmem>>, %arg11: memref<1x6xf32, #tpu.memory_space<vmem>>, %arg12: memref<6x32xf32, #tpu.memory_space<vmem>>, %arg13: memref<6x32xf32, #tpu.memory_space<vmem>>, %arg14: memref<1x32xf32, #tpu.memory_space<vmem>>, %arg15: memref<32x32xf32, #tpu.memory_space<vmem>>, %arg16: memref<1x32xf32, #tpu.memory_space<vmem>>, %arg17: memref<32x6xf32, #tpu.memory_space<vmem>>, %arg18: memref<1x6xf32, #tpu.memory_space<vmem>>, %arg19: memref<6x32xf32, #tpu.memory_space<vmem>>, %arg20: memref<6x32xf32, #tpu.memory_space<vmem>>, %arg21: memref<1x32xf32, #tpu.memory_space<vmem>>, %arg22: memref<32x32xf32, #tpu.memory_space<vmem>>, %arg23: memref<1x32xf32, #tpu.memory_space<vmem>>, %arg24: memref<32x6xf32, #tpu.memory_space<vmem>>, %arg25: memref<1x6xf32, #tpu.memory_space<vmem>>, %arg26: memref<6x32xf32, #tpu.memory_space<vmem>>, %arg27: memref<6x32xf32, #tpu.memory_space<vmem>>, %arg28: memref<1x32xf32, #tpu.memory_space<vmem>>, %arg29: memref<32x32xf32, #tpu.memory_space<vmem>>, %arg30: memref<1x32xf32, #tpu.memory_space<vmem>>, %arg31: memref<32x6xf32, #tpu.memory_space<vmem>>, %arg32: memref<1x6xf32, #tpu.memory_space<vmem>>, %arg33: memref<6x32xf32, #tpu.memory_space<vmem>>, %arg34: memref<4x32xf32, #tpu.memory_space<vmem>>, %arg35: memref<1x32xf32, #tpu.memory_space<vmem>>, %arg36: memref<32x32xf32, #tpu.memory_space<vmem>>, %arg37: memref<1x32xf32, #tpu.memory_space<vmem>>, %arg38: memref<32x2xf32, #tpu.memory_space<vmem>>, %arg39: memref<1x2xf32, #tpu.memory_space<vmem>>, %arg40: memref<1x8x2xf32, #tpu.memory_space<vmem>>) attributes {dimension_semantics = [#tpu.dimension_semantics<parallel>], iteration_bounds = array<i64: 2>, scalar_prefetch = 0 : i64, scratch_operands = 0 : i64, tpu.core_type = #tpu.core_type<tc>, window_params = [{transform_indices = @transform_0, window_bounds = array<i64: 1, 16, 4>}, {transform_indices = @transform_1, window_bounds = array<i64: 1, 16, 6>}, {transform_indices = @transform_2, window_bounds = array<i64: 1, 8, 4>}, {pipeline_mode = #tpu.pipeline_mode<synchronous>, transform_indices = @transform_3, window_bounds = array<i64: 4, 8>}, {pipeline_mode = #tpu.pipeline_mode<synchronous>, transform_indices = @transform_4, window_bounds = array<i64: 6, 32>}, {pipeline_mode = #tpu.pipeline_mode<synchronous>, transform_indices = @transform_5, window_bounds = array<i64: 6, 32>}, {pipeline_mode = #tpu.pipeline_mode<synchronous>, transform_indices = @transform_6, window_bounds = array<i64: 1, 32>}, {pipeline_mode = #tpu.pipeline_mode<synchronous>, transform_indices = @transform_7, window_bounds = array<i64: 32, 32>}, {pipeline_mode = #tpu.pipeline_mode<synchronous>, transform_indices = @transform_8, window_bounds = array<i64: 1, 32>}, {pipeline_mode = #tpu.pipeline_mode<synchronous>, transform_indices = @transform_9, window_bounds = array<i64: 32, 6>}, {pipeline_mode = #tpu.pipeline_mode<synchronous>, transform_indices = @transform_10, window_bounds = array<i64: 1, 6>}, {pipeline_mode = #tpu.pipeline_mode<synchronous>, transform_indices = @transform_11, window_bounds = array<i64: 6, 32>}, {pipeline_mode = #tpu.pipeline_mode<synchronous>, transform_indices = @transform_12, window_bounds = array<i64: 6, 32>}, {pipeline_mode = #tpu.pipeline_mode<synchronous>, transform_indices = @transform_13, window_bounds = array<i64: 1, 32>}, {pipeline_mode = #tpu.pipeline_mode<synchronous>, transform_indices = @transform_14, window_bounds = array<i64: 32, 32>}, {pipeline_mode = #tpu.pipeline_mode<synchronous>, transform_indices = @transform_15, window_bounds = array<i64: 1, 32>}, {pipeline_mode = #tpu.pipeline_mode<synchronous>, transform_indices = @transform_16, window_bounds = array<i64: 32, 6>}, {pipeline_mode = #tpu.pipeline_mode<synchronous>, transform_indices = @transform_17, window_bounds = array<i64: 1, 6>}, {pipeline_mode = #tpu.pipeline_mode<synchronous>, transform_indices = @transform_18, window_bounds = array<i64: 6, 32>}, {pipeline_mode = #tpu.pipeline_mode<synchronous>, transform_indices = @transform_19, window_bounds = array<i64: 6, 32>}, {pipeline_mode = #tpu.pipeline_mode<synchronous>, transform_indices = @transform_20, window_bounds = array<i64: 1, 32>}, {pipeline_mode = #tpu.pipeline_mode<synchronous>, transform_indices = @transform_21, window_bounds = array<i64: 32, 32>}, {pipeline_mode = #tpu.pipeline_mode<synchronous>, transform_indices = @transform_22, window_bounds = array<i64: 1, 32>}, {pipeline_mode = #tpu.pipeline_mode<synchronous>, transform_indices = @transform_23, window_bounds = array<i64: 32, 6>}, {pipeline_mode = #tpu.pipeline_mode<synchronous>, transform_indices = @transform_24, window_bounds = array<i64: 1, 6>}, {pipeline_mode = #tpu.pipeline_mode<synchronous>, transform_indices = @transform_25, window_bounds = array<i64: 6, 32>}, {pipeline_mode = #tpu.pipeline_mode<synchronous>, transform_indices = @transform_26, window_bounds = array<i64: 6, 32>}, {pipeline_mode = #tpu.pipeline_mode<synchronous>, transform_indices = @transform_27, window_bounds = array<i64: 1, 32>}, {pipeline_mode = #tpu.pipeline_mode<synchronous>, transform_indices = @transform_28, window_bounds = array<i64: 32, 32>}, {pipeline_mode = #tpu.pipeline_mode<synchronous>, transform_indices = @transform_29, window_bounds = array<i64: 1, 32>}, {pipeline_mode = #tpu.pipeline_mode<synchronous>, transform_indices = @transform_30, window_bounds = array<i64: 32, 6>}, {pipeline_mode = #tpu.pipeline_mode<synchronous>, transform_indices = @transform_31, window_bounds = array<i64: 1, 6>}, {pipeline_mode = #tpu.pipeline_mode<synchronous>, transform_indices = @transform_32, window_bounds = array<i64: 6, 32>}, {pipeline_mode = #tpu.pipeline_mode<synchronous>, transform_indices = @transform_33, window_bounds = array<i64: 4, 32>}, {pipeline_mode = #tpu.pipeline_mode<synchronous>, transform_indices = @transform_34, window_bounds = array<i64: 1, 32>}, {pipeline_mode = #tpu.pipeline_mode<synchronous>, transform_indices = @transform_35, window_bounds = array<i64: 32, 32>}, {pipeline_mode = #tpu.pipeline_mode<synchronous>, transform_indices = @transform_36, window_bounds = array<i64: 1, 32>}, {pipeline_mode = #tpu.pipeline_mode<synchronous>, transform_indices = @transform_37, window_bounds = array<i64: 32, 2>}, {pipeline_mode = #tpu.pipeline_mode<synchronous>, transform_indices = @transform_38, window_bounds = array<i64: 1, 2>}, {transform_indices = @transform_39, window_bounds = array<i64: 1, 8, 2>}]} {
    %c0 = arith.constant 0 : index
    %c0_0 = arith.constant 0 : index
    %c0_1 = arith.constant 0 : index
    %0 = vector.load %arg1[%c0, %c0_0, %c0_1] : memref<1x16x4xf32, #tpu.memory_space<vmem>>, vector<1x16x4xf32>
    %1 = vector.shape_cast %0 : vector<1x16x4xf32> to vector<16x4xf32>
    %c0_2 = arith.constant 0 : index
    %c0_3 = arith.constant 0 : index
    %c0_4 = arith.constant 0 : index
    %2 = vector.load %arg2[%c0_2, %c0_3, %c0_4] : memref<1x16x6xf32, #tpu.memory_space<vmem>>, vector<1x16x6xf32>
    %3 = vector.shape_cast %2 : vector<1x16x6xf32> to vector<16x6xf32>
    %c0_5 = arith.constant 0 : index
    %c0_6 = arith.constant 0 : index
    %c0_7 = arith.constant 0 : index
    %4 = vector.load %arg3[%c0_5, %c0_6, %c0_7] : memref<1x8x4xf32, #tpu.memory_space<vmem>>, vector<1x8x4xf32>
    %5 = vector.shape_cast %4 : vector<1x8x4xf32> to vector<8x4xf32>
    %c0_8 = arith.constant 0 : index
    %c0_9 = arith.constant 0 : index
    %6 = vector.load %arg4[%c0_8, %c0_9] : memref<4x8xf32, #tpu.memory_space<vmem>>, vector<4x8xf32>
    %cst = arith.constant dense<0.000000e+00> : vector<16x8xf32>
    %7 = tpu.matmul %1, %6, %cst {dimension_numbers = #tpu.dot_dimension_numbers<[1], [0], [0], [1], [0, 0, 1, 1], [], []>} : vector<16x4xf32>, vector<4x8xf32>, vector<16x8xf32> -> vector<16x8xf32>
    %cst_10 = arith.constant dense<0xFF800000> : vector<16xf32>
    %8 = vector.multi_reduction <maximumf>, %7, %cst_10 [1] : vector<16x8xf32> to vector<16xf32>
    %9 = vector.shape_cast %8 : vector<16xf32> to vector<16x1xf32>
    %10 = vector.broadcast %9 : vector<16x1xf32> to vector<16x8xf32>
    %11 = arith.subf %7, %10 : vector<16x8xf32>
    %12 = math.exp %11 : vector<16x8xf32>
    %cst_11 = arith.constant dense<0.000000e+00> : vector<16xf32>
    %13 = vector.multi_reduction <add>, %12, %cst_11 [1] : vector<16x8xf32> to vector<16xf32>
    %14 = vector.shape_cast %13 : vector<16xf32> to vector<16x1xf32>
    %15 = vector.broadcast %14 : vector<16x1xf32> to vector<16x8xf32>
    %16 = arith.divf %12, %15 : vector<16x8xf32>
    %cst_12 = arith.constant dense<0.000000e+00> : vector<8x6xf32>
    %17 = tpu.matmul %16, %3, %cst_12 {dimension_numbers = #tpu.dot_dimension_numbers<[0], [0], [1], [1], [0, 1, 1, 1], [], []>} : vector<16x8xf32>, vector<16x6xf32>, vector<8x6xf32> -> vector<8x6xf32>
    %c1_i32 = arith.constant 1 : i32
    %18 = tpu.dynamic_rotate %17 by %c1_i32 dim 0 : vector<8x6xf32>, i32 -> vector<8x6xf32>
    %c7_i32 = arith.constant 7 : i32
    %19 = tpu.dynamic_rotate %17 by %c7_i32 dim 0 : vector<8x6xf32>, i32 -> vector<8x6xf32>
    %20 = tpu.concatenate %17, %17 in 0 : vector<8x6xf32>, vector<8x6xf32> -> vector<16x6xf32>
    %21 = tpu.concatenate %18, %19 in 0 : vector<8x6xf32>, vector<8x6xf32> -> vector<16x6xf32>
    %c0_13 = arith.constant 0 : index
    %c0_14 = arith.constant 0 : index
    %22 = vector.load %arg5[%c0_13, %c0_14] : memref<6x32xf32, #tpu.memory_space<vmem>>, vector<6x32xf32>
    %cst_15 = arith.constant dense<0.000000e+00> : vector<16x32xf32>
    %23 = tpu.matmul %20, %22, %cst_15 {dimension_numbers = #tpu.dot_dimension_numbers<[1], [0], [0], [1], [0, 0, 1, 1], [], []>} : vector<16x6xf32>, vector<6x32xf32>, vector<16x32xf32> -> vector<16x32xf32>
    %c0_16 = arith.constant 0 : index
    %c0_17 = arith.constant 0 : index
    %24 = vector.load %arg6[%c0_16, %c0_17] : memref<6x32xf32, #tpu.memory_space<vmem>>, vector<6x32xf32>
    %cst_18 = arith.constant dense<0.000000e+00> : vector<16x32xf32>
    %25 = tpu.matmul %21, %24, %cst_18 {dimension_numbers = #tpu.dot_dimension_numbers<[1], [0], [0], [1], [0, 0, 1, 1], [], []>} : vector<16x6xf32>, vector<6x32xf32>, vector<16x32xf32> -> vector<16x32xf32>
    %26 = arith.addf %23, %25 : vector<16x32xf32>
    %c0_19 = arith.constant 0 : index
    %c0_20 = arith.constant 0 : index
    %27 = vector.load %arg7[%c0_19, %c0_20] : memref<1x32xf32, #tpu.memory_space<vmem>>, vector<1x32xf32>
    %28 = vector.broadcast %27 : vector<1x32xf32> to vector<16x32xf32>
    %29 = arith.addf %26, %28 : vector<16x32xf32>
    %cst_21 = arith.constant 0.000000e+00 : f32
    %30 = vector.broadcast %cst_21 : f32 to vector<16x32xf32>
    %31 = arith.maximumf %29, %30 : vector<16x32xf32>
    %c0_22 = arith.constant 0 : index
    %c0_23 = arith.constant 0 : index
    %32 = vector.load %arg8[%c0_22, %c0_23] : memref<32x32xf32, #tpu.memory_space<vmem>>, vector<32x32xf32>
    %cst_24 = arith.constant dense<0.000000e+00> : vector<16x32xf32>
    %33 = tpu.matmul %31, %32, %cst_24 {dimension_numbers = #tpu.dot_dimension_numbers<[1], [0], [0], [1], [0, 0, 1, 1], [], []>} : vector<16x32xf32>, vector<32x32xf32>, vector<16x32xf32> -> vector<16x32xf32>
    %c0_25 = arith.constant 0 : index
    %c0_26 = arith.constant 0 : index
    %34 = vector.load %arg9[%c0_25, %c0_26] : memref<1x32xf32, #tpu.memory_space<vmem>>, vector<1x32xf32>
    %35 = vector.broadcast %34 : vector<1x32xf32> to vector<16x32xf32>
    %36 = arith.addf %33, %35 : vector<16x32xf32>
    %cst_27 = arith.constant 0.000000e+00 : f32
    %37 = vector.broadcast %cst_27 : f32 to vector<16x32xf32>
    %38 = arith.maximumf %36, %37 : vector<16x32xf32>
    %c0_28 = arith.constant 0 : index
    %c0_29 = arith.constant 0 : index
    %39 = vector.load %arg10[%c0_28, %c0_29] : memref<32x6xf32, #tpu.memory_space<vmem>>, vector<32x6xf32>
    %cst_30 = arith.constant dense<0.000000e+00> : vector<16x6xf32>
    %40 = tpu.matmul %38, %39, %cst_30 {dimension_numbers = #tpu.dot_dimension_numbers<[1], [0], [0], [1], [0, 0, 1, 1], [], []>} : vector<16x32xf32>, vector<32x6xf32>, vector<16x6xf32> -> vector<16x6xf32>
    %c0_31 = arith.constant 0 : index
    %c0_32 = arith.constant 0 : index
    %41 = vector.load %arg11[%c0_31, %c0_32] : memref<1x6xf32, #tpu.memory_space<vmem>>, vector<1x6xf32>
    %42 = vector.broadcast %41 : vector<1x6xf32> to vector<16x6xf32>
    %43 = arith.addf %40, %42 : vector<16x6xf32>
    %44 = vector.extract_strided_slice %43 {offsets = [0, 0], sizes = [8, 6], strides = [1, 1]} : vector<16x6xf32> to vector<8x6xf32>
    %45 = vector.extract_strided_slice %43 {offsets = [8, 0], sizes = [8, 6], strides = [1, 1]} : vector<16x6xf32> to vector<8x6xf32>
    %46 = arith.addf %44, %45 : vector<8x6xf32>
    %c0_33 = arith.constant 0 : index
    %c0_34 = arith.constant 0 : index
    %47 = vector.load %arg12[%c0_33, %c0_34] : memref<6x32xf32, #tpu.memory_space<vmem>>, vector<6x32xf32>
    %cst_35 = arith.constant dense<0.000000e+00> : vector<8x32xf32>
    %48 = tpu.matmul %17, %47, %cst_35 {dimension_numbers = #tpu.dot_dimension_numbers<[1], [0], [0], [1], [0, 0, 1, 1], [], []>} : vector<8x6xf32>, vector<6x32xf32>, vector<8x32xf32> -> vector<8x32xf32>
    %c0_36 = arith.constant 0 : index
    %c0_37 = arith.constant 0 : index
    %49 = vector.load %arg13[%c0_36, %c0_37] : memref<6x32xf32, #tpu.memory_space<vmem>>, vector<6x32xf32>
    %cst_38 = arith.constant dense<0.000000e+00> : vector<8x32xf32>
    %50 = tpu.matmul %46, %49, %cst_38 {dimension_numbers = #tpu.dot_dimension_numbers<[1], [0], [0], [1], [0, 0, 1, 1], [], []>} : vector<8x6xf32>, vector<6x32xf32>, vector<8x32xf32> -> vector<8x32xf32>
    %51 = arith.addf %48, %50 : vector<8x32xf32>
    %c0_39 = arith.constant 0 : index
    %c0_40 = arith.constant 0 : index
    %52 = vector.load %arg14[%c0_39, %c0_40] : memref<1x32xf32, #tpu.memory_space<vmem>>, vector<1x32xf32>
    %53 = vector.broadcast %52 : vector<1x32xf32> to vector<8x32xf32>
    %54 = arith.addf %51, %53 : vector<8x32xf32>
    %cst_41 = arith.constant 0.000000e+00 : f32
    %55 = vector.broadcast %cst_41 : f32 to vector<8x32xf32>
    %56 = arith.maximumf %54, %55 : vector<8x32xf32>
    %c0_42 = arith.constant 0 : index
    %c0_43 = arith.constant 0 : index
    %57 = vector.load %arg15[%c0_42, %c0_43] : memref<32x32xf32, #tpu.memory_space<vmem>>, vector<32x32xf32>
    %cst_44 = arith.constant dense<0.000000e+00> : vector<8x32xf32>
    %58 = tpu.matmul %56, %57, %cst_44 {dimension_numbers = #tpu.dot_dimension_numbers<[1], [0], [0], [1], [0, 0, 1, 1], [], []>} : vector<8x32xf32>, vector<32x32xf32>, vector<8x32xf32> -> vector<8x32xf32>
    %c0_45 = arith.constant 0 : index
    %c0_46 = arith.constant 0 : index
    %59 = vector.load %arg16[%c0_45, %c0_46] : memref<1x32xf32, #tpu.memory_space<vmem>>, vector<1x32xf32>
    %60 = vector.broadcast %59 : vector<1x32xf32> to vector<8x32xf32>
    %61 = arith.addf %58, %60 : vector<8x32xf32>
    %cst_47 = arith.constant 0.000000e+00 : f32
    %62 = vector.broadcast %cst_47 : f32 to vector<8x32xf32>
    %63 = arith.maximumf %61, %62 : vector<8x32xf32>
    %c0_48 = arith.constant 0 : index
    %c0_49 = arith.constant 0 : index
    %64 = vector.load %arg17[%c0_48, %c0_49] : memref<32x6xf32, #tpu.memory_space<vmem>>, vector<32x6xf32>
    %cst_50 = arith.constant dense<0.000000e+00> : vector<8x6xf32>
    %65 = tpu.matmul %63, %64, %cst_50 {dimension_numbers = #tpu.dot_dimension_numbers<[1], [0], [0], [1], [0, 0, 1, 1], [], []>} : vector<8x32xf32>, vector<32x6xf32>, vector<8x6xf32> -> vector<8x6xf32>
    %c0_51 = arith.constant 0 : index
    %c0_52 = arith.constant 0 : index
    %66 = vector.load %arg18[%c0_51, %c0_52] : memref<1x6xf32, #tpu.memory_space<vmem>>, vector<1x6xf32>
    %67 = vector.broadcast %66 : vector<1x6xf32> to vector<8x6xf32>
    %68 = arith.addf %65, %67 : vector<8x6xf32>
    %69 = arith.addf %17, %68 : vector<8x6xf32>
    %c1_i32_53 = arith.constant 1 : i32
    %70 = tpu.dynamic_rotate %69 by %c1_i32_53 dim 0 : vector<8x6xf32>, i32 -> vector<8x6xf32>
    %c7_i32_54 = arith.constant 7 : i32
    %71 = tpu.dynamic_rotate %69 by %c7_i32_54 dim 0 : vector<8x6xf32>, i32 -> vector<8x6xf32>
    %72 = tpu.concatenate %69, %69 in 0 : vector<8x6xf32>, vector<8x6xf32> -> vector<16x6xf32>
    %73 = tpu.concatenate %70, %71 in 0 : vector<8x6xf32>, vector<8x6xf32> -> vector<16x6xf32>
    %c0_55 = arith.constant 0 : index
    %c0_56 = arith.constant 0 : index
    %74 = vector.load %arg19[%c0_55, %c0_56] : memref<6x32xf32, #tpu.memory_space<vmem>>, vector<6x32xf32>
    %cst_57 = arith.constant dense<0.000000e+00> : vector<16x32xf32>
    %75 = tpu.matmul %72, %74, %cst_57 {dimension_numbers = #tpu.dot_dimension_numbers<[1], [0], [0], [1], [0, 0, 1, 1], [], []>} : vector<16x6xf32>, vector<6x32xf32>, vector<16x32xf32> -> vector<16x32xf32>
    %c0_58 = arith.constant 0 : index
    %c0_59 = arith.constant 0 : index
    %76 = vector.load %arg20[%c0_58, %c0_59] : memref<6x32xf32, #tpu.memory_space<vmem>>, vector<6x32xf32>
    %cst_60 = arith.constant dense<0.000000e+00> : vector<16x32xf32>
    %77 = tpu.matmul %73, %76, %cst_60 {dimension_numbers = #tpu.dot_dimension_numbers<[1], [0], [0], [1], [0, 0, 1, 1], [], []>} : vector<16x6xf32>, vector<6x32xf32>, vector<16x32xf32> -> vector<16x32xf32>
    %78 = arith.addf %75, %77 : vector<16x32xf32>
    %c0_61 = arith.constant 0 : index
    %c0_62 = arith.constant 0 : index
    %79 = vector.load %arg21[%c0_61, %c0_62] : memref<1x32xf32, #tpu.memory_space<vmem>>, vector<1x32xf32>
    %80 = vector.broadcast %79 : vector<1x32xf32> to vector<16x32xf32>
    %81 = arith.addf %78, %80 : vector<16x32xf32>
    %cst_63 = arith.constant 0.000000e+00 : f32
    %82 = vector.broadcast %cst_63 : f32 to vector<16x32xf32>
    %83 = arith.maximumf %81, %82 : vector<16x32xf32>
    %c0_64 = arith.constant 0 : index
    %c0_65 = arith.constant 0 : index
    %84 = vector.load %arg22[%c0_64, %c0_65] : memref<32x32xf32, #tpu.memory_space<vmem>>, vector<32x32xf32>
    %cst_66 = arith.constant dense<0.000000e+00> : vector<16x32xf32>
    %85 = tpu.matmul %83, %84, %cst_66 {dimension_numbers = #tpu.dot_dimension_numbers<[1], [0], [0], [1], [0, 0, 1, 1], [], []>} : vector<16x32xf32>, vector<32x32xf32>, vector<16x32xf32> -> vector<16x32xf32>
    %c0_67 = arith.constant 0 : index
    %c0_68 = arith.constant 0 : index
    %86 = vector.load %arg23[%c0_67, %c0_68] : memref<1x32xf32, #tpu.memory_space<vmem>>, vector<1x32xf32>
    %87 = vector.broadcast %86 : vector<1x32xf32> to vector<16x32xf32>
    %88 = arith.addf %85, %87 : vector<16x32xf32>
    %cst_69 = arith.constant 0.000000e+00 : f32
    %89 = vector.broadcast %cst_69 : f32 to vector<16x32xf32>
    %90 = arith.maximumf %88, %89 : vector<16x32xf32>
    %c0_70 = arith.constant 0 : index
    %c0_71 = arith.constant 0 : index
    %91 = vector.load %arg24[%c0_70, %c0_71] : memref<32x6xf32, #tpu.memory_space<vmem>>, vector<32x6xf32>
    %cst_72 = arith.constant dense<0.000000e+00> : vector<16x6xf32>
    %92 = tpu.matmul %90, %91, %cst_72 {dimension_numbers = #tpu.dot_dimension_numbers<[1], [0], [0], [1], [0, 0, 1, 1], [], []>} : vector<16x32xf32>, vector<32x6xf32>, vector<16x6xf32> -> vector<16x6xf32>
    %c0_73 = arith.constant 0 : index
    %c0_74 = arith.constant 0 : index
    %93 = vector.load %arg25[%c0_73, %c0_74] : memref<1x6xf32, #tpu.memory_space<vmem>>, vector<1x6xf32>
    %94 = vector.broadcast %93 : vector<1x6xf32> to vector<16x6xf32>
    %95 = arith.addf %92, %94 : vector<16x6xf32>
    %96 = vector.extract_strided_slice %95 {offsets = [0, 0], sizes = [8, 6], strides = [1, 1]} : vector<16x6xf32> to vector<8x6xf32>
    %97 = vector.extract_strided_slice %95 {offsets = [8, 0], sizes = [8, 6], strides = [1, 1]} : vector<16x6xf32> to vector<8x6xf32>
    %98 = arith.addf %96, %97 : vector<8x6xf32>
    %c0_75 = arith.constant 0 : index
    %c0_76 = arith.constant 0 : index
    %99 = vector.load %arg26[%c0_75, %c0_76] : memref<6x32xf32, #tpu.memory_space<vmem>>, vector<6x32xf32>
    %cst_77 = arith.constant dense<0.000000e+00> : vector<8x32xf32>
    %100 = tpu.matmul %69, %99, %cst_77 {dimension_numbers = #tpu.dot_dimension_numbers<[1], [0], [0], [1], [0, 0, 1, 1], [], []>} : vector<8x6xf32>, vector<6x32xf32>, vector<8x32xf32> -> vector<8x32xf32>
    %c0_78 = arith.constant 0 : index
    %c0_79 = arith.constant 0 : index
    %101 = vector.load %arg27[%c0_78, %c0_79] : memref<6x32xf32, #tpu.memory_space<vmem>>, vector<6x32xf32>
    %cst_80 = arith.constant dense<0.000000e+00> : vector<8x32xf32>
    %102 = tpu.matmul %98, %101, %cst_80 {dimension_numbers = #tpu.dot_dimension_numbers<[1], [0], [0], [1], [0, 0, 1, 1], [], []>} : vector<8x6xf32>, vector<6x32xf32>, vector<8x32xf32> -> vector<8x32xf32>
    %103 = arith.addf %100, %102 : vector<8x32xf32>
    %c0_81 = arith.constant 0 : index
    %c0_82 = arith.constant 0 : index
    %104 = vector.load %arg28[%c0_81, %c0_82] : memref<1x32xf32, #tpu.memory_space<vmem>>, vector<1x32xf32>
    %105 = vector.broadcast %104 : vector<1x32xf32> to vector<8x32xf32>
    %106 = arith.addf %103, %105 : vector<8x32xf32>
    %cst_83 = arith.constant 0.000000e+00 : f32
    %107 = vector.broadcast %cst_83 : f32 to vector<8x32xf32>
    %108 = arith.maximumf %106, %107 : vector<8x32xf32>
    %c0_84 = arith.constant 0 : index
    %c0_85 = arith.constant 0 : index
    %109 = vector.load %arg29[%c0_84, %c0_85] : memref<32x32xf32, #tpu.memory_space<vmem>>, vector<32x32xf32>
    %cst_86 = arith.constant dense<0.000000e+00> : vector<8x32xf32>
    %110 = tpu.matmul %108, %109, %cst_86 {dimension_numbers = #tpu.dot_dimension_numbers<[1], [0], [0], [1], [0, 0, 1, 1], [], []>} : vector<8x32xf32>, vector<32x32xf32>, vector<8x32xf32> -> vector<8x32xf32>
    %c0_87 = arith.constant 0 : index
    %c0_88 = arith.constant 0 : index
    %111 = vector.load %arg30[%c0_87, %c0_88] : memref<1x32xf32, #tpu.memory_space<vmem>>, vector<1x32xf32>
    %112 = vector.broadcast %111 : vector<1x32xf32> to vector<8x32xf32>
    %113 = arith.addf %110, %112 : vector<8x32xf32>
    %cst_89 = arith.constant 0.000000e+00 : f32
    %114 = vector.broadcast %cst_89 : f32 to vector<8x32xf32>
    %115 = arith.maximumf %113, %114 : vector<8x32xf32>
    %c0_90 = arith.constant 0 : index
    %c0_91 = arith.constant 0 : index
    %116 = vector.load %arg31[%c0_90, %c0_91] : memref<32x6xf32, #tpu.memory_space<vmem>>, vector<32x6xf32>
    %cst_92 = arith.constant dense<0.000000e+00> : vector<8x6xf32>
    %117 = tpu.matmul %115, %116, %cst_92 {dimension_numbers = #tpu.dot_dimension_numbers<[1], [0], [0], [1], [0, 0, 1, 1], [], []>} : vector<8x32xf32>, vector<32x6xf32>, vector<8x6xf32> -> vector<8x6xf32>
    %c0_93 = arith.constant 0 : index
    %c0_94 = arith.constant 0 : index
    %118 = vector.load %arg32[%c0_93, %c0_94] : memref<1x6xf32, #tpu.memory_space<vmem>>, vector<1x6xf32>
    %119 = vector.broadcast %118 : vector<1x6xf32> to vector<8x6xf32>
    %120 = arith.addf %117, %119 : vector<8x6xf32>
    %121 = arith.addf %69, %120 : vector<8x6xf32>
    %cst_95 = arith.constant dense<0.000000e+00> : vector<8x8xf32>
    %122 = tpu.matmul %5, %6, %cst_95 {dimension_numbers = #tpu.dot_dimension_numbers<[1], [0], [0], [1], [0, 0, 1, 1], [], []>} : vector<8x4xf32>, vector<4x8xf32>, vector<8x8xf32> -> vector<8x8xf32>
    %cst_96 = arith.constant dense<0xFF800000> : vector<8xf32>
    %123 = vector.multi_reduction <maximumf>, %122, %cst_96 [1] : vector<8x8xf32> to vector<8xf32>
    %124 = vector.shape_cast %123 : vector<8xf32> to vector<8x1xf32>
    %125 = vector.broadcast %124 : vector<8x1xf32> to vector<8x8xf32>
    %126 = arith.subf %122, %125 : vector<8x8xf32>
    %127 = math.exp %126 : vector<8x8xf32>
    %cst_97 = arith.constant dense<0.000000e+00> : vector<8xf32>
    %128 = vector.multi_reduction <add>, %127, %cst_97 [1] : vector<8x8xf32> to vector<8xf32>
    %129 = vector.shape_cast %128 : vector<8xf32> to vector<8x1xf32>
    %130 = vector.broadcast %129 : vector<8x1xf32> to vector<8x8xf32>
    %131 = arith.divf %127, %130 : vector<8x8xf32>
    %cst_98 = arith.constant dense<0.000000e+00> : vector<8x6xf32>
    %132 = tpu.matmul %131, %121, %cst_98 {dimension_numbers = #tpu.dot_dimension_numbers<[1], [0], [0], [1], [0, 0, 1, 1], [], []>} : vector<8x8xf32>, vector<8x6xf32>, vector<8x6xf32> -> vector<8x6xf32>
    %c0_99 = arith.constant 0 : index
    %c0_100 = arith.constant 0 : index
    %133 = vector.load %arg33[%c0_99, %c0_100] : memref<6x32xf32, #tpu.memory_space<vmem>>, vector<6x32xf32>
    %cst_101 = arith.constant dense<0.000000e+00> : vector<8x32xf32>
    %134 = tpu.matmul %132, %133, %cst_101 {dimension_numbers = #tpu.dot_dimension_numbers<[1], [0], [0], [1], [0, 0, 1, 1], [], []>} : vector<8x6xf32>, vector<6x32xf32>, vector<8x32xf32> -> vector<8x32xf32>
    %c0_102 = arith.constant 0 : index
    %c0_103 = arith.constant 0 : index
    %135 = vector.load %arg34[%c0_102, %c0_103] : memref<4x32xf32, #tpu.memory_space<vmem>>, vector<4x32xf32>
    %cst_104 = arith.constant dense<0.000000e+00> : vector<8x32xf32>
    %136 = tpu.matmul %5, %135, %cst_104 {dimension_numbers = #tpu.dot_dimension_numbers<[1], [0], [0], [1], [0, 0, 1, 1], [], []>} : vector<8x4xf32>, vector<4x32xf32>, vector<8x32xf32> -> vector<8x32xf32>
    %137 = arith.addf %134, %136 : vector<8x32xf32>
    %c0_105 = arith.constant 0 : index
    %c0_106 = arith.constant 0 : index
    %138 = vector.load %arg35[%c0_105, %c0_106] : memref<1x32xf32, #tpu.memory_space<vmem>>, vector<1x32xf32>
    %139 = vector.broadcast %138 : vector<1x32xf32> to vector<8x32xf32>
    %140 = arith.addf %137, %139 : vector<8x32xf32>
    %cst_107 = arith.constant 0.000000e+00 : f32
    %141 = vector.broadcast %cst_107 : f32 to vector<8x32xf32>
    %142 = arith.maximumf %140, %141 : vector<8x32xf32>
    %c0_108 = arith.constant 0 : index
    %c0_109 = arith.constant 0 : index
    %143 = vector.load %arg36[%c0_108, %c0_109] : memref<32x32xf32, #tpu.memory_space<vmem>>, vector<32x32xf32>
    %cst_110 = arith.constant dense<0.000000e+00> : vector<8x32xf32>
    %144 = tpu.matmul %142, %143, %cst_110 {dimension_numbers = #tpu.dot_dimension_numbers<[1], [0], [0], [1], [0, 0, 1, 1], [], []>} : vector<8x32xf32>, vector<32x32xf32>, vector<8x32xf32> -> vector<8x32xf32>
    %c0_111 = arith.constant 0 : index
    %c0_112 = arith.constant 0 : index
    %145 = vector.load %arg37[%c0_111, %c0_112] : memref<1x32xf32, #tpu.memory_space<vmem>>, vector<1x32xf32>
    %146 = vector.broadcast %145 : vector<1x32xf32> to vector<8x32xf32>
    %147 = arith.addf %144, %146 : vector<8x32xf32>
    %cst_113 = arith.constant 0.000000e+00 : f32
    %148 = vector.broadcast %cst_113 : f32 to vector<8x32xf32>
    %149 = arith.maximumf %147, %148 : vector<8x32xf32>
    %c0_114 = arith.constant 0 : index
    %c0_115 = arith.constant 0 : index
    %150 = vector.load %arg38[%c0_114, %c0_115] : memref<32x2xf32, #tpu.memory_space<vmem>>, vector<32x2xf32>
    %cst_116 = arith.constant dense<0.000000e+00> : vector<8x2xf32>
    %151 = tpu.matmul %149, %150, %cst_116 {dimension_numbers = #tpu.dot_dimension_numbers<[1], [0], [0], [1], [0, 0, 1, 1], [], []>} : vector<8x32xf32>, vector<32x2xf32>, vector<8x2xf32> -> vector<8x2xf32>
    %c0_117 = arith.constant 0 : index
    %c0_118 = arith.constant 0 : index
    %152 = vector.load %arg39[%c0_117, %c0_118] : memref<1x2xf32, #tpu.memory_space<vmem>>, vector<1x2xf32>
    %153 = vector.broadcast %152 : vector<1x2xf32> to vector<8x2xf32>
    %154 = arith.addf %151, %153 : vector<8x2xf32>
    %c0_119 = arith.constant 0 : index
    %c0_120 = arith.constant 0 : index
    %c0_121 = arith.constant 0 : index
    %155 = vector.load %arg40[%c0_119, %c0_120, %c0_121] : memref<1x8x2xf32, #tpu.memory_space<vmem>>, vector<1x8x2xf32>
    %156 = vector.shape_cast %155 : vector<1x8x2xf32> to vector<8x2xf32>
    %157 = vector.shape_cast %154 : vector<8x2xf32> to vector<1x8x2xf32>
    tpu.vector_store %arg40[%c0_119, %c0_120, %c0_121], %157 {strides = array<i32>} : memref<1x8x2xf32, #tpu.memory_space<vmem>>, vector<1x8x2xf32>,
    return
  }
  func.func @transform_0(%arg0: i32) -> (i32, i32, i32) {
    %c0_i32 = arith.constant 0 : i32
    %c0_i32_0 = arith.constant 0 : i32
    %c0_i32_1 = arith.constant 0 : i32
    return %arg0, %c0_i32, %c0_i32_0 : i32, i32, i32
  }
  func.func @transform_1(%arg0: i32) -> (i32, i32, i32) {
    %c0_i32 = arith.constant 0 : i32
    %c0_i32_0 = arith.constant 0 : i32
    %c0_i32_1 = arith.constant 0 : i32
    return %arg0, %c0_i32, %c0_i32_0 : i32, i32, i32
  }
  func.func @transform_2(%arg0: i32) -> (i32, i32, i32) {
    %c0_i32 = arith.constant 0 : i32
    %c0_i32_0 = arith.constant 0 : i32
    %c0_i32_1 = arith.constant 0 : i32
    return %arg0, %c0_i32, %c0_i32_0 : i32, i32, i32
  }
  func.func @transform_3(%arg0: i32) -> (i32, i32) {
    %c0_i32 = arith.constant 0 : i32
    %c0_i32_0 = arith.constant 0 : i32
    %c0_i32_1 = arith.constant 0 : i32
    return %c0_i32, %c0_i32_0 : i32, i32
  }
  func.func @transform_4(%arg0: i32) -> (i32, i32) {
    %c0_i32 = arith.constant 0 : i32
    %c0_i32_0 = arith.constant 0 : i32
    %c0_i32_1 = arith.constant 0 : i32
    return %c0_i32, %c0_i32_0 : i32, i32
  }
  func.func @transform_5(%arg0: i32) -> (i32, i32) {
    %c0_i32 = arith.constant 0 : i32
    %c0_i32_0 = arith.constant 0 : i32
    %c0_i32_1 = arith.constant 0 : i32
    return %c0_i32, %c0_i32_0 : i32, i32
  }
  func.func @transform_6(%arg0: i32) -> (i32, i32) {
    %c0_i32 = arith.constant 0 : i32
    %c0_i32_0 = arith.constant 0 : i32
    %c0_i32_1 = arith.constant 0 : i32
    return %c0_i32, %c0_i32_0 : i32, i32
  }
  func.func @transform_7(%arg0: i32) -> (i32, i32) {
    %c0_i32 = arith.constant 0 : i32
    %c0_i32_0 = arith.constant 0 : i32
    %c0_i32_1 = arith.constant 0 : i32
    return %c0_i32, %c0_i32_0 : i32, i32
  }
  func.func @transform_8(%arg0: i32) -> (i32, i32) {
    %c0_i32 = arith.constant 0 : i32
    %c0_i32_0 = arith.constant 0 : i32
    %c0_i32_1 = arith.constant 0 : i32
    return %c0_i32, %c0_i32_0 : i32, i32
  }
  func.func @transform_9(%arg0: i32) -> (i32, i32) {
    %c0_i32 = arith.constant 0 : i32
    %c0_i32_0 = arith.constant 0 : i32
    %c0_i32_1 = arith.constant 0 : i32
    return %c0_i32, %c0_i32_0 : i32, i32
  }
  func.func @transform_10(%arg0: i32) -> (i32, i32) {
    %c0_i32 = arith.constant 0 : i32
    %c0_i32_0 = arith.constant 0 : i32
    %c0_i32_1 = arith.constant 0 : i32
    return %c0_i32, %c0_i32_0 : i32, i32
  }
  func.func @transform_11(%arg0: i32) -> (i32, i32) {
    %c0_i32 = arith.constant 0 : i32
    %c0_i32_0 = arith.constant 0 : i32
    %c0_i32_1 = arith.constant 0 : i32
    return %c0_i32, %c0_i32_0 : i32, i32
  }
  func.func @transform_12(%arg0: i32) -> (i32, i32) {
    %c0_i32 = arith.constant 0 : i32
    %c0_i32_0 = arith.constant 0 : i32
    %c0_i32_1 = arith.constant 0 : i32
    return %c0_i32, %c0_i32_0 : i32, i32
  }
  func.func @transform_13(%arg0: i32) -> (i32, i32) {
    %c0_i32 = arith.constant 0 : i32
    %c0_i32_0 = arith.constant 0 : i32
    %c0_i32_1 = arith.constant 0 : i32
    return %c0_i32, %c0_i32_0 : i32, i32
  }
  func.func @transform_14(%arg0: i32) -> (i32, i32) {
    %c0_i32 = arith.constant 0 : i32
    %c0_i32_0 = arith.constant 0 : i32
    %c0_i32_1 = arith.constant 0 : i32
    return %c0_i32, %c0_i32_0 : i32, i32
  }
  func.func @transform_15(%arg0: i32) -> (i32, i32) {
    %c0_i32 = arith.constant 0 : i32
    %c0_i32_0 = arith.constant 0 : i32
    %c0_i32_1 = arith.constant 0 : i32
    return %c0_i32, %c0_i32_0 : i32, i32
  }
  func.func @transform_16(%arg0: i32) -> (i32, i32) {
    %c0_i32 = arith.constant 0 : i32
    %c0_i32_0 = arith.constant 0 : i32
    %c0_i32_1 = arith.constant 0 : i32
    return %c0_i32, %c0_i32_0 : i32, i32
  }
  func.func @transform_17(%arg0: i32) -> (i32, i32) {
    %c0_i32 = arith.constant 0 : i32
    %c0_i32_0 = arith.constant 0 : i32
    %c0_i32_1 = arith.constant 0 : i32
    return %c0_i32, %c0_i32_0 : i32, i32
  }
  func.func @transform_18(%arg0: i32) -> (i32, i32) {
    %c0_i32 = arith.constant 0 : i32
    %c0_i32_0 = arith.constant 0 : i32
    %c0_i32_1 = arith.constant 0 : i32
    return %c0_i32, %c0_i32_0 : i32, i32
  }
  func.func @transform_19(%arg0: i32) -> (i32, i32) {
    %c0_i32 = arith.constant 0 : i32
    %c0_i32_0 = arith.constant 0 : i32
    %c0_i32_1 = arith.constant 0 : i32
    return %c0_i32, %c0_i32_0 : i32, i32
  }
  func.func @transform_20(%arg0: i32) -> (i32, i32) {
    %c0_i32 = arith.constant 0 : i32
    %c0_i32_0 = arith.constant 0 : i32
    %c0_i32_1 = arith.constant 0 : i32
    return %c0_i32, %c0_i32_0 : i32, i32
  }
  func.func @transform_21(%arg0: i32) -> (i32, i32) {
    %c0_i32 = arith.constant 0 : i32
    %c0_i32_0 = arith.constant 0 : i32
    %c0_i32_1 = arith.constant 0 : i32
    return %c0_i32, %c0_i32_0 : i32, i32
  }
  func.func @transform_22(%arg0: i32) -> (i32, i32) {
    %c0_i32 = arith.constant 0 : i32
    %c0_i32_0 = arith.constant 0 : i32
    %c0_i32_1 = arith.constant 0 : i32
    return %c0_i32, %c0_i32_0 : i32, i32
  }
  func.func @transform_23(%arg0: i32) -> (i32, i32) {
    %c0_i32 = arith.constant 0 : i32
    %c0_i32_0 = arith.constant 0 : i32
    %c0_i32_1 = arith.constant 0 : i32
    return %c0_i32, %c0_i32_0 : i32, i32
  }
  func.func @transform_24(%arg0: i32) -> (i32, i32) {
    %c0_i32 = arith.constant 0 : i32
    %c0_i32_0 = arith.constant 0 : i32
    %c0_i32_1 = arith.constant 0 : i32
    return %c0_i32, %c0_i32_0 : i32, i32
  }
  func.func @transform_25(%arg0: i32) -> (i32, i32) {
    %c0_i32 = arith.constant 0 : i32
    %c0_i32_0 = arith.constant 0 : i32
    %c0_i32_1 = arith.constant 0 : i32
    return %c0_i32, %c0_i32_0 : i32, i32
  }
  func.func @transform_26(%arg0: i32) -> (i32, i32) {
    %c0_i32 = arith.constant 0 : i32
    %c0_i32_0 = arith.constant 0 : i32
    %c0_i32_1 = arith.constant 0 : i32
    return %c0_i32, %c0_i32_0 : i32, i32
  }
  func.func @transform_27(%arg0: i32) -> (i32, i32) {
    %c0_i32 = arith.constant 0 : i32
    %c0_i32_0 = arith.constant 0 : i32
    %c0_i32_1 = arith.constant 0 : i32
    return %c0_i32, %c0_i32_0 : i32, i32
  }
  func.func @transform_28(%arg0: i32) -> (i32, i32) {
    %c0_i32 = arith.constant 0 : i32
    %c0_i32_0 = arith.constant 0 : i32
    %c0_i32_1 = arith.constant 0 : i32
    return %c0_i32, %c0_i32_0 : i32, i32
  }
  func.func @transform_29(%arg0: i32) -> (i32, i32) {
    %c0_i32 = arith.constant 0 : i32
    %c0_i32_0 = arith.constant 0 : i32
    %c0_i32_1 = arith.constant 0 : i32
    return %c0_i32, %c0_i32_0 : i32, i32
  }
  func.func @transform_30(%arg0: i32) -> (i32, i32) {
    %c0_i32 = arith.constant 0 : i32
    %c0_i32_0 = arith.constant 0 : i32
    %c0_i32_1 = arith.constant 0 : i32
    return %c0_i32, %c0_i32_0 : i32, i32
  }
  func.func @transform_31(%arg0: i32) -> (i32, i32) {
    %c0_i32 = arith.constant 0 : i32
    %c0_i32_0 = arith.constant 0 : i32
    %c0_i32_1 = arith.constant 0 : i32
    return %c0_i32, %c0_i32_0 : i32, i32
  }
  func.func @transform_32(%arg0: i32) -> (i32, i32) {
    %c0_i32 = arith.constant 0 : i32
    %c0_i32_0 = arith.constant 0 : i32
    %c0_i32_1 = arith.constant 0 : i32
    return %c0_i32, %c0_i32_0 : i32, i32
  }
  func.func @transform_33(%arg0: i32) -> (i32, i32) {
    %c0_i32 = arith.constant 0 : i32
    %c0_i32_0 = arith.constant 0 : i32
    %c0_i32_1 = arith.constant 0 : i32
    return %c0_i32, %c0_i32_0 : i32, i32
  }
  func.func @transform_34(%arg0: i32) -> (i32, i32) {
    %c0_i32 = arith.constant 0 : i32
    %c0_i32_0 = arith.constant 0 : i32
    %c0_i32_1 = arith.constant 0 : i32
    return %c0_i32, %c0_i32_0 : i32, i32
  }
  func.func @transform_35(%arg0: i32) -> (i32, i32) {
    %c0_i32 = arith.constant 0 : i32
    %c0_i32_0 = arith.constant 0 : i32
    %c0_i32_1 = arith.constant 0 : i32
    return %c0_i32, %c0_i32_0 : i32, i32
  }
  func.func @transform_36(%arg0: i32) -> (i32, i32) {
    %c0_i32 = arith.constant 0 : i32
    %c0_i32_0 = arith.constant 0 : i32
    %c0_i32_1 = arith.constant 0 : i32
    return %c0_i32, %c0_i32_0 : i32, i32
  }
  func.func @transform_37(%arg0: i32) -> (i32, i32) {
    %c0_i32 = arith.constant 0 : i32
    %c0_i32_0 = arith.constant 0 : i32
    %c0_i32_1 = arith.constant 0 : i32
    return %c0_i32, %c0_i32_0 : i32, i32
  }
  func.func @transform_38(%arg0: i32) -> (i32, i32) {
    %c0_i32 = arith.constant 0 : i32
    %c0_i32_0 = arith.constant 0 : i32
    %c0_i32_1 = arith.constant 0 : i32
    return %c0_i32, %c0_i32_0 : i32, i32
  }
  func.func @transform_39(%arg0: i32) -> (i32, i32, i32) {
    %c0_i32 = arith.constant 0 : i32
    %c0_i32_0 = arith.constant 0 : i32
    %c0_i32_1 = arith.constant 0 : i32
    return %arg0, %c0_i32, %c0_i32_0 : i32, i32, i32
  }
}

</mosaic_0001>

<llo_original>
// kernel: tpu_custom_call.1
$region0: #{tpu_custom_call.1}
  #allocation0 [shape = 'u32[]', space=smem, size = 0x4, offset = 0x4, fixed_abs, tag = 'smem constant byte address 0x4 - core index']
  #allocation1 [shape = 'u32[144,128]{1,0:T(1,128)}', space=vmem, size = 0x12000, scoped, tag = 'internal scratch']
  %s0 = inlined_call_operand.smem [shape: u32[40], index: -1, kind: input, shape index: {}]
  %s1 = sld [smem:[%s0]]
  %s2 = scalar_lea.smem %s0, 1
  %s3 = sld [smem:[%s2]]
  %s4 = scalar_lea.smem %s0, 2
  %s5 = sld [smem:[%s4]]
  %s6 = scalar_lea.smem %s0, 3
  %s7 = sld [smem:[%s6]]
  %s8 = scalar_lea.smem %s0, 4
  %s9 = sld [smem:[%s8]]
  %s10 = scalar_lea.smem %s0, 5
  %s11 = sld [smem:[%s10]]
  %s12 = scalar_lea.smem %s0, 6
  %s13 = sld [smem:[%s12]]
  %s14 = scalar_lea.smem %s0, 7
  %s15 = sld [smem:[%s14]]
  %s16 = scalar_lea.smem %s0, 8
  %s17 = sld [smem:[%s16]]
  %s18 = scalar_lea.smem %s0, 9
  %s19 = sld [smem:[%s18]]
  %s20 = scalar_lea.smem %s0, 10
  %s21 = sld [smem:[%s20]]
  %s22 = scalar_lea.smem %s0, 11
  %s23 = sld [smem:[%s22]]
  %s24 = scalar_lea.smem %s0, 12
  %s25 = sld [smem:[%s24]]
  %s26 = scalar_lea.smem %s0, 13
  %s27 = sld [smem:[%s26]]
  %s28 = scalar_lea.smem %s0, 14
  %s29 = sld [smem:[%s28]]
  %s30 = scalar_lea.smem %s0, 15
  %s31 = sld [smem:[%s30]]
  %s32 = scalar_lea.smem %s0, 16
  %s33 = sld [smem:[%s32]]
  %s34 = scalar_lea.smem %s0, 17
  %s35 = sld [smem:[%s34]]
  %s36 = scalar_lea.smem %s0, 18
  %s37 = sld [smem:[%s36]]
  %s38 = scalar_lea.smem %s0, 19
  %s39 = sld [smem:[%s38]]
  %s40 = scalar_lea.smem %s0, 20
  %s41 = sld [smem:[%s40]]
  %s42 = scalar_lea.smem %s0, 21
  %s43 = sld [smem:[%s42]]
  %s44 = scalar_lea.smem %s0, 22
  %s45 = sld [smem:[%s44]]
  %s46 = scalar_lea.smem %s0, 23
  %s47 = sld [smem:[%s46]]
  %s48 = scalar_lea.smem %s0, 24
  %s49 = sld [smem:[%s48]]
  %s50 = scalar_lea.smem %s0, 25
  %s51 = sld [smem:[%s50]]
  %s52 = scalar_lea.smem %s0, 26
  %s53 = sld [smem:[%s52]]
  %s54 = scalar_lea.smem %s0, 27
  %s55 = sld [smem:[%s54]]
  %s56 = scalar_lea.smem %s0, 28
  %s57 = sld [smem:[%s56]]
  %s58 = scalar_lea.smem %s0, 29
  %s59 = sld [smem:[%s58]]
  %s60 = scalar_lea.smem %s0, 30
  %s61 = sld [smem:[%s60]]
  %s62 = scalar_lea.smem %s0, 31
  %s63 = sld [smem:[%s62]]
  %s64 = scalar_lea.smem %s0, 32
  %s65 = sld [smem:[%s64]]
  %s66 = scalar_lea.smem %s0, 33
  %s67 = sld [smem:[%s66]]
  %s68 = scalar_lea.smem %s0, 34
  %s69 = sld [smem:[%s68]]
  %s70 = scalar_lea.smem %s0, 35
  %s71 = sld [smem:[%s70]]
  %s72 = scalar_lea.smem %s0, 36
  %s73 = sld [smem:[%s72]]
  %s74 = scalar_lea.smem %s0, 37
  %s75 = sld [smem:[%s74]]
  %s76 = scalar_lea.smem %s0, 38
  %s77 = sld [smem:[%s76]]
  %s78 = scalar_lea.smem %s0, 39
  %s79 = sld [smem:[%s78]]
  %s80 = sld [smem:[#allocation0]]
  $region189: #{tpu_custom_call.1} parent=0
    _
  %s82 = ssub.s32 1, %s80
  %s83 = scalar_select 0, %s82, %s80
  loop: start=0, step=1, limit=4
  $region2: #{tpu_custom_call.1} parent=0 // loop_pre_header
    _
  $region3: #{tpu_custom_call.1} parent=0 // loop_header
    %s85 = sphi 0, %s89
    %p86 = scmp.ge.s32.totalorder %s85, 4
    %s95 = sphi 0, %s97
    %s98 = sphi 0, %s95
    %s99 = sphi 0, %s98
    %s115 = sphi 0, %s99
    %s121 = sphi 0, %s123
    %s124 = sphi 0, %s121
    %s125 = sphi 0, %s124
    %s141 = sphi 0, %s125
    %s147 = sphi 0, %s149
    %s150 = sphi 0, %s147
    %s151 = sphi 0, %s150
    %s167 = sphi 0, %s151
    %s171 = sphi 0, %s171
    %s173 = sphi 0, %s171
    %s174 = sphi 0, %s173
    %s188 = sphi 0, %s174
    %s192 = sphi 0, %s192
    %s194 = sphi 0, %s192
    %s195 = sphi 0, %s194
    %s209 = sphi 0, %s195
    %s213 = sphi 0, %s213
    %s215 = sphi 0, %s213
    %s216 = sphi 0, %s215
    %s230 = sphi 0, %s216
    %s234 = sphi 0, %s234
    %s236 = sphi 0, %s234
    %s237 = sphi 0, %s236
    %s251 = sphi 0, %s237
    %s255 = sphi 0, %s255
    %s257 = sphi 0, %s255
    %s258 = sphi 0, %s257
    %s272 = sphi 0, %s258
    %s276 = sphi 0, %s276
    %s278 = sphi 0, %s276
    %s279 = sphi 0, %s278
    %s293 = sphi 0, %s279
    %s297 = sphi 0, %s297
    %s299 = sphi 0, %s297
    %s300 = sphi 0, %s299
    %s314 = sphi 0, %s300
    %s318 = sphi 0, %s318
    %s320 = sphi 0, %s318
    %s321 = sphi 0, %s320
    %s335 = sphi 0, %s321
    %s339 = sphi 0, %s339
    %s341 = sphi 0, %s339
    %s342 = sphi 0, %s341
    %s356 = sphi 0, %s342
    %s360 = sphi 0, %s360
    %s362 = sphi 0, %s360
    %s363 = sphi 0, %s362
    %s377 = sphi 0, %s363
    %s381 = sphi 0, %s381
    %s383 = sphi 0, %s381
    %s384 = sphi 0, %s383
    %s398 = sphi 0, %s384
    %s402 = sphi 0, %s402
    %s404 = sphi 0, %s402
    %s405 = sphi 0, %s404
    %s419 = sphi 0, %s405
    %s423 = sphi 0, %s423
    %s425 = sphi 0, %s423
    %s426 = sphi 0, %s425
    %s440 = sphi 0, %s426
    %s444 = sphi 0, %s444
    %s446 = sphi 0, %s444
    %s447 = sphi 0, %s446
    %s461 = sphi 0, %s447
    %s465 = sphi 0, %s465
    %s467 = sphi 0, %s465
    %s468 = sphi 0, %s467
    %s482 = sphi 0, %s468
    %s486 = sphi 0, %s486
    %s488 = sphi 0, %s486
    %s489 = sphi 0, %s488
    %s503 = sphi 0, %s489
    %s507 = sphi 0, %s507
    %s509 = sphi 0, %s507
    %s510 = sphi 0, %s509
    %s524 = sphi 0, %s510
    %s528 = sphi 0, %s528
    %s530 = sphi 0, %s528
    %s531 = sphi 0, %s530
    %s545 = sphi 0, %s531
    %s549 = sphi 0, %s549
    %s551 = sphi 0, %s549
    %s552 = sphi 0, %s551
    %s566 = sphi 0, %s552
    %s570 = sphi 0, %s570
    %s572 = sphi 0, %s570
    %s573 = sphi 0, %s572
    %s587 = sphi 0, %s573
    %s591 = sphi 0, %s591
    %s593 = sphi 0, %s591
    %s594 = sphi 0, %s593
    %s608 = sphi 0, %s594
    %s612 = sphi 0, %s612
    %s614 = sphi 0, %s612
    %s615 = sphi 0, %s614
    %s629 = sphi 0, %s615
    %s633 = sphi 0, %s633
    %s635 = sphi 0, %s633
    %s636 = sphi 0, %s635
    %s650 = sphi 0, %s636
    %s654 = sphi 0, %s654
    %s656 = sphi 0, %s654
    %s657 = sphi 0, %s656
    %s671 = sphi 0, %s657
    %s675 = sphi 0, %s675
    %s677 = sphi 0, %s675
    %s678 = sphi 0, %s677
    %s692 = sphi 0, %s678
    %s696 = sphi 0, %s696
    %s698 = sphi 0, %s696
    %s699 = sphi 0, %s698
    %s713 = sphi 0, %s699
    %s717 = sphi 0, %s717
    %s719 = sphi 0, %s717
    %s720 = sphi 0, %s719
    %s734 = sphi 0, %s720
    %s738 = sphi 0, %s738
    %s740 = sphi 0, %s738
    %s741 = sphi 0, %s740
    %s755 = sphi 0, %s741
    %s759 = sphi 0, %s759
    %s761 = sphi 0, %s759
    %s762 = sphi 0, %s761
    %s776 = sphi 0, %s762
    %s780 = sphi 0, %s780
    %s782 = sphi 0, %s780
    %s783 = sphi 0, %s782
    %s797 = sphi 0, %s783
    %s801 = sphi 0, %s801
    %s803 = sphi 0, %s801
    %s804 = sphi 0, %s803
    %s818 = sphi 0, %s804
    %s822 = sphi 0, %s822
    %s824 = sphi 0, %s822
    %s825 = sphi 0, %s824
    %s839 = sphi 0, %s825
    %s843 = sphi 0, %s843
    %s845 = sphi 0, %s843
    %s846 = sphi 0, %s845
    %s860 = sphi 0, %s846
    %s864 = sphi 0, %s864
    %s866 = sphi 0, %s864
    %s867 = sphi 0, %s866
    %s881 = sphi 0, %s867
    %s885 = sphi 0, %s885
    %s887 = sphi 0, %s885
    %s888 = sphi 0, %s887
    %s902 = sphi 0, %s888
    %s906 = sphi 0, %s906
    %s908 = sphi 0, %s906
    %s909 = sphi 0, %s908
    %s923 = sphi 0, %s909
    %s929 = sphi 0, %s931
    %s932 = sphi 0, %s929
    %s933 = sphi 0, %s932
    %s949 = sphi 0, %s933
  $region4: #{tpu_custom_call.1} parent=0 // loop_header_branch
    %88 = sbr.rel (%p86) target = $region8
  $region5: #{tpu_custom_call.1} parent=0 // loop_body
    %s90 = ssub.s32 %s85, 1
    %s91 = ssub.s32 %s85, 2
    %s92 = sadd.s32 %s85, 1
    %s93 = ssub.s32 %s85, %s92
    %p94 = scmp.eq.s32.totalorder %s93, 0
    %s96 = sadd.s32 %s95, 1
    %s97 = scalar_select %p94, %s95, %s96
    %p100 = pneg %p94
    %p101 = scmp.eq.s32.totalorder %s85, 1
    %p102 = por %p100, %p101
    %p103 = scmp.ne.s32.totalorder %s95, %s98
    %p104 = scmp.eq.s32.totalorder %s85, 0
    %p105 = por %p103, %p104
    %p106 = scmp.ne.s32.totalorder %s95, %s98
    %p107 = scmp.eq.s32.totalorder %s90, 1
    %p108 = por %p106, %p107
    %p109 = scmp.ne.s32.totalorder %s98, %s99
    %p110 = scmp.eq.s32.totalorder %s90, 0
    %p111 = por %p109, %p110
    %p112 = scmp.ne.s32.totalorder %s98, %s99
    %p113 = scmp.eq.s32.totalorder %s91, 1
    %p114 = por %p112, %p113
    %p116 = scmp.ne.s32.totalorder %s99, %s115
    %p117 = scmp.eq.s32.totalorder %s91, 0
    %p118 = por %p116, %p117
    %s119 = ssub.s32 %s85, %s92
    %p120 = scmp.eq.s32.totalorder %s119, 0
    %s122 = sadd.s32 %s121, 1
    %s123 = scalar_select %p120, %s121, %s122
    %p126 = pneg %p120
    %p127 = scmp.eq.s32.totalorder %s85, 1
    %p128 = por %p126, %p127
    %p129 = scmp.ne.s32.totalorder %s121, %s124
    %p130 = scmp.eq.s32.totalorder %s85, 0
    %p131 = por %p129, %p130
    %p132 = scmp.ne.s32.totalorder %s121, %s124
    %p133 = scmp.eq.s32.totalorder %s90, 1
    %p134 = por %p132, %p133
    %p135 = scmp.ne.s32.totalorder %s124, %s125
    %p136 = scmp.eq.s32.totalorder %s90, 0
    %p137 = por %p135, %p136
    %p138 = scmp.ne.s32.totalorder %s124, %s125
    %p139 = scmp.eq.s32.totalorder %s91, 1
    %p140 = por %p138, %p139
    %p142 = scmp.ne.s32.totalorder %s125, %s141
    %p143 = scmp.eq.s32.totalorder %s91, 0
    %p144 = por %p142, %p143
    %s145 = ssub.s32 %s85, %s92
    %p146 = scmp.eq.s32.totalorder %s145, 0
    %s148 = sadd.s32 %s147, 1
    %s149 = scalar_select %p146, %s147, %s148
    %p152 = pneg %p146
    %p153 = scmp.eq.s32.totalorder %s85, 1
    %p154 = por %p152, %p153
    %p155 = scmp.ne.s32.totalorder %s147, %s150
    %p156 = scmp.eq.s32.totalorder %s85, 0
    %p157 = por %p155, %p156
    %p158 = scmp.ne.s32.totalorder %s147, %s150
    %p159 = scmp.eq.s32.totalorder %s90, 1
    %p160 = por %p158, %p159
    %p161 = scmp.ne.s32.totalorder %s150, %s151
    %p162 = scmp.eq.s32.totalorder %s90, 0
    %p163 = por %p161, %p162
    %p164 = scmp.ne.s32.totalorder %s150, %s151
    %p165 = scmp.eq.s32.totalorder %s91, 1
    %p166 = por %p164, %p165
    %p168 = scmp.ne.s32.totalorder %s151, %s167
    %p169 = scmp.eq.s32.totalorder %s91, 0
    %p170 = por %p168, %p169
    %s172 = sadd.s32 %s171, 1
    %p175 = scmp.eq.s32.totalorder %s85, 1
    %p176 = scmp.ne.s32.totalorder %s171, %s173
    %p177 = scmp.eq.s32.totalorder %s85, 0
    %p178 = por %p176, %p177
    %p179 = scmp.ne.s32.totalorder %s171, %s173
    %p180 = scmp.eq.s32.totalorder %s90, 1
    %p181 = por %p179, %p180
    %p182 = scmp.ne.s32.totalorder %s173, %s174
    %p183 = scmp.eq.s32.totalorder %s90, 0
    %p184 = por %p182, %p183
    %p185 = scmp.ne.s32.totalorder %s173, %s174
    %p186 = scmp.eq.s32.totalorder %s91, 1
    %p187 = por %p185, %p186
    %p189 = scmp.ne.s32.totalorder %s174, %s188
    %p190 = scmp.eq.s32.totalorder %s91, 0
    %p191 = por %p189, %p190
    %s193 = sadd.s32 %s192, 1
    %p196 = scmp.eq.s32.totalorder %s85, 1
    %p197 = scmp.ne.s32.totalorder %s192, %s194
    %p198 = scmp.eq.s32.totalorder %s85, 0
    %p199 = por %p197, %p198
    %p200 = scmp.ne.s32.totalorder %s192, %s194
    %p201 = scmp.eq.s32.totalorder %s90, 1
    %p202 = por %p200, %p201
    %p203 = scmp.ne.s32.totalorder %s194, %s195
    %p204 = scmp.eq.s32.totalorder %s90, 0
    %p205 = por %p203, %p204
    %p206 = scmp.ne.s32.totalorder %s194, %s195
    %p207 = scmp.eq.s32.totalorder %s91, 1
    %p208 = por %p206, %p207
    %p210 = scmp.ne.s32.totalorder %s195, %s209
    %p211 = scmp.eq.s32.totalorder %s91, 0
    %p212 = por %p210, %p211
    %s214 = sadd.s32 %s213, 1
    %p217 = scmp.eq.s32.totalorder %s85, 1
    %p218 = scmp.ne.s32.totalorder %s213, %s215
    %p219 = scmp.eq.s32.totalorder %s85, 0
    %p220 = por %p218, %p219
    %p221 = scmp.ne.s32.totalorder %s213, %s215
    %p222 = scmp.eq.s32.totalorder %s90, 1
    %p223 = por %p221, %p222
    %p224 = scmp.ne.s32.totalorder %s215, %s216
    %p225 = scmp.eq.s32.totalorder %s90, 0
    %p226 = por %p224, %p225
    %p227 = scmp.ne.s32.totalorder %s215, %s216
    %p228 = scmp.eq.s32.totalorder %s91, 1
    %p229 = por %p227, %p228
    %p231 = scmp.ne.s32.totalorder %s216, %s230
    %p232 = scmp.eq.s32.totalorder %s91, 0
    %p233 = por %p231, %p232
    %s235 = sadd.s32 %s234, 1
    %p238 = scmp.eq.s32.totalorder %s85, 1
    %p239 = scmp.ne.s32.totalorder %s234, %s236
    %p240 = scmp.eq.s32.totalorder %s85, 0
    %p241 = por %p239, %p240
    %p242 = scmp.ne.s32.totalorder %s234, %s236
    %p243 = scmp.eq.s32.totalorder %s90, 1
    %p244 = por %p242, %p243
    %p245 = scmp.ne.s32.totalorder %s236, %s237
    %p246 = scmp.eq.s32.totalorder %s90, 0
    %p247 = por %p245, %p246
    %p248 = scmp.ne.s32.totalorder %s236, %s237
    %p249 = scmp.eq.s32.totalorder %s91, 1
    %p250 = por %p248, %p249
    %p252 = scmp.ne.s32.totalorder %s237, %s251
    %p253 = scmp.eq.s32.totalorder %s91, 0
    %p254 = por %p252, %p253
    %s256 = sadd.s32 %s255, 1
    %p259 = scmp.eq.s32.totalorder %s85, 1
    %p260 = scmp.ne.s32.totalorder %s255, %s257
    %p261 = scmp.eq.s32.totalorder %s85, 0
    %p262 = por %p260, %p261
    %p263 = scmp.ne.s32.totalorder %s255, %s257
    %p264 = scmp.eq.s32.totalorder %s90, 1
    %p265 = por %p263, %p264
    %p266 = scmp.ne.s32.totalorder %s257, %s258
    %p267 = scmp.eq.s32.totalorder %s90, 0
    %p268 = por %p266, %p267
    %p269 = scmp.ne.s32.totalorder %s257, %s258
    %p270 = scmp.eq.s32.totalorder %s91, 1
    %p271 = por %p269, %p270
    %p273 = scmp.ne.s32.totalorder %s258, %s272
    %p274 = scmp.eq.s32.totalorder %s91, 0
    %p275 = por %p273, %p274
    %s277 = sadd.s32 %s276, 1
    %p280 = scmp.eq.s32.totalorder %s85, 1
    %p281 = scmp.ne.s32.totalorder %s276, %s278
    %p282 = scmp.eq.s32.totalorder %s85, 0
    %p283 = por %p281, %p282
    %p284 = scmp.ne.s32.totalorder %s276, %s278
    %p285 = scmp.eq.s32.totalorder %s90, 1
    %p286 = por %p284, %p285
    %p287 = scmp.ne.s32.totalorder %s278, %s279
    %p288 = scmp.eq.s32.totalorder %s90, 0
    %p289 = por %p287, %p288
    %p290 = scmp.ne.s32.totalorder %s278, %s279
    %p291 = scmp.eq.s32.totalorder %s91, 1
    %p292 = por %p290, %p291
    %p294 = scmp.ne.s32.totalorder %s279, %s293
    %p295 = scmp.eq.s32.totalorder %s91, 0
    %p296 = por %p294, %p295
    %s298 = sadd.s32 %s297, 1
    %p301 = scmp.eq.s32.totalorder %s85, 1
    %p302 = scmp.ne.s32.totalorder %s297, %s299
    %p303 = scmp.eq.s32.totalorder %s85, 0
    %p304 = por %p302, %p303
    %p305 = scmp.ne.s32.totalorder %s297, %s299
    %p306 = scmp.eq.s32.totalorder %s90, 1
    %p307 = por %p305, %p306
    %p308 = scmp.ne.s32.totalorder %s299, %s300
    %p309 = scmp.eq.s32.totalorder %s90, 0
    %p310 = por %p308, %p309
    %p311 = scmp.ne.s32.totalorder %s299, %s300
    %p312 = scmp.eq.s32.totalorder %s91, 1
    %p313 = por %p311, %p312
    %p315 = scmp.ne.s32.totalorder %s300, %s314
    %p316 = scmp.eq.s32.totalorder %s91, 0
    %p317 = por %p315, %p316
    %s319 = sadd.s32 %s318, 1
    %p322 = scmp.eq.s32.totalorder %s85, 1
    %p323 = scmp.ne.s32.totalorder %s318, %s320
    %p324 = scmp.eq.s32.totalorder %s85, 0
    %p325 = por %p323, %p324
    %p326 = scmp.ne.s32.totalorder %s318, %s320
    %p327 = scmp.eq.s32.totalorder %s90, 1
    %p328 = por %p326, %p327
    %p329 = scmp.ne.s32.totalorder %s320, %s321
    %p330 = scmp.eq.s32.totalorder %s90, 0
    %p331 = por %p329, %p330
    %p332 = scmp.ne.s32.totalorder %s320, %s321
    %p333 = scmp.eq.s32.totalorder %s91, 1
    %p334 = por %p332, %p333
    %p336 = scmp.ne.s32.totalorder %s321, %s335
    %p337 = scmp.eq.s32.totalorder %s91, 0
    %p338 = por %p336, %p337
    %s340 = sadd.s32 %s339, 1
    %p343 = scmp.eq.s32.totalorder %s85, 1
    %p344 = scmp.ne.s32.totalorder %s339, %s341
    %p345 = scmp.eq.s32.totalorder %s85, 0
    %p346 = por %p344, %p345
    %p347 = scmp.ne.s32.totalorder %s339, %s341
    %p348 = scmp.eq.s32.totalorder %s90, 1
    %p349 = por %p347, %p348
    %p350 = scmp.ne.s32.totalorder %s341, %s342
    %p351 = scmp.eq.s32.totalorder %s90, 0
    %p352 = por %p350, %p351
    %p353 = scmp.ne.s32.totalorder %s341, %s342
    %p354 = scmp.eq.s32.totalorder %s91, 1
    %p355 = por %p353, %p354
    %p357 = scmp.ne.s32.totalorder %s342, %s356
    %p358 = scmp.eq.s32.totalorder %s91, 0
    %p359 = por %p357, %p358
    %s361 = sadd.s32 %s360, 1
    %p364 = scmp.eq.s32.totalorder %s85, 1
    %p365 = scmp.ne.s32.totalorder %s360, %s362
    %p366 = scmp.eq.s32.totalorder %s85, 0
    %p367 = por %p365, %p366
    %p368 = scmp.ne.s32.totalorder %s360, %s362
    %p369 = scmp.eq.s32.totalorder %s90, 1
    %p370 = por %p368, %p369
    %p371 = scmp.ne.s32.totalorder %s362, %s363
    %p372 = scmp.eq.s32.totalorder %s90, 0
    %p373 = por %p371, %p372
    %p374 = scmp.ne.s32.totalorder %s362, %s363
    %p375 = scmp.eq.s32.totalorder %s91, 1
    %p376 = por %p374, %p375
    %p378 = scmp.ne.s32.totalorder %s363, %s377
    %p379 = scmp.eq.s32.totalorder %s91, 0
    %p380 = por %p378, %p379
    %s382 = sadd.s32 %s381, 1
    %p385 = scmp.eq.s32.totalorder %s85, 1
    %p386 = scmp.ne.s32.totalorder %s381, %s383
    %p387 = scmp.eq.s32.totalorder %s85, 0
    %p388 = por %p386, %p387
    %p389 = scmp.ne.s32.totalorder %s381, %s383
    %p390 = scmp.eq.s32.totalorder %s90, 1
    %p391 = por %p389, %p390
    %p392 = scmp.ne.s32.totalorder %s383, %s384
    %p393 = scmp.eq.s32.totalorder %s90, 0
    %p394 = por %p392, %p393
    %p395 = scmp.ne.s32.totalorder %s383, %s384
    %p396 = scmp.eq.s32.totalorder %s91, 1
    %p397 = por %p395, %p396
    %p399 = scmp.ne.s32.totalorder %s384, %s398
    %p400 = scmp.eq.s32.totalorder %s91, 0
    %p401 = por %p399, %p400
    %s403 = sadd.s32 %s402, 1
    %p406 = scmp.eq.s32.totalorder %s85, 1
    %p407 = scmp.ne.s32.totalorder %s402, %s404
    %p408 = scmp.eq.s32.totalorder %s85, 0
    %p409 = por %p407, %p408
    %p410 = scmp.ne.s32.totalorder %s402, %s404
    %p411 = scmp.eq.s32.totalorder %s90, 1
    %p412 = por %p410, %p411
    %p413 = scmp.ne.s32.totalorder %s404, %s405
    %p414 = scmp.eq.s32.totalorder %s90, 0
    %p415 = por %p413, %p414
    %p416 = scmp.ne.s32.totalorder %s404, %s405
    %p417 = scmp.eq.s32.totalorder %s91, 1
    %p418 = por %p416, %p417
    %p420 = scmp.ne.s32.totalorder %s405, %s419
    %p421 = scmp.eq.s32.totalorder %s91, 0
    %p422 = por %p420, %p421
    %s424 = sadd.s32 %s423, 1
    %p427 = scmp.eq.s32.totalorder %s85, 1
    %p428 = scmp.ne.s32.totalorder %s423, %s425
    %p429 = scmp.eq.s32.totalorder %s85, 0
    %p430 = por %p428, %p429
    %p431 = scmp.ne.s32.totalorder %s423, %s425
    %p432 = scmp.eq.s32.totalorder %s90, 1
    %p433 = por %p431, %p432
    %p434 = scmp.ne.s32.totalorder %s425, %s426
    %p435 = scmp.eq.s32.totalorder %s90, 0
    %p436 = por %p434, %p435
    %p437 = scmp.ne.s32.totalorder %s425, %s426
    %p438 = scmp.eq.s32.totalorder %s91, 1
    %p439 = por %p437, %p438
    %p441 = scmp.ne.s32.totalorder %s426, %s440
    %p442 = scmp.eq.s32.totalorder %s91, 0
    %p443 = por %p441, %p442
    %s445 = sadd.s32 %s444, 1
    %p448 = scmp.eq.s32.totalorder %s85, 1
    %p449 = scmp.ne.s32.totalorder %s444, %s446
    %p450 = scmp.eq.s32.totalorder %s85, 0
    %p451 = por %p449, %p450
    %p452 = scmp.ne.s32.totalorder %s444, %s446
    %p453 = scmp.eq.s32.totalorder %s90, 1
    %p454 = por %p452, %p453
    %p455 = scmp.ne.s32.totalorder %s446, %s447
    %p456 = scmp.eq.s32.totalorder %s90, 0
    %p457 = por %p455, %p456
    %p458 = scmp.ne.s32.totalorder %s446, %s447
    %p459 = scmp.eq.s32.totalorder %s91, 1
    %p460 = por %p458, %p459
    %p462 = scmp.ne.s32.totalorder %s447, %s461
    %p463 = scmp.eq.s32.totalorder %s91, 0
    %p464 = por %p462, %p463
    %s466 = sadd.s32 %s465, 1
    %p469 = scmp.eq.s32.totalorder %s85, 1
    %p470 = scmp.ne.s32.totalorder %s465, %s467
    %p471 = scmp.eq.s32.totalorder %s85, 0
    %p472 = por %p470, %p471
    %p473 = scmp.ne.s32.totalorder %s465, %s467
    %p474 = scmp.eq.s32.totalorder %s90, 1
    %p475 = por %p473, %p474
    %p476 = scmp.ne.s32.totalorder %s467, %s468
    %p477 = scmp.eq.s32.totalorder %s90, 0
    %p478 = por %p476, %p477
    %p479 = scmp.ne.s32.totalorder %s467, %s468
    %p480 = scmp.eq.s32.totalorder %s91, 1
    %p481 = por %p479, %p480
    %p483 = scmp.ne.s32.totalorder %s468, %s482
    %p484 = scmp.eq.s32.totalorder %s91, 0
    %p485 = por %p483, %p484
    %s487 = sadd.s32 %s486, 1
    %p490 = scmp.eq.s32.totalorder %s85, 1
    %p491 = scmp.ne.s32.totalorder %s486, %s488
    %p492 = scmp.eq.s32.totalorder %s85, 0
    %p493 = por %p491, %p492
    %p494 = scmp.ne.s32.totalorder %s486, %s488
    %p495 = scmp.eq.s32.totalorder %s90, 1
    %p496 = por %p494, %p495
    %p497 = scmp.ne.s32.totalorder %s488, %s489
    %p498 = scmp.eq.s32.totalorder %s90, 0
    %p499 = por %p497, %p498
    %p500 = scmp.ne.s32.totalorder %s488, %s489
    %p501 = scmp.eq.s32.totalorder %s91, 1
    %p502 = por %p500, %p501
    %p504 = scmp.ne.s32.totalorder %s489, %s503
    %p505 = scmp.eq.s32.totalorder %s91, 0
    %p506 = por %p504, %p505
    %s508 = sadd.s32 %s507, 1
    %p511 = scmp.eq.s32.totalorder %s85, 1
    %p512 = scmp.ne.s32.totalorder %s507, %s509
    %p513 = scmp.eq.s32.totalorder %s85, 0
    %p514 = por %p512, %p513
    %p515 = scmp.ne.s32.totalorder %s507, %s509
    %p516 = scmp.eq.s32.totalorder %s90, 1
    %p517 = por %p515, %p516
    %p518 = scmp.ne.s32.totalorder %s509, %s510
    %p519 = scmp.eq.s32.totalorder %s90, 0
    %p520 = por %p518, %p519
    %p521 = scmp.ne.s32.totalorder %s509, %s510
    %p522 = scmp.eq.s32.totalorder %s91, 1
    %p523 = por %p521, %p522
    %p525 = scmp.ne.s32.totalorder %s510, %s524
    %p526 = scmp.eq.s32.totalorder %s91, 0
    %p527 = por %p525, %p526
    %s529 = sadd.s32 %s528, 1
    %p532 = scmp.eq.s32.totalorder %s85, 1
    %p533 = scmp.ne.s32.totalorder %s528, %s530
    %p534 = scmp.eq.s32.totalorder %s85, 0
    %p535 = por %p533, %p534
    %p536 = scmp.ne.s32.totalorder %s528, %s530
    %p537 = scmp.eq.s32.totalorder %s90, 1
    %p538 = por %p536, %p537
    %p539 = scmp.ne.s32.totalorder %s530, %s531
    %p540 = scmp.eq.s32.totalorder %s90, 0
    %p541 = por %p539, %p540
    %p542 = scmp.ne.s32.totalorder %s530, %s531
    %p543 = scmp.eq.s32.totalorder %s91, 1
    %p544 = por %p542, %p543
    %p546 = scmp.ne.s32.totalorder %s531, %s545
    %p547 = scmp.eq.s32.totalorder %s91, 0
    %p548 = por %p546, %p547
    %s550 = sadd.s32 %s549, 1
    %p553 = scmp.eq.s32.totalorder %s85, 1
    %p554 = scmp.ne.s32.totalorder %s549, %s551
    %p555 = scmp.eq.s32.totalorder %s85, 0
    %p556 = por %p554, %p555
    %p557 = scmp.ne.s32.totalorder %s549, %s551
    %p558 = scmp.eq.s32.totalorder %s90, 1
    %p559 = por %p557, %p558
    %p560 = scmp.ne.s32.totalorder %s551, %s552
    %p561 = scmp.eq.s32.totalorder %s90, 0
    %p562 = por %p560, %p561
    %p563 = scmp.ne.s32.totalorder %s551, %s552
    %p564 = scmp.eq.s32.totalorder %s91, 1
    %p565 = por %p563, %p564
    %p567 = scmp.ne.s32.totalorder %s552, %s566
    %p568 = scmp.eq.s32.totalorder %s91, 0
    %p569 = por %p567, %p568
    %s571 = sadd.s32 %s570, 1
    %p574 = scmp.eq.s32.totalorder %s85, 1
    %p575 = scmp.ne.s32.totalorder %s570, %s572
    %p576 = scmp.eq.s32.totalorder %s85, 0
    %p577 = por %p575, %p576
    %p578 = scmp.ne.s32.totalorder %s570, %s572
    %p579 = scmp.eq.s32.totalorder %s90, 1
    %p580 = por %p578, %p579
    %p581 = scmp.ne.s32.totalorder %s572, %s573
    %p582 = scmp.eq.s32.totalorder %s90, 0
    %p583 = por %p581, %p582
    %p584 = scmp.ne.s32.totalorder %s572, %s573
    %p585 = scmp.eq.s32.totalorder %s91, 1
    %p586 = por %p584, %p585
    %p588 = scmp.ne.s32.totalorder %s573, %s587
    %p589 = scmp.eq.s32.totalorder %s91, 0
    %p590 = por %p588, %p589
    %s592 = sadd.s32 %s591, 1
    %p595 = scmp.eq.s32.totalorder %s85, 1
    %p596 = scmp.ne.s32.totalorder %s591, %s593
    %p597 = scmp.eq.s32.totalorder %s85, 0
    %p598 = por %p596, %p597
    %p599 = scmp.ne.s32.totalorder %s591, %s593
    %p600 = scmp.eq.s32.totalorder %s90, 1
    %p601 = por %p599, %p600
    %p602 = scmp.ne.s32.totalorder %s593, %s594
    %p603 = scmp.eq.s32.totalorder %s90, 0
    %p604 = por %p602, %p603
    %p605 = scmp.ne.s32.totalorder %s593, %s594
    %p606 = scmp.eq.s32.totalorder %s91, 1
    %p607 = por %p605, %p606
    %p609 = scmp.ne.s32.totalorder %s594, %s608
    %p610 = scmp.eq.s32.totalorder %s91, 0
    %p611 = por %p609, %p610
    %s613 = sadd.s32 %s612, 1
    %p616 = scmp.eq.s32.totalorder %s85, 1
    %p617 = scmp.ne.s32.totalorder %s612, %s614
    %p618 = scmp.eq.s32.totalorder %s85, 0
    %p619 = por %p617, %p618
    %p620 = scmp.ne.s32.totalorder %s612, %s614
    %p621 = scmp.eq.s32.totalorder %s90, 1
    %p622 = por %p620, %p621
    %p623 = scmp.ne.s32.totalorder %s614, %s615
    %p624 = scmp.eq.s32.totalorder %s90, 0
    %p625 = por %p623, %p624
    %p626 = scmp.ne.s32.totalorder %s614, %s615
    %p627 = scmp.eq.s32.totalorder %s91, 1
    %p628 = por %p626, %p627
    %p630 = scmp.ne.s32.totalorder %s615, %s629
    %p631 = scmp.eq.s32.totalorder %s91, 0
    %p632 = por %p630, %p631
    %s634 = sadd.s32 %s633, 1
    %p637 = scmp.eq.s32.totalorder %s85, 1
    %p638 = scmp.ne.s32.totalorder %s633, %s635
    %p639 = scmp.eq.s32.totalorder %s85, 0
    %p640 = por %p638, %p639
    %p641 = scmp.ne.s32.totalorder %s633, %s635
    %p642 = scmp.eq.s32.totalorder %s90, 1
    %p643 = por %p641, %p642
    %p644 = scmp.ne.s32.totalorder %s635, %s636
    %p645 = scmp.eq.s32.totalorder %s90, 0
    %p646 = por %p644, %p645
    %p647 = scmp.ne.s32.totalorder %s635, %s636
    %p648 = scmp.eq.s32.totalorder %s91, 1
    %p649 = por %p647, %p648
    %p651 = scmp.ne.s32.totalorder %s636, %s650
    %p652 = scmp.eq.s32.totalorder %s91, 0
    %p653 = por %p651, %p652
    %s655 = sadd.s32 %s654, 1
    %p658 = scmp.eq.s32.totalorder %s85, 1
    %p659 = scmp.ne.s32.totalorder %s654, %s656
    %p660 = scmp.eq.s32.totalorder %s85, 0
    %p661 = por %p659, %p660
    %p662 = scmp.ne.s32.totalorder %s654, %s656
    %p663 = scmp.eq.s32.totalorder %s90, 1
    %p664 = por %p662, %p663
    %p665 = scmp.ne.s32.totalorder %s656, %s657
    %p666 = scmp.eq.s32.totalorder %s90, 0
    %p667 = por %p665, %p666
    %p668 = scmp.ne.s32.totalorder %s656, %s657
    %p669 = scmp.eq.s32.totalorder %s91, 1
    %p670 = por %p668, %p669
    %p672 = scmp.ne.s32.totalorder %s657, %s671
    %p673 = scmp.eq.s32.totalorder %s91, 0
    %p674 = por %p672, %p673
    %s676 = sadd.s32 %s675, 1
    %p679 = scmp.eq.s32.totalorder %s85, 1
    %p680 = scmp.ne.s32.totalorder %s675, %s677
    %p681 = scmp.eq.s32.totalorder %s85, 0
    %p682 = por %p680, %p681
    %p683 = scmp.ne.s32.totalorder %s675, %s677
    %p684 = scmp.eq.s32.totalorder %s90, 1
    %p685 = por %p683, %p684
    %p686 = scmp.ne.s32.totalorder %s677, %s678
    %p687 = scmp.eq.s32.totalorder %s90, 0
    %p688 = por %p686, %p687
    %p689 = scmp.ne.s32.totalorder %s677, %s678
    %p690 = scmp.eq.s32.totalorder %s91, 1
    %p691 = por %p689, %p690
    %p693 = scmp.ne.s32.totalorder %s678, %s692
    %p694 = scmp.eq.s32.totalorder %s91, 0
    %p695 = por %p693, %p694
    %s697 = sadd.s32 %s696, 1
    %p700 = scmp.eq.s32.totalorder %s85, 1
    %p701 = scmp.ne.s32.totalorder %s696, %s698
    %p702 = scmp.eq.s32.totalorder %s85, 0
    %p703 = por %p701, %p702
    %p704 = scmp.ne.s32.totalorder %s696, %s698
    %p705 = scmp.eq.s32.totalorder %s90, 1
    %p706 = por %p704, %p705
    %p707 = scmp.ne.s32.totalorder %s698, %s699
    %p708 = scmp.eq.s32.totalorder %s90, 0
    %p709 = por %p707, %p708
    %p710 = scmp.ne.s32.totalorder %s698, %s699
    %p711 = scmp.eq.s32.totalorder %s91, 1
    %p712 = por %p710, %p711
    %p714 = scmp.ne.s32.totalorder %s699, %s713
    %p715 = scmp.eq.s32.totalorder %s91, 0
    %p716 = por %p714, %p715
    %s718 = sadd.s32 %s717, 1
    %p721 = scmp.eq.s32.totalorder %s85, 1
    %p722 = scmp.ne.s32.totalorder %s717, %s719
    %p723 = scmp.eq.s32.totalorder %s85, 0
    %p724 = por %p722, %p723
    %p725 = scmp.ne.s32.totalorder %s717, %s719
    %p726 = scmp.eq.s32.totalorder %s90, 1
    %p727 = por %p725, %p726
    %p728 = scmp.ne.s32.totalorder %s719, %s720
    %p729 = scmp.eq.s32.totalorder %s90, 0
    %p730 = por %p728, %p729
    %p731 = scmp.ne.s32.totalorder %s719, %s720
    %p732 = scmp.eq.s32.totalorder %s91, 1
    %p733 = por %p731, %p732
    %p735 = scmp.ne.s32.totalorder %s720, %s734
    %p736 = scmp.eq.s32.totalorder %s91, 0
    %p737 = por %p735, %p736
    %s739 = sadd.s32 %s738, 1
    %p742 = scmp.eq.s32.totalorder %s85, 1
    %p743 = scmp.ne.s32.totalorder %s738, %s740
    %p744 = scmp.eq.s32.totalorder %s85, 0
    %p745 = por %p743, %p744
    %p746 = scmp.ne.s32.totalorder %s738, %s740
    %p747 = scmp.eq.s32.totalorder %s90, 1
    %p748 = por %p746, %p747
    %p749 = scmp.ne.s32.totalorder %s740, %s741
    %p750 = scmp.eq.s32.totalorder %s90, 0
    %p751 = por %p749, %p750
    %p752 = scmp.ne.s32.totalorder %s740, %s741
    %p753 = scmp.eq.s32.totalorder %s91, 1
    %p754 = por %p752, %p753
    %p756 = scmp.ne.s32.totalorder %s741, %s755
    %p757 = scmp.eq.s32.totalorder %s91, 0
    %p758 = por %p756, %p757
    %s760 = sadd.s32 %s759, 1
    %p763 = scmp.eq.s32.totalorder %s85, 1
    %p764 = scmp.ne.s32.totalorder %s759, %s761
    %p765 = scmp.eq.s32.totalorder %s85, 0
    %p766 = por %p764, %p765
    %p767 = scmp.ne.s32.totalorder %s759, %s761
    %p768 = scmp.eq.s32.totalorder %s90, 1
    %p769 = por %p767, %p768
    %p770 = scmp.ne.s32.totalorder %s761, %s762
    %p771 = scmp.eq.s32.totalorder %s90, 0
    %p772 = por %p770, %p771
    %p773 = scmp.ne.s32.totalorder %s761, %s762
    %p774 = scmp.eq.s32.totalorder %s91, 1
    %p775 = por %p773, %p774
    %p777 = scmp.ne.s32.totalorder %s762, %s776
    %p778 = scmp.eq.s32.totalorder %s91, 0
    %p779 = por %p777, %p778
    %s781 = sadd.s32 %s780, 1
    %p784 = scmp.eq.s32.totalorder %s85, 1
    %p785 = scmp.ne.s32.totalorder %s780, %s782
    %p786 = scmp.eq.s32.totalorder %s85, 0
    %p787 = por %p785, %p786
    %p788 = scmp.ne.s32.totalorder %s780, %s782
    %p789 = scmp.eq.s32.totalorder %s90, 1
    %p790 = por %p788, %p789
    %p791 = scmp.ne.s32.totalorder %s782, %s783
    %p792 = scmp.eq.s32.totalorder %s90, 0
    %p793 = por %p791, %p792
    %p794 = scmp.ne.s32.totalorder %s782, %s783
    %p795 = scmp.eq.s32.totalorder %s91, 1
    %p796 = por %p794, %p795
    %p798 = scmp.ne.s32.totalorder %s783, %s797
    %p799 = scmp.eq.s32.totalorder %s91, 0
    %p800 = por %p798, %p799
    %s802 = sadd.s32 %s801, 1
    %p805 = scmp.eq.s32.totalorder %s85, 1
    %p806 = scmp.ne.s32.totalorder %s801, %s803
    %p807 = scmp.eq.s32.totalorder %s85, 0
    %p808 = por %p806, %p807
    %p809 = scmp.ne.s32.totalorder %s801, %s803
    %p810 = scmp.eq.s32.totalorder %s90, 1
    %p811 = por %p809, %p810
    %p812 = scmp.ne.s32.totalorder %s803, %s804
    %p813 = scmp.eq.s32.totalorder %s90, 0
    %p814 = por %p812, %p813
    %p815 = scmp.ne.s32.totalorder %s803, %s804
    %p816 = scmp.eq.s32.totalorder %s91, 1
    %p817 = por %p815, %p816
    %p819 = scmp.ne.s32.totalorder %s804, %s818
    %p820 = scmp.eq.s32.totalorder %s91, 0
    %p821 = por %p819, %p820
    %s823 = sadd.s32 %s822, 1
    %p826 = scmp.eq.s32.totalorder %s85, 1
    %p827 = scmp.ne.s32.totalorder %s822, %s824
    %p828 = scmp.eq.s32.totalorder %s85, 0
    %p829 = por %p827, %p828
    %p830 = scmp.ne.s32.totalorder %s822, %s824
    %p831 = scmp.eq.s32.totalorder %s90, 1
    %p832 = por %p830, %p831
    %p833 = scmp.ne.s32.totalorder %s824, %s825
    %p834 = scmp.eq.s32.totalorder %s90, 0
    %p835 = por %p833, %p834
    %p836 = scmp.ne.s32.totalorder %s824, %s825
    %p837 = scmp.eq.s32.totalorder %s91, 1
    %p838 = por %p836, %p837
    %p840 = scmp.ne.s32.totalorder %s825, %s839
    %p841 = scmp.eq.s32.totalorder %s91, 0
    %p842 = por %p840, %p841
    %s844 = sadd.s32 %s843, 1
    %p847 = scmp.eq.s32.totalorder %s85, 1
    %p848 = scmp.ne.s32.totalorder %s843, %s845
    %p849 = scmp.eq.s32.totalorder %s85, 0
    %p850 = por %p848, %p849
    %p851 = scmp.ne.s32.totalorder %s843, %s845
    %p852 = scmp.eq.s32.totalorder %s90, 1
    %p853 = por %p851, %p852
    %p854 = scmp.ne.s32.totalorder %s845, %s846
    %p855 = scmp.eq.s32.totalorder %s90, 0
    %p856 = por %p854, %p855
    %p857 = scmp.ne.s32.totalorder %s845, %s846
    %p858 = scmp.eq.s32.totalorder %s91, 1
    %p859 = por %p857, %p858
    %p861 = scmp.ne.s32.totalorder %s846, %s860
    %p862 = scmp.eq.s32.totalorder %s91, 0
    %p863 = por %p861, %p862
    %s865 = sadd.s32 %s864, 1
    %p868 = scmp.eq.s32.totalorder %s85, 1
    %p869 = scmp.ne.s32.totalorder %s864, %s866
    %p870 = scmp.eq.s32.totalorder %s85, 0
    %p871 = por %p869, %p870
    %p872 = scmp.ne.s32.totalorder %s864, %s866
    %p873 = scmp.eq.s32.totalorder %s90, 1
    %p874 = por %p872, %p873
    %p875 = scmp.ne.s32.totalorder %s866, %s867
    %p876 = scmp.eq.s32.totalorder %s90, 0
    %p877 = por %p875, %p876
    %p878 = scmp.ne.s32.totalorder %s866, %s867
    %p879 = scmp.eq.s32.totalorder %s91, 1
    %p880 = por %p878, %p879
    %p882 = scmp.ne.s32.totalorder %s867, %s881
    %p883 = scmp.eq.s32.totalorder %s91, 0
    %p884 = por %p882, %p883
    %s886 = sadd.s32 %s885, 1
    %p889 = scmp.eq.s32.totalorder %s85, 1
    %p890 = scmp.ne.s32.totalorder %s885, %s887
    %p891 = scmp.eq.s32.totalorder %s85, 0
    %p892 = por %p890, %p891
    %p893 = scmp.ne.s32.totalorder %s885, %s887
    %p894 = scmp.eq.s32.totalorder %s90, 1
    %p895 = por %p893, %p894
    %p896 = scmp.ne.s32.totalorder %s887, %s888
    %p897 = scmp.eq.s32.totalorder %s90, 0
    %p898 = por %p896, %p897
    %p899 = scmp.ne.s32.totalorder %s887, %s888
    %p900 = scmp.eq.s32.totalorder %s91, 1
    %p901 = por %p899, %p900
    %p903 = scmp.ne.s32.totalorder %s888, %s902
    %p904 = scmp.eq.s32.totalorder %s91, 0
    %p905 = por %p903, %p904
    %s907 = sadd.s32 %s906, 1
    %p910 = scmp.eq.s32.totalorder %s85, 1
    %p911 = scmp.ne.s32.totalorder %s906, %s908
    %p912 = scmp.eq.s32.totalorder %s85, 0
    %p913 = por %p911, %p912
    %p914 = scmp.ne.s32.totalorder %s906, %s908
    %p915 = scmp.eq.s32.totalorder %s90, 1
    %p916 = por %p914, %p915
    %p917 = scmp.ne.s32.totalorder %s908, %s909
    %p918 = scmp.eq.s32.totalorder %s90, 0
    %p919 = por %p917, %p918
    %p920 = scmp.ne.s32.totalorder %s908, %s909
    %p921 = scmp.eq.s32.totalorder %s91, 1
    %p922 = por %p920, %p921
    %p924 = scmp.ne.s32.totalorder %s909, %s923
    %p925 = scmp.eq.s32.totalorder %s91, 0
    %p926 = por %p924, %p925
    %s927 = ssub.s32 %s85, %s92
    %p928 = scmp.eq.s32.totalorder %s927, 0
    %s930 = sadd.s32 %s929, 1
    %s931 = scalar_select %p928, %s929, %s930
    %p934 = pneg %p928
    %p935 = scmp.eq.s32.totalorder %s85, 1
    %p936 = por %p934, %p935
    %p937 = scmp.ne.s32.totalorder %s929, %s932
    %p938 = scmp.eq.s32.totalorder %s85, 0
    %p939 = por %p937, %p938
    %p940 = scmp.ne.s32.totalorder %s929, %s932
    %p941 = scmp.eq.s32.totalorder %s90, 1
    %p942 = por %p940, %p941
    %p943 = scmp.ne.s32.totalorder %s932, %s933
    %p944 = scmp.eq.s32.totalorder %s90, 0
    %p945 = por %p943, %p944
    %p946 = scmp.ne.s32.totalorder %s932, %s933
    %p947 = scmp.eq.s32.totalorder %s91, 1
    %p948 = por %p946, %p947
    %p950 = scmp.ne.s32.totalorder %s933, %s949
    %p951 = scmp.eq.s32.totalorder %s91, 0
    %p952 = por %p950, %p951
    %p953 = scmp.le.s32.totalorder 1, %s85
    %p954 = scmp.lt.s32.totalorder %s85, 3
    %p955 = pnand %p953, %p954
    %p956 = pneg %p955
    // Predicated region
    $region9: #{tpu_custom_call.1} parent=5 // pred_check
      _
    $region10: #{tpu_custom_call.1} parent=5 // pred_check_branch
      %958 = sbr.rel (%p955) target = $region12
    $region11: #{tpu_custom_call.1} parent=5 // pred_region
      %s959 = ssub.s32 %s85, 1
      // Predicated region
      $region13: #{tpu_custom_call.1} parent=11 // pred_check
        %p960 = pneg %p184
      $region14: #{tpu_custom_call.1} parent=11 // pred_check_branch
        %962 = sbr.rel (%p960) target = $region16
      $region15: #{tpu_custom_call.1} parent=11 // pred_region
        _
      $region16: #{tpu_custom_call.1} parent=11 // pred_fallthru
        _
      // Predicated region
      $region17: #{tpu_custom_call.1} parent=11 // pred_check
        %p963 = pneg %p205
      $region18: #{tpu_custom_call.1} parent=11 // pred_check_branch
        %965 = sbr.rel (%p963) target = $region20
      $region19: #{tpu_custom_call.1} parent=11 // pred_region
        _
      $region20: #{tpu_custom_call.1} parent=11 // pred_fallthru
        _
      // Predicated region
      $region21: #{tpu_custom_call.1} parent=11 // pred_check
        %p966 = pneg %p226
      $region22: #{tpu_custom_call.1} parent=11 // pred_check_branch
        %968 = sbr.rel (%p966) target = $region24
      $region23: #{tpu_custom_call.1} parent=11 // pred_region
        _
      $region24: #{tpu_custom_call.1} parent=11 // pred_fallthru
        _
      // Predicated region
      $region25: #{tpu_custom_call.1} parent=11 // pred_check
        %p969 = pneg %p247
      $region26: #{tpu_custom_call.1} parent=11 // pred_check_branch
        %971 = sbr.rel (%p969) target = $region28
      $region27: #{tpu_custom_call.1} parent=11 // pred_region
        _
      $region28: #{tpu_custom_call.1} parent=11 // pred_fallthru
        _
      // Predicated region
      $region29: #{tpu_custom_call.1} parent=11 // pred_check
        %p972 = pneg %p268
      $region30: #{tpu_custom_call.1} parent=11 // pred_check_branch
        %974 = sbr.rel (%p972) target = $region32
      $region31: #{tpu_custom_call.1} parent=11 // pred_region
        _
      $region32: #{tpu_custom_call.1} parent=11 // pred_fallthru
        _
      // Predicated region
      $region33: #{tpu_custom_call.1} parent=11 // pred_check
        %p975 = pneg %p289
      $region34: #{tpu_custom_call.1} parent=11 // pred_check_branch
        %977 = sbr.rel (%p975) target = $region36
      $region35: #{tpu_custom_call.1} parent=11 // pred_region
        _
      $region36: #{tpu_custom_call.1} parent=11 // pred_fallthru
        _
      // Predicated region
      $region37: #{tpu_custom_call.1} parent=11 // pred_check
        %p978 = pneg %p310
      $region38: #{tpu_custom_call.1} parent=11 // pred_check_branch
        %980 = sbr.rel (%p978) target = $region40
      $region39: #{tpu_custom_call.1} parent=11 // pred_region
        _
      $region40: #{tpu_custom_call.1} parent=11 // pred_fallthru
        _
      // Predicated region
      $region41: #{tpu_custom_call.1} parent=11 // pred_check
        %p981 = pneg %p331
      $region42: #{tpu_custom_call.1} parent=11 // pred_check_branch
        %983 = sbr.rel (%p981) target = $region44
      $region43: #{tpu_custom_call.1} parent=11 // pred_region
        _
      $region44: #{tpu_custom_call.1} parent=11 // pred_fallthru
        _
      // Predicated region
      $region45: #{tpu_custom_call.1} parent=11 // pred_check
        %p984 = pneg %p352
      $region46: #{tpu_custom_call.1} parent=11 // pred_check_branch
        %986 = sbr.rel (%p984) target = $region48
      $region47: #{tpu_custom_call.1} parent=11 // pred_region
        _
      $region48: #{tpu_custom_call.1} parent=11 // pred_fallthru
        _
      // Predicated region
      $region49: #{tpu_custom_call.1} parent=11 // pred_check
        %p987 = pneg %p373
      $region50: #{tpu_custom_call.1} parent=11 // pred_check_branch
        %989 = sbr.rel (%p987) target = $region52
      $region51: #{tpu_custom_call.1} parent=11 // pred_region
        _
      $region52: #{tpu_custom_call.1} parent=11 // pred_fallthru
        _
      // Predicated region
      $region53: #{tpu_custom_call.1} parent=11 // pred_check
        %p990 = pneg %p394
      $region54: #{tpu_custom_call.1} parent=11 // pred_check_branch
        %992 = sbr.rel (%p990) target = $region56
      $region55: #{tpu_custom_call.1} parent=11 // pred_region
        _
      $region56: #{tpu_custom_call.1} parent=11 // pred_fallthru
        _
      // Predicated region
      $region57: #{tpu_custom_call.1} parent=11 // pred_check
        %p993 = pneg %p415
      $region58: #{tpu_custom_call.1} parent=11 // pred_check_branch
        %995 = sbr.rel (%p993) target = $region60
      $region59: #{tpu_custom_call.1} parent=11 // pred_region
        _
      $region60: #{tpu_custom_call.1} parent=11 // pred_fallthru
        _
      // Predicated region
      $region61: #{tpu_custom_call.1} parent=11 // pred_check
        %p996 = pneg %p436
      $region62: #{tpu_custom_call.1} parent=11 // pred_check_branch
        %998 = sbr.rel (%p996) target = $region64
      $region63: #{tpu_custom_call.1} parent=11 // pred_region
        _
      $region64: #{tpu_custom_call.1} parent=11 // pred_fallthru
        _
      // Predicated region
      $region65: #{tpu_custom_call.1} parent=11 // pred_check
        %p999 = pneg %p457
      $region66: #{tpu_custom_call.1} parent=11 // pred_check_branch
        %1001 = sbr.rel (%p999) target = $region68
      $region67: #{tpu_custom_call.1} parent=11 // pred_region
        _
      $region68: #{tpu_custom_call.1} parent=11 // pred_fallthru
        _
      // Predicated region
      $region69: #{tpu_custom_call.1} parent=11 // pred_check
        %p1002 = pneg %p478
      $region70: #{tpu_custom_call.1} parent=11 // pred_check_branch
        %1004 = sbr.rel (%p1002) target = $region72
      $region71: #{tpu_custom_call.1} parent=11 // pred_region
        _
      $region72: #{tpu_custom_call.1} parent=11 // pred_fallthru
        _
      // Predicated region
      $region73: #{tpu_custom_call.1} parent=11 // pred_check
        %p1005 = pneg %p499
      $region74: #{tpu_custom_call.1} parent=11 // pred_check_branch
        %1007 = sbr.rel (%p1005) target = $region76
      $region75: #{tpu_custom_call.1} parent=11 // pred_region
        _
      $region76: #{tpu_custom_call.1} parent=11 // pred_fallthru
        _
      // Predicated region
      $region77: #{tpu_custom_call.1} parent=11 // pred_check
        %p1008 = pneg %p520
      $region78: #{tpu_custom_call.1} parent=11 // pred_check_branch
        %1010 = sbr.rel (%p1008) target = $region80
      $region79: #{tpu_custom_call.1} parent=11 // pred_region
        _
      $region80: #{tpu_custom_call.1} parent=11 // pred_fallthru
        _
      // Predicated region
      $region81: #{tpu_custom_call.1} parent=11 // pred_check
        %p1011 = pneg %p541
      $region82: #{tpu_custom_call.1} parent=11 // pred_check_branch
        %1013 = sbr.rel (%p1011) target = $region84
      $region83: #{tpu_custom_call.1} parent=11 // pred_region
        _
      $region84: #{tpu_custom_call.1} parent=11 // pred_fallthru
        _
      // Predicated region
      $region85: #{tpu_custom_call.1} parent=11 // pred_check
        %p1014 = pneg %p562
      $region86: #{tpu_custom_call.1} parent=11 // pred_check_branch
        %1016 = sbr.rel (%p1014) target = $region88
      $region87: #{tpu_custom_call.1} parent=11 // pred_region
        _
      $region88: #{tpu_custom_call.1} parent=11 // pred_fallthru
        _
      // Predicated region
      $region89: #{tpu_custom_call.1} parent=11 // pred_check
        %p1017 = pneg %p583
      $region90: #{tpu_custom_call.1} parent=11 // pred_check_branch
        %1019 = sbr.rel (%p1017) target = $region92
      $region91: #{tpu_custom_call.1} parent=11 // pred_region
        _
      $region92: #{tpu_custom_call.1} parent=11 // pred_fallthru
        _
      // Predicated region
      $region93: #{tpu_custom_call.1} parent=11 // pred_check
        %p1020 = pneg %p604
      $region94: #{tpu_custom_call.1} parent=11 // pred_check_branch
        %1022 = sbr.rel (%p1020) target = $region96
      $region95: #{tpu_custom_call.1} parent=11 // pred_region
        _
      $region96: #{tpu_custom_call.1} parent=11 // pred_fallthru
        _
      // Predicated region
      $region97: #{tpu_custom_call.1} parent=11 // pred_check
        %p1023 = pneg %p625
      $region98: #{tpu_custom_call.1} parent=11 // pred_check_branch
        %1025 = sbr.rel (%p1023) target = $region100
      $region99: #{tpu_custom_call.1} parent=11 // pred_region
        _
      $region100: #{tpu_custom_call.1} parent=11 // pred_fallthru
        _
      // Predicated region
      $region101: #{tpu_custom_call.1} parent=11 // pred_check
        %p1026 = pneg %p646
      $region102: #{tpu_custom_call.1} parent=11 // pred_check_branch
        %1028 = sbr.rel (%p1026) target = $region104
      $region103: #{tpu_custom_call.1} parent=11 // pred_region
        _
      $region104: #{tpu_custom_call.1} parent=11 // pred_fallthru
        _
      // Predicated region
      $region105: #{tpu_custom_call.1} parent=11 // pred_check
        %p1029 = pneg %p667
      $region106: #{tpu_custom_call.1} parent=11 // pred_check_branch
        %1031 = sbr.rel (%p1029) target = $region108
      $region107: #{tpu_custom_call.1} parent=11 // pred_region
        _
      $region108: #{tpu_custom_call.1} parent=11 // pred_fallthru
        _
      // Predicated region
      $region109: #{tpu_custom_call.1} parent=11 // pred_check
        %p1032 = pneg %p688
      $region110: #{tpu_custom_call.1} parent=11 // pred_check_branch
        %1034 = sbr.rel (%p1032) target = $region112
      $region111: #{tpu_custom_call.1} parent=11 // pred_region
        _
      $region112: #{tpu_custom_call.1} parent=11 // pred_fallthru
        _
      // Predicated region
      $region113: #{tpu_custom_call.1} parent=11 // pred_check
        %p1035 = pneg %p709
      $region114: #{tpu_custom_call.1} parent=11 // pred_check_branch
        %1037 = sbr.rel (%p1035) target = $region116
      $region115: #{tpu_custom_call.1} parent=11 // pred_region
        _
      $region116: #{tpu_custom_call.1} parent=11 // pred_fallthru
        _
      // Predicated region
      $region117: #{tpu_custom_call.1} parent=11 // pred_check
        %p1038 = pneg %p730
      $region118: #{tpu_custom_call.1} parent=11 // pred_check_branch
        %1040 = sbr.rel (%p1038) target = $region120
      $region119: #{tpu_custom_call.1} parent=11 // pred_region
        _
      $region120: #{tpu_custom_call.1} parent=11 // pred_fallthru
        _
      // Predicated region
      $region121: #{tpu_custom_call.1} parent=11 // pred_check
        %p1041 = pneg %p751
      $region122: #{tpu_custom_call.1} parent=11 // pred_check_branch
        %1043 = sbr.rel (%p1041) target = $region124
      $region123: #{tpu_custom_call.1} parent=11 // pred_region
        _
      $region124: #{tpu_custom_call.1} parent=11 // pred_fallthru
        _
      // Predicated region
      $region125: #{tpu_custom_call.1} parent=11 // pred_check
        %p1044 = pneg %p772
      $region126: #{tpu_custom_call.1} parent=11 // pred_check_branch
        %1046 = sbr.rel (%p1044) target = $region128
      $region127: #{tpu_custom_call.1} parent=11 // pred_region
        _
      $region128: #{tpu_custom_call.1} parent=11 // pred_fallthru
        _
      // Predicated region
      $region129: #{tpu_custom_call.1} parent=11 // pred_check
        %p1047 = pneg %p793
      $region130: #{tpu_custom_call.1} parent=11 // pred_check_branch
        %1049 = sbr.rel (%p1047) target = $region132
      $region131: #{tpu_custom_call.1} parent=11 // pred_region
        _
      $region132: #{tpu_custom_call.1} parent=11 // pred_fallthru
        _
      // Predicated region
      $region133: #{tpu_custom_call.1} parent=11 // pred_check
        %p1050 = pneg %p814
      $region134: #{tpu_custom_call.1} parent=11 // pred_check_branch
        %1052 = sbr.rel (%p1050) target = $region136
      $region135: #{tpu_custom_call.1} parent=11 // pred_region
        _
      $region136: #{tpu_custom_call.1} parent=11 // pred_fallthru
        _
      // Predicated region
      $region137: #{tpu_custom_call.1} parent=11 // pred_check
        %p1053 = pneg %p835
      $region138: #{tpu_custom_call.1} parent=11 // pred_check_branch
        %1055 = sbr.rel (%p1053) target = $region140
      $region139: #{tpu_custom_call.1} parent=11 // pred_region
        _
      $region140: #{tpu_custom_call.1} parent=11 // pred_fallthru
        _
      // Predicated region
      $region141: #{tpu_custom_call.1} parent=11 // pred_check
        %p1056 = pneg %p856
      $region142: #{tpu_custom_call.1} parent=11 // pred_check_branch
        %1058 = sbr.rel (%p1056) target = $region144
      $region143: #{tpu_custom_call.1} parent=11 // pred_region
        _
      $region144: #{tpu_custom_call.1} parent=11 // pred_fallthru
        _
      // Predicated region
      $region145: #{tpu_custom_call.1} parent=11 // pred_check
        %p1059 = pneg %p877
      $region146: #{tpu_custom_call.1} parent=11 // pred_check_branch
        %1061 = sbr.rel (%p1059) target = $region148
      $region147: #{tpu_custom_call.1} parent=11 // pred_region
        _
      $region148: #{tpu_custom_call.1} parent=11 // pred_fallthru
        _
      // Predicated region
      $region149: #{tpu_custom_call.1} parent=11 // pred_check
        %p1062 = pneg %p898
      $region150: #{tpu_custom_call.1} parent=11 // pred_check_branch
        %1064 = sbr.rel (%p1062) target = $region152
      $region151: #{tpu_custom_call.1} parent=11 // pred_region
        _
      $region152: #{tpu_custom_call.1} parent=11 // pred_fallthru
        _
      // Predicated region
      $region153: #{tpu_custom_call.1} parent=11 // pred_check
        %p1065 = pneg %p919
      $region154: #{tpu_custom_call.1} parent=11 // pred_check_branch
        %1067 = sbr.rel (%p1065) target = $region156
      $region155: #{tpu_custom_call.1} parent=11 // pred_region
        _
      $region156: #{tpu_custom_call.1} parent=11 // pred_fallthru
        _
    $region12: #{tpu_custom_call.1} parent=5 // pred_fallthru
      _
    %p1068 = scmp.lt.s32.totalorder %s85, 2
    // Predicated region
    $region157: #{tpu_custom_call.1} parent=5 // pred_check
      %p1069 = pneg %p1068
    $region158: #{tpu_custom_call.1} parent=5 // pred_check_branch
      %1071 = sbr.rel (%p1069) target = $region160
    $region159: #{tpu_custom_call.1} parent=5 // pred_region
      // Predicated region
      $region161: #{tpu_custom_call.1} parent=159 // pred_check
        %p1072 = pneg %p105
      $region162: #{tpu_custom_call.1} parent=159 // pred_check_branch
        %1074 = sbr.rel (%p1072) target = $region164
      $region163: #{tpu_custom_call.1} parent=159 // pred_region
        %p1075 = scmp.lt.s32.totalorder %s85, 1
        %s1076 = scalar_select %p1075, %s85, 1
        %s1077 = smul.addr %s1076, 2
        %s1078 = smul.addr %s1077, 8
        %s1079 = scalar_lea.vmem %s1, %s1078
      $region164: #{tpu_custom_call.1} parent=159 // pred_fallthru
        _
      // Predicated region
      $region165: #{tpu_custom_call.1} parent=159 // pred_check
        %p1080 = pneg %p131
      $region166: #{tpu_custom_call.1} parent=159 // pred_check_branch
        %1082 = sbr.rel (%p1080) target = $region168
      $region167: #{tpu_custom_call.1} parent=159 // pred_region
        %p1083 = scmp.lt.s32.totalorder %s85, 1
        %s1084 = scalar_select %p1083, %s85, 1
        %s1085 = smul.addr %s1084, 2
        %s1086 = smul.addr %s1085, 8
        %s1087 = scalar_lea.vmem %s3, %s1086
      $region168: #{tpu_custom_call.1} parent=159 // pred_fallthru
        _
      // Predicated region
      $region169: #{tpu_custom_call.1} parent=159 // pred_check
        %p1088 = pneg %p157
      $region170: #{tpu_custom_call.1} parent=159 // pred_check_branch
        %1090 = sbr.rel (%p1088) target = $region172
      $region171: #{tpu_custom_call.1} parent=159 // pred_region
        %p1091 = scmp.lt.s32.totalorder %s85, 1
        %s1092 = scalar_select %p1091, %s85, 1
        %s1093 = smul.addr %s1092, 8
        %s1094 = scalar_lea.vmem %s5, %s1093
      $region172: #{tpu_custom_call.1} parent=159 // pred_fallthru
        _
    $region160: #{tpu_custom_call.1} parent=5 // pred_fallthru
      _
    %p1095 = scmp.le.s32.totalorder 1, %s85
    %p1096 = scmp.lt.s32.totalorder %s85, 3
    %p1097 = pnand %p1095, %p1096
    %p1098 = pneg %p1097
    // Predicated region
    $region173: #{tpu_custom_call.1} parent=5 // pred_check
      _
    $region174: #{tpu_custom_call.1} parent=5 // pred_check_branch
      %1100 = sbr.rel (%p1097) target = $region176
    $region175: #{tpu_custom_call.1} parent=5 // pred_region
      %s1101 = ssub.s32 %s85, 1
      %p1102 = scmp.lt.s32.totalorder %s90, 1
      %s1103 = scalar_select %p1102, %s90, 1
      %s1104 = smul.addr %s1103, 2
      %s1105 = smul.addr %s1104, 8
      %s1106 = scalar_lea.vmem %s1, %s1105
      %p1107 = pneg %p111
      %p1108 = pneg %p108
      %p1109 = scmp.lt.s32.totalorder %s90, 1
      %s1110 = scalar_select %p1109, %s90, 1
      %s1111 = smul.addr %s1110, 2
      %s1112 = smul.addr %s1111, 8
      %s1113 = scalar_lea.vmem %s3, %s1112
      %p1114 = pneg %p137
      %p1115 = pneg %p134
      %p1116 = scmp.lt.s32.totalorder %s90, 1
      %s1117 = scalar_select %p1116, %s90, 1
      %s1118 = smul.addr %s1117, 8
      %s1119 = scalar_lea.vmem %s5, %s1118
      %p1120 = pneg %p163
      %p1121 = pneg %p160
      %p1122 = pneg %p184
      %p1123 = pneg %p181
      %p1124 = pneg %p205
      %p1125 = pneg %p202
      %p1126 = pneg %p226
      %p1127 = pneg %p223
      %p1128 = pneg %p247
      %p1129 = pneg %p244
      %p1130 = pneg %p268
      %p1131 = pneg %p265
      %p1132 = pneg %p289
      %p1133 = pneg %p286
      %p1134 = pneg %p310
      %p1135 = pneg %p307
      %p1136 = pneg %p331
      %p1137 = pneg %p328
      %p1138 = pneg %p352
      %p1139 = pneg %p349
      %p1140 = pneg %p373
      %p1141 = pneg %p370
      %p1142 = pneg %p394
      %p1143 = pneg %p391
      %p1144 = pneg %p415
      %p1145 = pneg %p412
      %p1146 = pneg %p436
      %p1147 = pneg %p433
      %p1148 = pneg %p457
      %p1149 = pneg %p454
      %p1150 = pneg %p478
      %p1151 = pneg %p475
      %p1152 = pneg %p499
      %p1153 = pneg %p496
      %p1154 = pneg %p520
      %p1155 = pneg %p517
      %p1156 = pneg %p541
      %p1157 = pneg %p538
      %p1158 = pneg %p562
      %p1159 = pneg %p559
      %p1160 = pneg %p583
      %p1161 = pneg %p580
      %p1162 = pneg %p604
      %p1163 = pneg %p601
      %p1164 = pneg %p625
      %p1165 = pneg %p622
      %p1166 = pneg %p646
      %p1167 = pneg %p643
      %p1168 = pneg %p667
      %p1169 = pneg %p664
      %p1170 = pneg %p688
      %p1171 = pneg %p685
      %p1172 = pneg %p709
      %p1173 = pneg %p706
      %p1174 = pneg %p730
      %p1175 = pneg %p727
      %p1176 = pneg %p751
      %p1177 = pneg %p748
      %p1178 = pneg %p772
      %p1179 = pneg %p769
      %p1180 = pneg %p793
      %p1181 = pneg %p790
      %p1182 = pneg %p814
      %p1183 = pneg %p811
      %p1184 = pneg %p835
      %p1185 = pneg %p832
      %p1186 = pneg %p856
      %p1187 = pneg %p853
      %p1188 = pneg %p877
      %p1189 = pneg %p874
      %p1190 = pneg %p898
      %p1191 = pneg %p895
      %p1192 = pneg %p919
      %p1193 = pneg %p916
      %p1194 = pneg %p945
      %p1195 = pneg %p942
      %p1196 = scmp.lt.s32.totalorder %s90, 1
      %s1197 = scalar_select %p1196, %s90, 1
      %s1198 = smul.addr %s1197, 8
      %s1199 = scalar_lea.vmem %s79, %s1198
      %p1200 = scmp.lt.s32.totalorder %s90, 1
      %s1201 = scalar_select %p1200, %s90, 1
      %s1202 = smul.addr %s1201, 2
      %s1203 = smul.addr %s1202, 8
      %s1204 = scalar_lea.vmem %s1, %s1203
      %p1205 = scmp.lt.s32.totalorder %s90, 1
      %s1206 = scalar_select %p1205, %s90, 1
      %s1207 = smul.addr %s1206, 2
      %s1208 = smul.addr %s1207, 8
      %s1209 = scalar_lea.vmem %s3, %s1208
      %p1210 = scmp.lt.s32.totalorder %s90, 1
      %s1211 = scalar_select %p1210, %s90, 1
      %s1212 = smul.addr %s1211, 8
      %s1213 = scalar_lea.vmem %s5, %s1212
      %p1214 = scmp.lt.s32.totalorder %s90, 1
      %s1215 = scalar_select %p1214, %s90, 1
      %s1216 = smul.addr %s1215, 8
      %s1217 = scalar_lea.vmem %s79, %s1216
      %v1218 = vld [vmem:[%s1204] sm:$0xff]
      %v1219 = vld [vmem:[%s1204 + $0x8] sm:$0xff]
      %v1220 = vld [vmem:[%s1209] sm:$0xff]
      %v1221 = vld [vmem:[%s1209 + $0x8] sm:$0xff]
      %v1222 = vld [vmem:[%s1213] sm:$0xff]
      %v1223 = vld [vmem:[%s7] sm:$0xf]
      %vm1224 = vcmask 31744
      %v1226 = vsel %vm1224, %v1218, 0
      %v1229 = vsel %vm1224, %v1219, 0
      %vm1231 = vcmask 1043456
      %v1233 = vsel %vm1231, %v1223, 0
      %1235 = vmatprep.subr.mxu0 0.0
      %1236 = vmatpush1.msra.mxu0 0.0
      %1237 = vmatprep.subr.mxu0 0.0
      %1238 = vmatpush1.msra.mxu0 0.0
      %1239 = vmatprep.subr.mxu0 0.0
      %1240 = vmatpush1.msra.mxu0 0.0
      %1241 = vmatprep.subr.mxu0 0.0
      %1242 = vmatpush1.msra.mxu0 0.0
      %1243 = vmatprep.subr.mxu0 0.0
      %1244 = vmatpush1.msra.mxu0 0.0
      %1245 = vmatprep.subr.mxu0 0.0
      %1246 = vmatpush1.msra.mxu0 0.0
      %1247 = vmatprep.subr.mxu0 0.0
      %1248 = vmatpush1.msra.mxu0 0.0
      %1249 = vmatprep.subr.mxu0 0.0
      %1250 = vmatpush1.msra.mxu0 0.0
      %1251 = vmatprep.subr.mxu0 0.0
      %1252 = vmatpush1.msra.mxu0 0.0
      %1253 = vmatprep.subr.mxu0 0.0
      %1254 = vmatpush1.msra.mxu0 0.0
      %1255 = vmatprep.subr.mxu0 0.0
      %1256 = vmatpush1.msra.mxu0 0.0
      %1257 = vmatprep.subr.mxu0 0.0
      %1258 = vmatpush1.msra.mxu0 0.0
      %1259 = vmatprep.subr.mxu0 0.0
      %1260 = vmatpush1.msra.mxu0 0.0
      %1261 = vmatprep.subr.mxu0 0.0
      %1262 = vmatpush1.msra.mxu0 0.0
      %1263 = vmatprep.subr.mxu0 0.0
      %1264 = vmatpush1.msra.mxu0 0.0
      %1265 = vmatprep.subr.mxu0 0.0
      %1266 = vmatpush1.msra.mxu0 %v1233
      %1267 = vmatprep.subr.mxu0 0.0
      %1268 = vmatpush2.msra.mxu0 0.0
      %1269 = vmatprep.subr.mxu0 0.0
      %1270 = vmatpush2.msra.mxu0 0.0
      %1271 = vmatprep.subr.mxu0 0.0
      %1272 = vmatpush2.msra.mxu0 0.0
      %1273 = vmatprep.subr.mxu0 0.0
      %1274 = vmatpush2.msra.mxu0 0.0
      %1275 = vmatprep.subr.mxu0 0.0
      %1276 = vmatpush2.msra.mxu0 0.0
      %1277 = vmatprep.subr.mxu0 0.0
      %1278 = vmatpush2.msra.mxu0 0.0
      %1279 = vmatprep.subr.mxu0 0.0
      %1280 = vmatpush2.msra.mxu0 0.0
      %1281 = vmatprep.subr.mxu0 0.0
      %1282 = vmatpush2.msra.mxu0 0.0
      %1283 = vmatprep.subr.mxu0 0.0
      %1284 = vmatpush2.msra.mxu0 0.0
      %1285 = vmatprep.subr.mxu0 0.0
      %1286 = vmatpush2.msra.mxu0 0.0
      %1287 = vmatprep.subr.mxu0 0.0
      %1288 = vmatpush2.msra.mxu0 0.0
      %1289 = vmatprep.subr.mxu0 0.0
      %1290 = vmatpush2.msra.mxu0 0.0
      %1291 = vmatprep.subr.mxu0 0.0
      %1292 = vmatpush2.msra.mxu0 0.0
      %1293 = vmatprep.subr.mxu0 0.0
      %1294 = vmatpush2.msra.mxu0 0.0
      %1295 = vmatprep.subr.mxu0 0.0
      %1296 = vmatpush2.msra.mxu0 0.0
      %1297 = vmatprep.subr.mxu0 0.0
      %1298 = vmatpush2.msra.mxu0 0.0
      %1299 = vmatprep.mubr.f32.mxu0 0.0
      %1300 = vmatmul.mubr.f32.gmra.mxu0 %v1226
      %v1301 = vpop.f32.mrf.mxu0
      %v1302 = vadd.f32 0.0, %v1301
      %v1303 = vpop.f32.mrf.mxu0
      %1304 = vmatprep.mubr.f32.mxu0 0.0
      %1305 = vmatmul.mubr.f32.gmra.mxu0 %v1229
      %v1306 = vpop.f32.mrf.mxu0
      %v1307 = vadd.f32 0.0, %v1306
      %v1308 = vpop.f32.mrf.mxu0
      %1309 = vdwg.mxu0
      %vm1310 = vcmask 64512
      %v1311 = vsel %vm1310, %v1302, -inf
      %1312 = vmax.xlane.f32.xlu0 %v1311
      %v1313 = vpop.xlane.xlu0 %1312
      %v1314 = vsel %vm1310, %v1307, -inf
      %1315 = vmax.xlane.f32.xlu0 %v1314
      %v1316 = vpop.xlane.xlu0 %1315
      %v1317 = vsub.f32 %v1302, %v1313
      %v1318 = vsub.f32 %v1307, %v1316
      %v1319 = vmul.f32 %v1317, 1.442695
      %v1320 = vpow.pop %v1319
      %v1321 = vmul.f32 %v1318, 1.442695
      %v1322 = vpow.pop %v1321
      %v1323 = vsel %vm1310, %v1320, 0.0
      %1324 = vadd.xlane.f32.xlu0 %v1323
      %v1325 = vpop.xlane.xlu0 %1324
      %v1326 = vsel %vm1310, %v1322, 0.0
      %1327 = vadd.xlane.f32.xlu0 %v1326
      %v1328 = vpop.xlane.xlu0 %1327
      %v1329 = vrcp.pop %v1325
      %v1330 = vmul.f32 %v1320, %v1329
      %v1331 = vrcp.pop %v1328
      %v1332 = vmul.f32 %v1322, %v1331
      %1333 = vxpose.xlu0.b32.start [1/16] %v1330, 128
      %1334 = vxpose.xlu0.b32.cont [2/16] %v1332, 128
      %1335 = vxpose.xlu0.b32.cont [3/16] 0.0, 128
      %1336 = vxpose.xlu0.b32.cont [4/16] 0.0, 128
      %1337 = vxpose.xlu0.b32.cont [5/16] 0.0, 128
      %1338 = vxpose.xlu0.b32.cont [6/16] 0.0, 128
      %1339 = vxpose.xlu0.b32.cont [7/16] 0.0, 128
      %1340 = vxpose.xlu0.b32.cont [8/16] 0.0, 128
      %1341 = vxpose.xlu0.b32.cont [9/16] 0.0, 128
      %1342 = vxpose.xlu0.b32.cont [10/16] 0.0, 128
      %1343 = vxpose.xlu0.b32.cont [11/16] 0.0, 128
      %1344 = vxpose.xlu0.b32.cont [12/16] 0.0, 128
      %1345 = vxpose.xlu0.b32.cont [13/16] 0.0, 128
      %1346 = vxpose.xlu0.b32.cont [14/16] 0.0, 128
      %1347 = vxpose.xlu0.b32.cont [15/16] 0.0, 128
      %1348 = vxpose.xlu0.b32.end [16/16] 0.0, 128
      %v1349 = vpop.trf.xlu0
      %v1350 = vpop.trf.xlu0
      %v1351 = vpop.trf.xlu0
      %v1352 = vpop.trf.xlu0
      %v1353 = vpop.trf.xlu0
      %v1354 = vpop.trf.xlu0
      %v1355 = vpop.trf.xlu0
      %v1356 = vpop.trf.xlu0
      %v1357 = vpop.trf.xlu0
      %v1358 = vpop.trf.xlu0
      %v1359 = vpop.trf.xlu0
      %v1360 = vpop.trf.xlu0
      %v1361 = vpop.trf.xlu0
      %v1362 = vpop.trf.xlu0
      %v1363 = vpop.trf.xlu0
      %v1364 = vpop.trf.xlu0
      %vm1365 = vcmask 130048
      %v1367 = vsel %vm1365, %v1349, 0
      %1369 = vmatprep.subr.mxu0 0.0
      %1370 = vmatpush1.msra.mxu0 0.0
      %1371 = vmatprep.subr.mxu0 0.0
      %1372 = vmatpush1.msra.mxu0 0.0
      %1373 = vmatprep.subr.mxu0 0.0
      %1374 = vmatpush1.msra.mxu0 0.0
      %1375 = vmatprep.subr.mxu0 0.0
      %1376 = vmatpush1.msra.mxu0 0.0
      %1377 = vmatprep.subr.mxu0 0.0
      %1378 = vmatpush1.msra.mxu0 0.0
      %1379 = vmatprep.subr.mxu0 0.0
      %1380 = vmatpush1.msra.mxu0 0.0
      %1381 = vmatprep.subr.mxu0 0.0
      %1382 = vmatpush1.msra.mxu0 0.0
      %1383 = vmatprep.subr.mxu0 0.0
      %1384 = vmatpush1.msra.mxu0 0.0
      %1385 = vmatprep.subr.mxu0 0.0
      %1386 = vmatpush1.msra.mxu0 0.0
      %1387 = vmatprep.subr.mxu0 0.0
      %1388 = vmatpush1.msra.mxu0 0.0
      %1389 = vmatprep.subr.mxu0 0.0
      %1390 = vmatpush1.msra.mxu0 0.0
      %1391 = vmatprep.subr.mxu0 0.0
      %1392 = vmatpush1.msra.mxu0 0.0
      %1393 = vmatprep.subr.mxu0 0.0
      %1394 = vmatpush1.msra.mxu0 0.0
      %1395 = vmatprep.subr.mxu0 0.0
      %1396 = vmatpush1.msra.mxu0 0.0
      %1397 = vmatprep.subr.mxu0 0.0
      %1398 = vmatpush1.msra.mxu0 %v1221
      %1399 = vmatprep.subr.mxu0 0.0
      %1400 = vmatpush1.msra.mxu0 %v1220
      %1401 = vmatprep.subr.mxu0 0.0
      %1402 = vmatpush2.msra.mxu0 0.0
      %1403 = vmatprep.subr.mxu0 0.0
      %1404 = vmatpush2.msra.mxu0 0.0
      %1405 = vmatprep.subr.mxu0 0.0
      %1406 = vmatpush2.msra.mxu0 0.0
      %1407 = vmatprep.subr.mxu0 0.0
      %1408 = vmatpush2.msra.mxu0 0.0
      %1409 = vmatprep.subr.mxu0 0.0
      %1410 = vmatpush2.msra.mxu0 0.0
      %1411 = vmatprep.subr.mxu0 0.0
      %1412 = vmatpush2.msra.mxu0 0.0
      %1413 = vmatprep.subr.mxu0 0.0
      %1414 = vmatpush2.msra.mxu0 0.0
      %1415 = vmatprep.subr.mxu0 0.0
      %1416 = vmatpush2.msra.mxu0 0.0
      %1417 = vmatprep.subr.mxu0 0.0
      %1418 = vmatpush2.msra.mxu0 0.0
      %1419 = vmatprep.subr.mxu0 0.0
      %1420 = vmatpush2.msra.mxu0 0.0
      %1421 = vmatprep.subr.mxu0 0.0
      %1422 = vmatpush2.msra.mxu0 0.0
      %1423 = vmatprep.subr.mxu0 0.0
      %1424 = vmatpush2.msra.mxu0 0.0
      %1425 = vmatprep.subr.mxu0 0.0
      %1426 = vmatpush2.msra.mxu0 0.0
      %1427 = vmatprep.subr.mxu0 0.0
      %1428 = vmatpush2.msra.mxu0 0.0
      %1429 = vmatprep.subr.mxu0 0.0
      %1430 = vmatpush2.msra.mxu0 0.0
      %1431 = vmatprep.subr.mxu0 0.0
      %1432 = vmatpush2.msra.mxu0 0.0
      %1433 = vmatprep.mubr.f32.mxu0 0.0
      %1434 = vmatmul.mubr.f32.gmra.mxu0 %v1367
      %v1435 = vpop.f32.mrf.mxu0
      %v1436 = vadd.f32 0.0, %v1435
      %v1437 = vpop.f32.mrf.mxu0
      %1438 = vdwg.mxu0
      %v1439 = vrot.slane %v1436, 7
      %v1440 = vrot.slane %v1436, 1
      %v1441 = vld [vmem:[%s9] sm:$0x3f]
      %v1442 = vld [vmem:[%s11] sm:$0x3f]
      %vm1443 = vcmask 48128
      %v1445 = vsel %vm1443, %v1439, 0
      %v1448 = vsel %vm1443, %v1440, 0
      %vm1450 = vcmask 1045504
      %v1452 = vsel %vm1450, %v1442, 0
      %1454 = vmatprep.subr.mxu0 0.0
      %1455 = vmatpush1.msra.mxu0 0.0
      %1456 = vmatprep.subr.mxu0 0.0
      %1457 = vmatpush1.msra.mxu0 0.0
      %1458 = vmatprep.subr.mxu0 0.0
      %1459 = vmatpush1.msra.mxu0 0.0
      %1460 = vmatprep.subr.mxu0 0.0
      %1461 = vmatpush1.msra.mxu0 0.0
      %1462 = vmatprep.subr.mxu0 0.0
      %1463 = vmatpush1.msra.mxu0 0.0
      %1464 = vmatprep.subr.mxu0 0.0
      %1465 = vmatpush1.msra.mxu0 0.0
      %1466 = vmatprep.subr.mxu0 0.0
      %1467 = vmatpush1.msra.mxu0 0.0
      %1468 = vmatprep.subr.mxu0 0.0
      %1469 = vmatpush1.msra.mxu0 0.0
      %1470 = vmatprep.subr.mxu0 0.0
      %1471 = vmatpush1.msra.mxu0 0.0
      %1472 = vmatprep.subr.mxu0 0.0
      %1473 = vmatpush1.msra.mxu0 0.0
      %1474 = vmatprep.subr.mxu0 0.0
      %1475 = vmatpush1.msra.mxu0 0.0
      %1476 = vmatprep.subr.mxu0 0.0
      %1477 = vmatpush1.msra.mxu0 0.0
      %1478 = vmatprep.subr.mxu0 0.0
      %1479 = vmatpush1.msra.mxu0 0.0
      %1480 = vmatprep.subr.mxu0 0.0
      %1481 = vmatpush1.msra.mxu0 0.0
      %1482 = vmatprep.subr.mxu0 0.0
      %1483 = vmatpush1.msra.mxu0 0.0
      %1484 = vmatprep.subr.mxu0 0.0
      %1485 = vmatpush1.msra.mxu0 %v1452
      %1486 = vmatprep.subr.mxu0 0.0
      %1487 = vmatpush2.msra.mxu0 0.0
      %1488 = vmatprep.subr.mxu0 0.0
      %1489 = vmatpush2.msra.mxu0 0.0
      %1490 = vmatprep.subr.mxu0 0.0
      %1491 = vmatpush2.msra.mxu0 0.0
      %1492 = vmatprep.subr.mxu0 0.0
      %1493 = vmatpush2.msra.mxu0 0.0
      %1494 = vmatprep.subr.mxu0 0.0
      %1495 = vmatpush2.msra.mxu0 0.0
      %1496 = vmatprep.subr.mxu0 0.0
      %1497 = vmatpush2.msra.mxu0 0.0
      %1498 = vmatprep.subr.mxu0 0.0
      %1499 = vmatpush2.msra.mxu0 0.0
      %1500 = vmatprep.subr.mxu0 0.0
      %1501 = vmatpush2.msra.mxu0 0.0
      %1502 = vmatprep.subr.mxu0 0.0
      %1503 = vmatpush2.msra.mxu0 0.0
      %1504 = vmatprep.subr.mxu0 0.0
      %1505 = vmatpush2.msra.mxu0 0.0
      %1506 = vmatprep.subr.mxu0 0.0
      %1507 = vmatpush2.msra.mxu0 0.0
      %1508 = vmatprep.subr.mxu0 0.0
      %1509 = vmatpush2.msra.mxu0 0.0
      %1510 = vmatprep.subr.mxu0 0.0
      %1511 = vmatpush2.msra.mxu0 0.0
      %1512 = vmatprep.subr.mxu0 0.0
      %1513 = vmatpush2.msra.mxu0 0.0
      %1514 = vmatprep.subr.mxu0 0.0
      %1515 = vmatpush2.msra.mxu0 0.0
      %1516 = vmatprep.subr.mxu0 0.0
      %1517 = vmatpush2.msra.mxu0 0.0
      %1518 = vmatprep.mubr.f32.mxu0 0.0
      %1519 = vmatmul.mubr.f32.gmra.mxu0 %v1445
      %v1520 = vpop.f32.mrf.mxu0
      %v1521 = vadd.f32 0.0, %v1520
      %v1522 = vpop.f32.mrf.mxu0
      %1523 = vmatprep.mubr.f32.mxu0 0.0
      %1524 = vmatmul.mubr.f32.gmra.mxu0 %v1448
      %v1525 = vpop.f32.mrf.mxu0
      %v1526 = vadd.f32 0.0, %v1525
      %v1527 = vpop.f32.mrf.mxu0
      %1528 = vdwg.mxu0
      %v1530 = vsel %vm1443, %v1436, 0
      %v1533 = vsel %vm1450, %v1441, 0
      %1535 = vmatprep.subr.mxu0 0.0
      %1536 = vmatpush1.msra.mxu0 0.0
      %1537 = vmatprep.subr.mxu0 0.0
      %1538 = vmatpush1.msra.mxu0 0.0
      %1539 = vmatprep.subr.mxu0 0.0
      %1540 = vmatpush1.msra.mxu0 0.0
      %1541 = vmatprep.subr.mxu0 0.0
      %1542 = vmatpush1.msra.mxu0 0.0
      %1543 = vmatprep.subr.mxu0 0.0
      %1544 = vmatpush1.msra.mxu0 0.0
      %1545 = vmatprep.subr.mxu0 0.0
      %1546 = vmatpush1.msra.mxu0 0.0
      %1547 = vmatprep.subr.mxu0 0.0
      %1548 = vmatpush1.msra.mxu0 0.0
      %1549 = vmatprep.subr.mxu0 0.0
      %1550 = vmatpush1.msra.mxu0 0.0
      %1551 = vmatprep.subr.mxu0 0.0
      %1552 = vmatpush1.msra.mxu0 0.0
      %1553 = vmatprep.subr.mxu0 0.0
      %1554 = vmatpush1.msra.mxu0 0.0
      %1555 = vmatprep.subr.mxu0 0.0
      %1556 = vmatpush1.msra.mxu0 0.0
      %1557 = vmatprep.subr.mxu0 0.0
      %1558 = vmatpush1.msra.mxu0 0.0
      %1559 = vmatprep.subr.mxu0 0.0
      %1560 = vmatpush1.msra.mxu0 0.0
      %1561 = vmatprep.subr.mxu0 0.0
      %1562 = vmatpush1.msra.mxu0 0.0
      %1563 = vmatprep.subr.mxu0 0.0
      %1564 = vmatpush1.msra.mxu0 0.0
      %1565 = vmatprep.subr.mxu0 0.0
      %1566 = vmatpush1.msra.mxu0 %v1533
      %1567 = vmatprep.subr.mxu0 0.0
      %1568 = vmatpush2.msra.mxu0 0.0
      %1569 = vmatprep.subr.mxu0 0.0
      %1570 = vmatpush2.msra.mxu0 0.0
      %1571 = vmatprep.subr.mxu0 0.0
      %1572 = vmatpush2.msra.mxu0 0.0
      %1573 = vmatprep.subr.mxu0 0.0
      %1574 = vmatpush2.msra.mxu0 0.0
      %1575 = vmatprep.subr.mxu0 0.0
      %1576 = vmatpush2.msra.mxu0 0.0
      %1577 = vmatprep.subr.mxu0 0.0
      %1578 = vmatpush2.msra.mxu0 0.0
      %1579 = vmatprep.subr.mxu0 0.0
      %1580 = vmatpush2.msra.mxu0 0.0
      %1581 = vmatprep.subr.mxu0 0.0
      %1582 = vmatpush2.msra.mxu0 0.0
      %1583 = vmatprep.subr.mxu0 0.0
      %1584 = vmatpush2.msra.mxu0 0.0
      %1585 = vmatprep.subr.mxu0 0.0
      %1586 = vmatpush2.msra.mxu0 0.0
      %1587 = vmatprep.subr.mxu0 0.0
      %1588 = vmatpush2.msra.mxu0 0.0
      %1589 = vmatprep.subr.mxu0 0.0
      %1590 = vmatpush2.msra.mxu0 0.0
      %1591 = vmatprep.subr.mxu0 0.0
      %1592 = vmatpush2.msra.mxu0 0.0
      %1593 = vmatprep.subr.mxu0 0.0
      %1594 = vmatpush2.msra.mxu0 0.0
      %1595 = vmatprep.subr.mxu0 0.0
      %1596 = vmatpush2.msra.mxu0 0.0
      %1597 = vmatprep.subr.mxu0 0.0
      %1598 = vmatpush2.msra.mxu0 0.0
      %1599 = vmatprep.mubr.f32.mxu0 0.0
      %1600 = vmatmul.mubr.f32.gmra.mxu0 %v1530
      %v1601 = vpop.f32.mrf.mxu0
      %v1602 = vadd.f32 %v1521, %v1601
      %v1603 = vpop.f32.mrf.mxu0
      %1604 = vmatprep.mubr.f32.mxu0 0.0
      %1605 = vmatmul.mubr.f32.gmra.mxu0 %v1530
      %v1606 = vpop.f32.mrf.mxu0
      %v1607 = vadd.f32 %v1526, %v1606
      %v1608 = vpop.f32.mrf.mxu0
      %1609 = vdwg.mxu0
      %v1610 = vld [vmem:[%s13] sm:$0x1]
      %v1612 = vlaneseq
      %v1613 = vshrl.u32 %v1612, 7
      %v1614 = vsub.s32 0, %v1613
      %v1615 = vrot.slane %v1610, %v1614
      %v1617 = vadd.f32 %v1602, %v1615
      %v1618 = vadd.f32 %v1607, %v1615
      %v1619 = vmax.f32 %v1617, 0.0
      %v1620 = vmax.f32 %v1618, 0.0
      %v1621 = vld [vmem:[%s15] sm:$0xff]
      %v1622 = vld [vmem:[%s15 + $0x8] sm:$0xff]
      %v1623 = vld [vmem:[%s15 + $0x10] sm:$0xff]
      %v1624 = vld [vmem:[%s15 + $0x18] sm:$0xff]
      %v1625 = vld [vmem:[%s17] sm:$0x1]
      %v1627 = vlaneseq
      %v1628 = vshrl.u32 %v1627, 7
      %v1629 = vsub.s32 0, %v1628
      %v1630 = vrot.slane %v1625, %v1629
      %vm1632 = vcmask 261120
      %v1634 = vsel %vm1632, %v1619, 0
      %v1637 = vsel %vm1632, %v1620, 0
      %1639 = vmatprep.subr.mxu0 0.0
      %1640 = vmatpush1.msra.mxu0 0.0
      %1641 = vmatprep.subr.mxu0 0.0
      %1642 = vmatpush1.msra.mxu0 0.0
      %1643 = vmatprep.subr.mxu0 0.0
      %1644 = vmatpush1.msra.mxu0 0.0
      %1645 = vmatprep.subr.mxu0 0.0
      %1646 = vmatpush1.msra.mxu0 0.0
      %1647 = vmatprep.subr.mxu0 0.0
      %1648 = vmatpush1.msra.mxu0 0.0
      %1649 = vmatprep.subr.mxu0 0.0
      %1650 = vmatpush1.msra.mxu0 0.0
      %1651 = vmatprep.subr.mxu0 0.0
      %1652 = vmatpush1.msra.mxu0 0.0
      %1653 = vmatprep.subr.mxu0 0.0
      %1654 = vmatpush1.msra.mxu0 0.0
      %1655 = vmatprep.subr.mxu0 0.0
      %1656 = vmatpush1.msra.mxu0 0.0
      %1657 = vmatprep.subr.mxu0 0.0
      %1658 = vmatpush1.msra.mxu0 0.0
      %1659 = vmatprep.subr.mxu0 0.0
      %1660 = vmatpush1.msra.mxu0 0.0
      %1661 = vmatprep.subr.mxu0 0.0
      %1662 = vmatpush1.msra.mxu0 0.0
      %1663 = vmatprep.subr.mxu0 0.0
      %1664 = vmatpush1.msra.mxu0 %v1624
      %1665 = vmatprep.subr.mxu0 0.0
      %1666 = vmatpush1.msra.mxu0 %v1623
      %1667 = vmatprep.subr.mxu0 0.0
      %1668 = vmatpush1.msra.mxu0 %v1622
      %1669 = vmatprep.subr.mxu0 0.0
      %1670 = vmatpush1.msra.mxu0 %v1621
      %1671 = vmatprep.subr.mxu0 0.0
      %1672 = vmatpush2.msra.mxu0 0.0
      %1673 = vmatprep.subr.mxu0 0.0
      %1674 = vmatpush2.msra.mxu0 0.0
      %1675 = vmatprep.subr.mxu0 0.0
      %1676 = vmatpush2.msra.mxu0 0.0
      %1677 = vmatprep.subr.mxu0 0.0
      %1678 = vmatpush2.msra.mxu0 0.0
      %1679 = vmatprep.subr.mxu0 0.0
      %1680 = vmatpush2.msra.mxu0 0.0
      %1681 = vmatprep.subr.mxu0 0.0
      %1682 = vmatpush2.msra.mxu0 0.0
      %1683 = vmatprep.subr.mxu0 0.0
      %1684 = vmatpush2.msra.mxu0 0.0
      %1685 = vmatprep.subr.mxu0 0.0
      %1686 = vmatpush2.msra.mxu0 0.0
      %1687 = vmatprep.subr.mxu0 0.0
      %1688 = vmatpush2.msra.mxu0 0.0
      %1689 = vmatprep.subr.mxu0 0.0
      %1690 = vmatpush2.msra.mxu0 0.0
      %1691 = vmatprep.subr.mxu0 0.0
      %1692 = vmatpush2.msra.mxu0 0.0
      %1693 = vmatprep.subr.mxu0 0.0
      %1694 = vmatpush2.msra.mxu0 0.0
      %1695 = vmatprep.subr.mxu0 0.0
      %1696 = vmatpush2.msra.mxu0 0.0
      %1697 = vmatprep.subr.mxu0 0.0
      %1698 = vmatpush2.msra.mxu0 0.0
      %1699 = vmatprep.subr.mxu0 0.0
      %1700 = vmatpush2.msra.mxu0 0.0
      %1701 = vmatprep.subr.mxu0 0.0
      %1702 = vmatpush2.msra.mxu0 0.0
      %1703 = vmatprep.mubr.f32.mxu0 0.0
      %1704 = vmatmul.mubr.f32.gmra.mxu0 %v1634
      %v1705 = vpop.f32.mrf.mxu0
      %v1706 = vadd.f32 %v1630, %v1705
      %v1707 = vpop.f32.mrf.mxu0
      %1708 = vmatprep.mubr.f32.mxu0 0.0
      %1709 = vmatmul.mubr.f32.gmra.mxu0 %v1637
      %v1710 = vpop.f32.mrf.mxu0
      %v1711 = vadd.f32 %v1630, %v1710
      %v1712 = vpop.f32.mrf.mxu0
      %1713 = vdwg.mxu0
      %v1714 = vmax.f32 %v1706, 0.0
      %v1715 = vmax.f32 %v1711, 0.0
      %v1716 = vld [vmem:[%s19] sm:$0xff]
      %v1717 = vld [vmem:[%s19 + $0x8] sm:$0xff]
      %v1718 = vld [vmem:[%s19 + $0x10] sm:$0xff]
      %v1719 = vld [vmem:[%s19 + $0x18] sm:$0xff]
      %v1720 = vld [vmem:[%s21] sm:$0x1]
      %v1722 = vlaneseq
      %v1723 = vshrl.u32 %v1722, 7
      %v1724 = vsub.s32 0, %v1723
      %v1725 = vrot.slane %v1720, %v1724
      %v1728 = vsel %vm1632, %v1714, 0
      %v1731 = vsel %vm1632, %v1715, 0
      %1733 = vmatprep.subr.mxu0 0.0
      %1734 = vmatpush1.msra.mxu0 0.0
      %1735 = vmatprep.subr.mxu0 0.0
      %1736 = vmatpush1.msra.mxu0 0.0
      %1737 = vmatprep.subr.mxu0 0.0
      %1738 = vmatpush1.msra.mxu0 0.0
      %1739 = vmatprep.subr.mxu0 0.0
      %1740 = vmatpush1.msra.mxu0 0.0
      %1741 = vmatprep.subr.mxu0 0.0
      %1742 = vmatpush1.msra.mxu0 0.0
      %1743 = vmatprep.subr.mxu0 0.0
      %1744 = vmatpush1.msra.mxu0 0.0
      %1745 = vmatprep.subr.mxu0 0.0
      %1746 = vmatpush1.msra.mxu0 0.0
      %1747 = vmatprep.subr.mxu0 0.0
      %1748 = vmatpush1.msra.mxu0 0.0
      %1749 = vmatprep.subr.mxu0 0.0
      %1750 = vmatpush1.msra.mxu0 0.0
      %1751 = vmatprep.subr.mxu0 0.0
      %1752 = vmatpush1.msra.mxu0 0.0
      %1753 = vmatprep.subr.mxu0 0.0
      %1754 = vmatpush1.msra.mxu0 0.0
      %1755 = vmatprep.subr.mxu0 0.0
      %1756 = vmatpush1.msra.mxu0 0.0
      %1757 = vmatprep.subr.mxu0 0.0
      %1758 = vmatpush1.msra.mxu0 %v1719
      %1759 = vmatprep.subr.mxu0 0.0
      %1760 = vmatpush1.msra.mxu0 %v1718
      %1761 = vmatprep.subr.mxu0 0.0
      %1762 = vmatpush1.msra.mxu0 %v1717
      %1763 = vmatprep.subr.mxu0 0.0
      %1764 = vmatpush1.msra.mxu0 %v1716
      %1765 = vmatprep.subr.mxu0 0.0
      %1766 = vmatpush2.msra.mxu0 0.0
      %1767 = vmatprep.subr.mxu0 0.0
      %1768 = vmatpush2.msra.mxu0 0.0
      %1769 = vmatprep.subr.mxu0 0.0
      %1770 = vmatpush2.msra.mxu0 0.0
      %1771 = vmatprep.subr.mxu0 0.0
      %1772 = vmatpush2.msra.mxu0 0.0
      %1773 = vmatprep.subr.mxu0 0.0
      %1774 = vmatpush2.msra.mxu0 0.0
      %1775 = vmatprep.subr.mxu0 0.0
      %1776 = vmatpush2.msra.mxu0 0.0
      %1777 = vmatprep.subr.mxu0 0.0
      %1778 = vmatpush2.msra.mxu0 0.0
      %1779 = vmatprep.subr.mxu0 0.0
      %1780 = vmatpush2.msra.mxu0 0.0
      %1781 = vmatprep.subr.mxu0 0.0
      %1782 = vmatpush2.msra.mxu0 0.0
      %1783 = vmatprep.subr.mxu0 0.0
      %1784 = vmatpush2.msra.mxu0 0.0
      %1785 = vmatprep.subr.mxu0 0.0
      %1786 = vmatpush2.msra.mxu0 0.0
      %1787 = vmatprep.subr.mxu0 0.0
      %1788 = vmatpush2.msra.mxu0 0.0
      %1789 = vmatprep.subr.mxu0 0.0
      %1790 = vmatpush2.msra.mxu0 0.0
      %1791 = vmatprep.subr.mxu0 0.0
      %1792 = vmatpush2.msra.mxu0 0.0
      %1793 = vmatprep.subr.mxu0 0.0
      %1794 = vmatpush2.msra.mxu0 0.0
      %1795 = vmatprep.subr.mxu0 0.0
      %1796 = vmatpush2.msra.mxu0 0.0
      %1797 = vmatprep.mubr.f32.mxu0 0.0
      %1798 = vmatmul.mubr.f32.gmra.mxu0 %v1728
      %v1799 = vpop.f32.mrf.mxu0
      %v1800 = vadd.f32 %v1725, %v1799
      %v1801 = vpop.f32.mrf.mxu0
      %1802 = vmatprep.mubr.f32.mxu0 0.0
      %1803 = vmatmul.mubr.f32.gmra.mxu0 %v1731
      %v1804 = vpop.f32.mrf.mxu0
      %v1805 = vadd.f32 %v1725, %v1804
      %v1806 = vpop.f32.mrf.mxu0
      %1807 = vdwg.mxu0
      %v1808 = vadd.f32 %v1800, %v1805
      %v1809 = vld [vmem:[%s23] sm:$0x3f]
      %v1810 = vld [vmem:[%s25] sm:$0x3f]
      %v1812 = vsel %vm1443, %v1808, 0
      %v1815 = vsel %vm1450, %v1810, 0
      %1817 = vmatprep.subr.mxu0 0.0
      %1818 = vmatpush1.msra.mxu0 0.0
      %1819 = vmatprep.subr.mxu0 0.0
      %1820 = vmatpush1.msra.mxu0 0.0
      %1821 = vmatprep.subr.mxu0 0.0
      %1822 = vmatpush1.msra.mxu0 0.0
      %1823 = vmatprep.subr.mxu0 0.0
      %1824 = vmatpush1.msra.mxu0 0.0
      %1825 = vmatprep.subr.mxu0 0.0
      %1826 = vmatpush1.msra.mxu0 0.0
      %1827 = vmatprep.subr.mxu0 0.0
      %1828 = vmatpush1.msra.mxu0 0.0
      %1829 = vmatprep.subr.mxu0 0.0
      %1830 = vmatpush1.msra.mxu0 0.0
      %1831 = vmatprep.subr.mxu0 0.0
      %1832 = vmatpush1.msra.mxu0 0.0
      %1833 = vmatprep.subr.mxu0 0.0
      %1834 = vmatpush1.msra.mxu0 0.0
      %1835 = vmatprep.subr.mxu0 0.0
      %1836 = vmatpush1.msra.mxu0 0.0
      %1837 = vmatprep.subr.mxu0 0.0
      %1838 = vmatpush1.msra.mxu0 0.0
      %1839 = vmatprep.subr.mxu0 0.0
      %1840 = vmatpush1.msra.mxu0 0.0
      %1841 = vmatprep.subr.mxu0 0.0
      %1842 = vmatpush1.msra.mxu0 0.0
      %1843 = vmatprep.subr.mxu0 0.0
      %1844 = vmatpush1.msra.mxu0 0.0
      %1845 = vmatprep.subr.mxu0 0.0
      %1846 = vmatpush1.msra.mxu0 0.0
      %1847 = vmatprep.subr.mxu0 0.0
      %1848 = vmatpush1.msra.mxu0 %v1815
      %1849 = vmatprep.subr.mxu0 0.0
      %1850 = vmatpush2.msra.mxu0 0.0
      %1851 = vmatprep.subr.mxu0 0.0
      %1852 = vmatpush2.msra.mxu0 0.0
      %1853 = vmatprep.subr.mxu0 0.0
      %1854 = vmatpush2.msra.mxu0 0.0
      %1855 = vmatprep.subr.mxu0 0.0
      %1856 = vmatpush2.msra.mxu0 0.0
      %1857 = vmatprep.subr.mxu0 0.0
      %1858 = vmatpush2.msra.mxu0 0.0
      %1859 = vmatprep.subr.mxu0 0.0
      %1860 = vmatpush2.msra.mxu0 0.0
      %1861 = vmatprep.subr.mxu0 0.0
      %1862 = vmatpush2.msra.mxu0 0.0
      %1863 = vmatprep.subr.mxu0 0.0
      %1864 = vmatpush2.msra.mxu0 0.0
      %1865 = vmatprep.subr.mxu0 0.0
      %1866 = vmatpush2.msra.mxu0 0.0
      %1867 = vmatprep.subr.mxu0 0.0
      %1868 = vmatpush2.msra.mxu0 0.0
      %1869 = vmatprep.subr.mxu0 0.0
      %1870 = vmatpush2.msra.mxu0 0.0
      %1871 = vmatprep.subr.mxu0 0.0
      %1872 = vmatpush2.msra.mxu0 0.0
      %1873 = vmatprep.subr.mxu0 0.0
      %1874 = vmatpush2.msra.mxu0 0.0
      %1875 = vmatprep.subr.mxu0 0.0
      %1876 = vmatpush2.msra.mxu0 0.0
      %1877 = vmatprep.subr.mxu0 0.0
      %1878 = vmatpush2.msra.mxu0 0.0
      %1879 = vmatprep.subr.mxu0 0.0
      %1880 = vmatpush2.msra.mxu0 0.0
      %1881 = vmatprep.mubr.f32.mxu0 0.0
      %1882 = vmatmul.mubr.f32.gmra.mxu0 %v1812
      %v1883 = vpop.f32.mrf.mxu0
      %v1884 = vadd.f32 0.0, %v1883
      %v1885 = vpop.f32.mrf.mxu0
      %1886 = vdwg.mxu0
      %v1888 = vsel %vm1450, %v1809, 0
      %1890 = vmatprep.subr.mxu0 0.0
      %1891 = vmatpush1.msra.mxu0 0.0
      %1892 = vmatprep.subr.mxu0 0.0
      %1893 = vmatpush1.msra.mxu0 0.0
      %1894 = vmatprep.subr.mxu0 0.0
      %1895 = vmatpush1.msra.mxu0 0.0
      %1896 = vmatprep.subr.mxu0 0.0
      %1897 = vmatpush1.msra.mxu0 0.0
      %1898 = vmatprep.subr.mxu0 0.0
      %1899 = vmatpush1.msra.mxu0 0.0
      %1900 = vmatprep.subr.mxu0 0.0
      %1901 = vmatpush1.msra.mxu0 0.0
      %1902 = vmatprep.subr.mxu0 0.0
      %1903 = vmatpush1.msra.mxu0 0.0
      %1904 = vmatprep.subr.mxu0 0.0
      %1905 = vmatpush1.msra.mxu0 0.0
      %1906 = vmatprep.subr.mxu0 0.0
      %1907 = vmatpush1.msra.mxu0 0.0
      %1908 = vmatprep.subr.mxu0 0.0
      %1909 = vmatpush1.msra.mxu0 0.0
      %1910 = vmatprep.subr.mxu0 0.0
      %1911 = vmatpush1.msra.mxu0 0.0
      %1912 = vmatprep.subr.mxu0 0.0
      %1913 = vmatpush1.msra.mxu0 0.0
      %1914 = vmatprep.subr.mxu0 0.0
      %1915 = vmatpush1.msra.mxu0 0.0
      %1916 = vmatprep.subr.mxu0 0.0
      %1917 = vmatpush1.msra.mxu0 0.0
      %1918 = vmatprep.subr.mxu0 0.0
      %1919 = vmatpush1.msra.mxu0 0.0
      %1920 = vmatprep.subr.mxu0 0.0
      %1921 = vmatpush1.msra.mxu0 %v1888
      %1922 = vmatprep.subr.mxu0 0.0
      %1923 = vmatpush2.msra.mxu0 0.0
      %1924 = vmatprep.subr.mxu0 0.0
      %1925 = vmatpush2.msra.mxu0 0.0
      %1926 = vmatprep.subr.mxu0 0.0
      %1927 = vmatpush2.msra.mxu0 0.0
      %1928 = vmatprep.subr.mxu0 0.0
      %1929 = vmatpush2.msra.mxu0 0.0
      %1930 = vmatprep.subr.mxu0 0.0
      %1931 = vmatpush2.msra.mxu0 0.0
      %1932 = vmatprep.subr.mxu0 0.0
      %1933 = vmatpush2.msra.mxu0 0.0
      %1934 = vmatprep.subr.mxu0 0.0
      %1935 = vmatpush2.msra.mxu0 0.0
      %1936 = vmatprep.subr.mxu0 0.0
      %1937 = vmatpush2.msra.mxu0 0.0
      %1938 = vmatprep.subr.mxu0 0.0
      %1939 = vmatpush2.msra.mxu0 0.0
      %1940 = vmatprep.subr.mxu0 0.0
      %1941 = vmatpush2.msra.mxu0 0.0
      %1942 = vmatprep.subr.mxu0 0.0
      %1943 = vmatpush2.msra.mxu0 0.0
      %1944 = vmatprep.subr.mxu0 0.0
      %1945 = vmatpush2.msra.mxu0 0.0
      %1946 = vmatprep.subr.mxu0 0.0
      %1947 = vmatpush2.msra.mxu0 0.0
      %1948 = vmatprep.subr.mxu0 0.0
      %1949 = vmatpush2.msra.mxu0 0.0
      %1950 = vmatprep.subr.mxu0 0.0
      %1951 = vmatpush2.msra.mxu0 0.0
      %1952 = vmatprep.subr.mxu0 0.0
      %1953 = vmatpush2.msra.mxu0 0.0
      %1954 = vmatprep.mubr.f32.mxu0 0.0
      %1955 = vmatmul.mubr.f32.gmra.mxu0 %v1530
      %v1956 = vpop.f32.mrf.mxu0
      %v1957 = vadd.f32 %v1884, %v1956
      %v1958 = vpop.f32.mrf.mxu0
      %1959 = vdwg.mxu0
      %v1960 = vld [vmem:[%s27] sm:$0x1]
      %v1962 = vlaneseq
      %v1963 = vshrl.u32 %v1962, 7
      %v1964 = vsub.s32 0, %v1963
      %v1965 = vrot.slane %v1960, %v1964
      %v1967 = vadd.f32 %v1957, %v1965
      %v1968 = vmax.f32 %v1967, 0.0
      %v1969 = vld [vmem:[%s29] sm:$0xff]
      %v1970 = vld [vmem:[%s29 + $0x8] sm:$0xff]
      %v1971 = vld [vmem:[%s29 + $0x10] sm:$0xff]
      %v1972 = vld [vmem:[%s29 + $0x18] sm:$0xff]
      %v1973 = vld [vmem:[%s31] sm:$0x1]
      %v1975 = vlaneseq
      %v1976 = vshrl.u32 %v1975, 7
      %v1977 = vsub.s32 0, %v1976
      %v1978 = vrot.slane %v1973, %v1977
      %v1981 = vsel %vm1632, %v1968, 0
      %1983 = vmatprep.subr.mxu0 0.0
      %1984 = vmatpush1.msra.mxu0 0.0
      %1985 = vmatprep.subr.mxu0 0.0
      %1986 = vmatpush1.msra.mxu0 0.0
      %1987 = vmatprep.subr.mxu0 0.0
      %1988 = vmatpush1.msra.mxu0 0.0
      %1989 = vmatprep.subr.mxu0 0.0
      %1990 = vmatpush1.msra.mxu0 0.0
      %1991 = vmatprep.subr.mxu0 0.0
      %1992 = vmatpush1.msra.mxu0 0.0
      %1993 = vmatprep.subr.mxu0 0.0
      %1994 = vmatpush1.msra.mxu0 0.0
      %1995 = vmatprep.subr.mxu0 0.0
      %1996 = vmatpush1.msra.mxu0 0.0
      %1997 = vmatprep.subr.mxu0 0.0
      %1998 = vmatpush1.msra.mxu0 0.0
      %1999 = vmatprep.subr.mxu0 0.0
      %2000 = vmatpush1.msra.mxu0 0.0
      %2001 = vmatprep.subr.mxu0 0.0
      %2002 = vmatpush1.msra.mxu0 0.0
      %2003 = vmatprep.subr.mxu0 0.0
      %2004 = vmatpush1.msra.mxu0 0.0
      %2005 = vmatprep.subr.mxu0 0.0
      %2006 = vmatpush1.msra.mxu0 0.0
      %2007 = vmatprep.subr.mxu0 0.0
      %2008 = vmatpush1.msra.mxu0 %v1972
      %2009 = vmatprep.subr.mxu0 0.0
      %2010 = vmatpush1.msra.mxu0 %v1971
      %2011 = vmatprep.subr.mxu0 0.0
      %2012 = vmatpush1.msra.mxu0 %v1970
      %2013 = vmatprep.subr.mxu0 0.0
      %2014 = vmatpush1.msra.mxu0 %v1969
      %2015 = vmatprep.subr.mxu0 0.0
      %2016 = vmatpush2.msra.mxu0 0.0
      %2017 = vmatprep.subr.mxu0 0.0
      %2018 = vmatpush2.msra.mxu0 0.0
      %2019 = vmatprep.subr.mxu0 0.0
      %2020 = vmatpush2.msra.mxu0 0.0
      %2021 = vmatprep.subr.mxu0 0.0
      %2022 = vmatpush2.msra.mxu0 0.0
      %2023 = vmatprep.subr.mxu0 0.0
      %2024 = vmatpush2.msra.mxu0 0.0
      %2025 = vmatprep.subr.mxu0 0.0
      %2026 = vmatpush2.msra.mxu0 0.0
      %2027 = vmatprep.subr.mxu0 0.0
      %2028 = vmatpush2.msra.mxu0 0.0
      %2029 = vmatprep.subr.mxu0 0.0
      %2030 = vmatpush2.msra.mxu0 0.0
      %2031 = vmatprep.subr.mxu0 0.0
      %2032 = vmatpush2.msra.mxu0 0.0
      %2033 = vmatprep.subr.mxu0 0.0
      %2034 = vmatpush2.msra.mxu0 0.0
      %2035 = vmatprep.subr.mxu0 0.0
      %2036 = vmatpush2.msra.mxu0 0.0
      %2037 = vmatprep.subr.mxu0 0.0
      %2038 = vmatpush2.msra.mxu0 0.0
      %2039 = vmatprep.subr.mxu0 0.0
      %2040 = vmatpush2.msra.mxu0 0.0
      %2041 = vmatprep.subr.mxu0 0.0
      %2042 = vmatpush2.msra.mxu0 0.0
      %2043 = vmatprep.subr.mxu0 0.0
      %2044 = vmatpush2.msra.mxu0 0.0
      %2045 = vmatprep.subr.mxu0 0.0
      %2046 = vmatpush2.msra.mxu0 0.0
      %2047 = vmatprep.mubr.f32.mxu0 0.0
      %2048 = vmatmul.mubr.f32.gmra.mxu0 %v1981
      %v2049 = vpop.f32.mrf.mxu0
      %v2050 = vadd.f32 %v1978, %v2049
      %v2051 = vpop.f32.mrf.mxu0
      %2052 = vdwg.mxu0
      %v2053 = vmax.f32 %v2050, 0.0
      %v2054 = vld [vmem:[%s33] sm:$0xff]
      %v2055 = vld [vmem:[%s33 + $0x8] sm:$0xff]
      %v2056 = vld [vmem:[%s33 + $0x10] sm:$0xff]
      %v2057 = vld [vmem:[%s33 + $0x18] sm:$0xff]
      %v2058 = vld [vmem:[%s35] sm:$0x1]
      %v2060 = vlaneseq
      %v2061 = vshrl.u32 %v2060, 7
      %v2062 = vsub.s32 0, %v2061
      %v2063 = vrot.slane %v2058, %v2062
      %v2066 = vsel %vm1632, %v2053, 0
      %2068 = vmatprep.subr.mxu0 0.0
      %2069 = vmatpush1.msra.mxu0 0.0
      %2070 = vmatprep.subr.mxu0 0.0
      %2071 = vmatpush1.msra.mxu0 0.0
      %2072 = vmatprep.subr.mxu0 0.0
      %2073 = vmatpush1.msra.mxu0 0.0
      %2074 = vmatprep.subr.mxu0 0.0
      %2075 = vmatpush1.msra.mxu0 0.0
      %2076 = vmatprep.subr.mxu0 0.0
      %2077 = vmatpush1.msra.mxu0 0.0
      %2078 = vmatprep.subr.mxu0 0.0
      %2079 = vmatpush1.msra.mxu0 0.0
      %2080 = vmatprep.subr.mxu0 0.0
      %2081 = vmatpush1.msra.mxu0 0.0
      %2082 = vmatprep.subr.mxu0 0.0
      %2083 = vmatpush1.msra.mxu0 0.0
      %2084 = vmatprep.subr.mxu0 0.0
      %2085 = vmatpush1.msra.mxu0 0.0
      %2086 = vmatprep.subr.mxu0 0.0
      %2087 = vmatpush1.msra.mxu0 0.0
      %2088 = vmatprep.subr.mxu0 0.0
      %2089 = vmatpush1.msra.mxu0 0.0
      %2090 = vmatprep.subr.mxu0 0.0
      %2091 = vmatpush1.msra.mxu0 0.0
      %2092 = vmatprep.subr.mxu0 0.0
      %2093 = vmatpush1.msra.mxu0 %v2057
      %2094 = vmatprep.subr.mxu0 0.0
      %2095 = vmatpush1.msra.mxu0 %v2056
      %2096 = vmatprep.subr.mxu0 0.0
      %2097 = vmatpush1.msra.mxu0 %v2055
      %2098 = vmatprep.subr.mxu0 0.0
      %2099 = vmatpush1.msra.mxu0 %v2054
      %2100 = vmatprep.subr.mxu0 0.0
      %2101 = vmatpush2.msra.mxu0 0.0
      %2102 = vmatprep.subr.mxu0 0.0
      %2103 = vmatpush2.msra.mxu0 0.0
      %2104 = vmatprep.subr.mxu0 0.0
      %2105 = vmatpush2.msra.mxu0 0.0
      %2106 = vmatprep.subr.mxu0 0.0
      %2107 = vmatpush2.msra.mxu0 0.0
      %2108 = vmatprep.subr.mxu0 0.0
      %2109 = vmatpush2.msra.mxu0 0.0
      %2110 = vmatprep.subr.mxu0 0.0
      %2111 = vmatpush2.msra.mxu0 0.0
      %2112 = vmatprep.subr.mxu0 0.0
      %2113 = vmatpush2.msra.mxu0 0.0
      %2114 = vmatprep.subr.mxu0 0.0
      %2115 = vmatpush2.msra.mxu0 0.0
      %2116 = vmatprep.subr.mxu0 0.0
      %2117 = vmatpush2.msra.mxu0 0.0
      %2118 = vmatprep.subr.mxu0 0.0
      %2119 = vmatpush2.msra.mxu0 0.0
      %2120 = vmatprep.subr.mxu0 0.0
      %2121 = vmatpush2.msra.mxu0 0.0
      %2122 = vmatprep.subr.mxu0 0.0
      %2123 = vmatpush2.msra.mxu0 0.0
      %2124 = vmatprep.subr.mxu0 0.0
      %2125 = vmatpush2.msra.mxu0 0.0
      %2126 = vmatprep.subr.mxu0 0.0
      %2127 = vmatpush2.msra.mxu0 0.0
      %2128 = vmatprep.subr.mxu0 0.0
      %2129 = vmatpush2.msra.mxu0 0.0
      %2130 = vmatprep.subr.mxu0 0.0
      %2131 = vmatpush2.msra.mxu0 0.0
      %2132 = vmatprep.mubr.f32.mxu0 0.0
      %2133 = vmatmul.mubr.f32.gmra.mxu0 %v2066
      %v2134 = vpop.f32.mrf.mxu0
      %v2135 = vadd.f32 %v2063, %v2134
      %v2136 = vpop.f32.mrf.mxu0
      %2137 = vdwg.mxu0
      %v2138 = vadd.f32 %v1436, %v2135
      %v2139 = vrot.slane %v2138, 7
      %v2140 = vrot.slane %v2138, 1
      %v2141 = vld [vmem:[%s37] sm:$0x3f]
      %v2142 = vld [vmem:[%s39] sm:$0x3f]
      %v2144 = vsel %vm1443, %v2139, 0
      %v2147 = vsel %vm1443, %v2140, 0
      %v2150 = vsel %vm1450, %v2142, 0
      %2152 = vmatprep.subr.mxu0 0.0
      %2153 = vmatpush1.msra.mxu0 0.0
      %2154 = vmatprep.subr.mxu0 0.0
      %2155 = vmatpush1.msra.mxu0 0.0
      %2156 = vmatprep.subr.mxu0 0.0
      %2157 = vmatpush1.msra.mxu0 0.0
      %2158 = vmatprep.subr.mxu0 0.0
      %2159 = vmatpush1.msra.mxu0 0.0
      %2160 = vmatprep.subr.mxu0 0.0
      %2161 = vmatpush1.msra.mxu0 0.0
      %2162 = vmatprep.subr.mxu0 0.0
      %2163 = vmatpush1.msra.mxu0 0.0
      %2164 = vmatprep.subr.mxu0 0.0
      %2165 = vmatpush1.msra.mxu0 0.0
      %2166 = vmatprep.subr.mxu0 0.0
      %2167 = vmatpush1.msra.mxu0 0.0
      %2168 = vmatprep.subr.mxu0 0.0
      %2169 = vmatpush1.msra.mxu0 0.0
      %2170 = vmatprep.subr.mxu0 0.0
      %2171 = vmatpush1.msra.mxu0 0.0
      %2172 = vmatprep.subr.mxu0 0.0
      %2173 = vmatpush1.msra.mxu0 0.0
      %2174 = vmatprep.subr.mxu0 0.0
      %2175 = vmatpush1.msra.mxu0 0.0
      %2176 = vmatprep.subr.mxu0 0.0
      %2177 = vmatpush1.msra.mxu0 0.0
      %2178 = vmatprep.subr.mxu0 0.0
      %2179 = vmatpush1.msra.mxu0 0.0
      %2180 = vmatprep.subr.mxu0 0.0
      %2181 = vmatpush1.msra.mxu0 0.0
      %2182 = vmatprep.subr.mxu0 0.0
      %2183 = vmatpush1.msra.mxu0 %v2150
      %2184 = vmatprep.subr.mxu0 0.0
      %2185 = vmatpush2.msra.mxu0 0.0
      %2186 = vmatprep.subr.mxu0 0.0
      %2187 = vmatpush2.msra.mxu0 0.0
      %2188 = vmatprep.subr.mxu0 0.0
      %2189 = vmatpush2.msra.mxu0 0.0
      %2190 = vmatprep.subr.mxu0 0.0
      %2191 = vmatpush2.msra.mxu0 0.0
      %2192 = vmatprep.subr.mxu0 0.0
      %2193 = vmatpush2.msra.mxu0 0.0
      %2194 = vmatprep.subr.mxu0 0.0
      %2195 = vmatpush2.msra.mxu0 0.0
      %2196 = vmatprep.subr.mxu0 0.0
      %2197 = vmatpush2.msra.mxu0 0.0
      %2198 = vmatprep.subr.mxu0 0.0
      %2199 = vmatpush2.msra.mxu0 0.0
      %2200 = vmatprep.subr.mxu0 0.0
      %2201 = vmatpush2.msra.mxu0 0.0
      %2202 = vmatprep.subr.mxu0 0.0
      %2203 = vmatpush2.msra.mxu0 0.0
      %2204 = vmatprep.subr.mxu0 0.0
      %2205 = vmatpush2.msra.mxu0 0.0
      %2206 = vmatprep.subr.mxu0 0.0
      %2207 = vmatpush2.msra.mxu0 0.0
      %2208 = vmatprep.subr.mxu0 0.0
      %2209 = vmatpush2.msra.mxu0 0.0
      %2210 = vmatprep.subr.mxu0 0.0
      %2211 = vmatpush2.msra.mxu0 0.0
      %2212 = vmatprep.subr.mxu0 0.0
      %2213 = vmatpush2.msra.mxu0 0.0
      %2214 = vmatprep.subr.mxu0 0.0
      %2215 = vmatpush2.msra.mxu0 0.0
      %2216 = vmatprep.mubr.f32.mxu0 0.0
      %2217 = vmatmul.mubr.f32.gmra.mxu0 %v2144
      %v2218 = vpop.f32.mrf.mxu0
      %v2219 = vadd.f32 0.0, %v2218
      %v2220 = vpop.f32.mrf.mxu0
      %2221 = vmatprep.mubr.f32.mxu0 0.0
      %2222 = vmatmul.mubr.f32.gmra.mxu0 %v2147
      %v2223 = vpop.f32.mrf.mxu0
      %v2224 = vadd.f32 0.0, %v2223
      %v2225 = vpop.f32.mrf.mxu0
      %2226 = vdwg.mxu0
      %v2228 = vsel %vm1443, %v2138, 0
      %v2231 = vsel %vm1450, %v2141, 0
      %2233 = vmatprep.subr.mxu0 0.0
      %2234 = vmatpush1.msra.mxu0 0.0
      %2235 = vmatprep.subr.mxu0 0.0
      %2236 = vmatpush1.msra.mxu0 0.0
      %2237 = vmatprep.subr.mxu0 0.0
      %2238 = vmatpush1.msra.mxu0 0.0
      %2239 = vmatprep.subr.mxu0 0.0
      %2240 = vmatpush1.msra.mxu0 0.0
      %2241 = vmatprep.subr.mxu0 0.0
      %2242 = vmatpush1.msra.mxu0 0.0
      %2243 = vmatprep.subr.mxu0 0.0
      %2244 = vmatpush1.msra.mxu0 0.0
      %2245 = vmatprep.subr.mxu0 0.0
      %2246 = vmatpush1.msra.mxu0 0.0
      %2247 = vmatprep.subr.mxu0 0.0
      %2248 = vmatpush1.msra.mxu0 0.0
      %2249 = vmatprep.subr.mxu0 0.0
      %2250 = vmatpush1.msra.mxu0 0.0
      %2251 = vmatprep.subr.mxu0 0.0
      %2252 = vmatpush1.msra.mxu0 0.0
      %2253 = vmatprep.subr.mxu0 0.0
      %2254 = vmatpush1.msra.mxu0 0.0
      %2255 = vmatprep.subr.mxu0 0.0
      %2256 = vmatpush1.msra.mxu0 0.0
      %2257 = vmatprep.subr.mxu0 0.0
      %2258 = vmatpush1.msra.mxu0 0.0
      %2259 = vmatprep.subr.mxu0 0.0
      %2260 = vmatpush1.msra.mxu0 0.0
      %2261 = vmatprep.subr.mxu0 0.0
      %2262 = vmatpush1.msra.mxu0 0.0
      %2263 = vmatprep.subr.mxu0 0.0
      %2264 = vmatpush1.msra.mxu0 %v2231
      %2265 = vmatprep.subr.mxu0 0.0
      %2266 = vmatpush2.msra.mxu0 0.0
      %2267 = vmatprep.subr.mxu0 0.0
      %2268 = vmatpush2.msra.mxu0 0.0
      %2269 = vmatprep.subr.mxu0 0.0
      %2270 = vmatpush2.msra.mxu0 0.0
      %2271 = vmatprep.subr.mxu0 0.0
      %2272 = vmatpush2.msra.mxu0 0.0
      %2273 = vmatprep.subr.mxu0 0.0
      %2274 = vmatpush2.msra.mxu0 0.0
      %2275 = vmatprep.subr.mxu0 0.0
      %2276 = vmatpush2.msra.mxu0 0.0
      %2277 = vmatprep.subr.mxu0 0.0
      %2278 = vmatpush2.msra.mxu0 0.0
      %2279 = vmatprep.subr.mxu0 0.0
      %2280 = vmatpush2.msra.mxu0 0.0
      %2281 = vmatprep.subr.mxu0 0.0
      %2282 = vmatpush2.msra.mxu0 0.0
      %2283 = vmatprep.subr.mxu0 0.0
      %2284 = vmatpush2.msra.mxu0 0.0
      %2285 = vmatprep.subr.mxu0 0.0
      %2286 = vmatpush2.msra.mxu0 0.0
      %2287 = vmatprep.subr.mxu0 0.0
      %2288 = vmatpush2.msra.mxu0 0.0
      %2289 = vmatprep.subr.mxu0 0.0
      %2290 = vmatpush2.msra.mxu0 0.0
      %2291 = vmatprep.subr.mxu0 0.0
      %2292 = vmatpush2.msra.mxu0 0.0
      %2293 = vmatprep.subr.mxu0 0.0
      %2294 = vmatpush2.msra.mxu0 0.0
      %2295 = vmatprep.subr.mxu0 0.0
      %2296 = vmatpush2.msra.mxu0 0.0
      %2297 = vmatprep.mubr.f32.mxu0 0.0
      %2298 = vmatmul.mubr.f32.gmra.mxu0 %v2228
      %v2299 = vpop.f32.mrf.mxu0
      %v2300 = vadd.f32 %v2219, %v2299
      %v2301 = vpop.f32.mrf.mxu0
      %2302 = vmatprep.mubr.f32.mxu0 0.0
      %2303 = vmatmul.mubr.f32.gmra.mxu0 %v2228
      %v2304 = vpop.f32.mrf.mxu0
      %v2305 = vadd.f32 %v2224, %v2304
      %v2306 = vpop.f32.mrf.mxu0
      %2307 = vdwg.mxu0
      %v2308 = vld [vmem:[%s41] sm:$0x1]
      %v2310 = vlaneseq
      %v2311 = vshrl.u32 %v2310, 7
      %v2312 = vsub.s32 0, %v2311
      %v2313 = vrot.slane %v2308, %v2312
      %v2315 = vadd.f32 %v2300, %v2313
      %v2316 = vadd.f32 %v2305, %v2313
      %v2317 = vmax.f32 %v2315, 0.0
      %v2318 = vmax.f32 %v2316, 0.0
      %v2319 = vld [vmem:[%s43] sm:$0xff]
      %v2320 = vld [vmem:[%s43 + $0x8] sm:$0xff]
      %v2321 = vld [vmem:[%s43 + $0x10] sm:$0xff]
      %v2322 = vld [vmem:[%s43 + $0x18] sm:$0xff]
      %v2323 = vld [vmem:[%s45] sm:$0x1]
      %v2325 = vlaneseq
      %v2326 = vshrl.u32 %v2325, 7
      %v2327 = vsub.s32 0, %v2326
      %v2328 = vrot.slane %v2323, %v2327
      %v2331 = vsel %vm1632, %v2317, 0
      %v2334 = vsel %vm1632, %v2318, 0
      %2336 = vmatprep.subr.mxu0 0.0
      %2337 = vmatpush1.msra.mxu0 0.0
      %2338 = vmatprep.subr.mxu0 0.0
      %2339 = vmatpush1.msra.mxu0 0.0
      %2340 = vmatprep.subr.mxu0 0.0
      %2341 = vmatpush1.msra.mxu0 0.0
      %2342 = vmatprep.subr.mxu0 0.0
      %2343 = vmatpush1.msra.mxu0 0.0
      %2344 = vmatprep.subr.mxu0 0.0
      %2345 = vmatpush1.msra.mxu0 0.0
      %2346 = vmatprep.subr.mxu0 0.0
      %2347 = vmatpush1.msra.mxu0 0.0
      %2348 = vmatprep.subr.mxu0 0.0
      %2349 = vmatpush1.msra.mxu0 0.0
      %2350 = vmatprep.subr.mxu0 0.0
      %2351 = vmatpush1.msra.mxu0 0.0
      %2352 = vmatprep.subr.mxu0 0.0
      %2353 = vmatpush1.msra.mxu0 0.0
      %2354 = vmatprep.subr.mxu0 0.0
      %2355 = vmatpush1.msra.mxu0 0.0
      %2356 = vmatprep.subr.mxu0 0.0
      %2357 = vmatpush1.msra.mxu0 0.0
      %2358 = vmatprep.subr.mxu0 0.0
      %2359 = vmatpush1.msra.mxu0 0.0
      %2360 = vmatprep.subr.mxu0 0.0
      %2361 = vmatpush1.msra.mxu0 %v2322
      %2362 = vmatprep.subr.mxu0 0.0
      %2363 = vmatpush1.msra.mxu0 %v2321
      %2364 = vmatprep.subr.mxu0 0.0
      %2365 = vmatpush1.msra.mxu0 %v2320
      %2366 = vmatprep.subr.mxu0 0.0
      %2367 = vmatpush1.msra.mxu0 %v2319
      %2368 = vmatprep.subr.mxu0 0.0
      %2369 = vmatpush2.msra.mxu0 0.0
      %2370 = vmatprep.subr.mxu0 0.0
      %2371 = vmatpush2.msra.mxu0 0.0
      %2372 = vmatprep.subr.mxu0 0.0
      %2373 = vmatpush2.msra.mxu0 0.0
      %2374 = vmatprep.subr.mxu0 0.0
      %2375 = vmatpush2.msra.mxu0 0.0
      %2376 = vmatprep.subr.mxu0 0.0
      %2377 = vmatpush2.msra.mxu0 0.0
      %2378 = vmatprep.subr.mxu0 0.0
      %2379 = vmatpush2.msra.mxu0 0.0
      %2380 = vmatprep.subr.mxu0 0.0
      %2381 = vmatpush2.msra.mxu0 0.0
      %2382 = vmatprep.subr.mxu0 0.0
      %2383 = vmatpush2.msra.mxu0 0.0
      %2384 = vmatprep.subr.mxu0 0.0
      %2385 = vmatpush2.msra.mxu0 0.0
      %2386 = vmatprep.subr.mxu0 0.0
      %2387 = vmatpush2.msra.mxu0 0.0
      %2388 = vmatprep.subr.mxu0 0.0
      %2389 = vmatpush2.msra.mxu0 0.0
      %2390 = vmatprep.subr.mxu0 0.0
      %2391 = vmatpush2.msra.mxu0 0.0
      %2392 = vmatprep.subr.mxu0 0.0
      %2393 = vmatpush2.msra.mxu0 0.0
      %2394 = vmatprep.subr.mxu0 0.0
      %2395 = vmatpush2.msra.mxu0 0.0
      %2396 = vmatprep.subr.mxu0 0.0
      %2397 = vmatpush2.msra.mxu0 0.0
      %2398 = vmatprep.subr.mxu0 0.0
      %2399 = vmatpush2.msra.mxu0 0.0
      %2400 = vmatprep.mubr.f32.mxu0 0.0
      %2401 = vmatmul.mubr.f32.gmra.mxu0 %v2331
      %v2402 = vpop.f32.mrf.mxu0
      %v2403 = vadd.f32 %v2328, %v2402
      %v2404 = vpop.f32.mrf.mxu0
      %2405 = vmatprep.mubr.f32.mxu0 0.0
      %2406 = vmatmul.mubr.f32.gmra.mxu0 %v2334
      %v2407 = vpop.f32.mrf.mxu0
      %v2408 = vadd.f32 %v2328, %v2407
      %v2409 = vpop.f32.mrf.mxu0
      %2410 = vdwg.mxu0
      %v2411 = vmax.f32 %v2403, 0.0
      %v2412 = vmax.f32 %v2408, 0.0
      %v2413 = vld [vmem:[%s47] sm:$0xff]
      %v2414 = vld [vmem:[%s47 + $0x8] sm:$0xff]
      %v2415 = vld [vmem:[%s47 + $0x10] sm:$0xff]
      %v2416 = vld [vmem:[%s47 + $0x18] sm:$0xff]
      %v2417 = vld [vmem:[%s49] sm:$0x1]
      %v2419 = vlaneseq
      %v2420 = vshrl.u32 %v2419, 7
      %v2421 = vsub.s32 0, %v2420
      %v2422 = vrot.slane %v2417, %v2421
      %v2425 = vsel %vm1632, %v2411, 0
      %v2428 = vsel %vm1632, %v2412, 0
      %2430 = vmatprep.subr.mxu0 0.0
      %2431 = vmatpush1.msra.mxu0 0.0
      %2432 = vmatprep.subr.mxu0 0.0
      %2433 = vmatpush1.msra.mxu0 0.0
      %2434 = vmatprep.subr.mxu0 0.0
      %2435 = vmatpush1.msra.mxu0 0.0
      %2436 = vmatprep.subr.mxu0 0.0
      %2437 = vmatpush1.msra.mxu0 0.0
      %2438 = vmatprep.subr.mxu0 0.0
      %2439 = vmatpush1.msra.mxu0 0.0
      %2440 = vmatprep.subr.mxu0 0.0
      %2441 = vmatpush1.msra.mxu0 0.0
      %2442 = vmatprep.subr.mxu0 0.0
      %2443 = vmatpush1.msra.mxu0 0.0
      %2444 = vmatprep.subr.mxu0 0.0
      %2445 = vmatpush1.msra.mxu0 0.0
      %2446 = vmatprep.subr.mxu0 0.0
      %2447 = vmatpush1.msra.mxu0 0.0
      %2448 = vmatprep.subr.mxu0 0.0
      %2449 = vmatpush1.msra.mxu0 0.0
      %2450 = vmatprep.subr.mxu0 0.0
      %2451 = vmatpush1.msra.mxu0 0.0
      %2452 = vmatprep.subr.mxu0 0.0
      %2453 = vmatpush1.msra.mxu0 0.0
      %2454 = vmatprep.subr.mxu0 0.0
      %2455 = vmatpush1.msra.mxu0 %v2416
      %2456 = vmatprep.subr.mxu0 0.0
      %2457 = vmatpush1.msra.mxu0 %v2415
      %2458 = vmatprep.subr.mxu0 0.0
      %2459 = vmatpush1.msra.mxu0 %v2414
      %2460 = vmatprep.subr.mxu0 0.0
      %2461 = vmatpush1.msra.mxu0 %v2413
      %2462 = vmatprep.subr.mxu0 0.0
      %2463 = vmatpush2.msra.mxu0 0.0
      %2464 = vmatprep.subr.mxu0 0.0
      %2465 = vmatpush2.msra.mxu0 0.0
      %2466 = vmatprep.subr.mxu0 0.0
      %2467 = vmatpush2.msra.mxu0 0.0
      %2468 = vmatprep.subr.mxu0 0.0
      %2469 = vmatpush2.msra.mxu0 0.0
      %2470 = vmatprep.subr.mxu0 0.0
      %2471 = vmatpush2.msra.mxu0 0.0
      %2472 = vmatprep.subr.mxu0 0.0
      %2473 = vmatpush2.msra.mxu0 0.0
      %2474 = vmatprep.subr.mxu0 0.0
      %2475 = vmatpush2.msra.mxu0 0.0
      %2476 = vmatprep.subr.mxu0 0.0
      %2477 = vmatpush2.msra.mxu0 0.0
      %2478 = vmatprep.subr.mxu0 0.0
      %2479 = vmatpush2.msra.mxu0 0.0
      %2480 = vmatprep.subr.mxu0 0.0
      %2481 = vmatpush2.msra.mxu0 0.0
      %2482 = vmatprep.subr.mxu0 0.0
      %2483 = vmatpush2.msra.mxu0 0.0
      %2484 = vmatprep.subr.mxu0 0.0
      %2485 = vmatpush2.msra.mxu0 0.0
      %2486 = vmatprep.subr.mxu0 0.0
      %2487 = vmatpush2.msra.mxu0 0.0
      %2488 = vmatprep.subr.mxu0 0.0
      %2489 = vmatpush2.msra.mxu0 0.0
      %2490 = vmatprep.subr.mxu0 0.0
      %2491 = vmatpush2.msra.mxu0 0.0
      %2492 = vmatprep.subr.mxu0 0.0
      %2493 = vmatpush2.msra.mxu0 0.0
      %2494 = vmatprep.mubr.f32.mxu0 0.0
      %2495 = vmatmul.mubr.f32.gmra.mxu0 %v2425
      %v2496 = vpop.f32.mrf.mxu0
      %v2497 = vadd.f32 %v2422, %v2496
      %v2498 = vpop.f32.mrf.mxu0
      %2499 = vmatprep.mubr.f32.mxu0 0.0
      %2500 = vmatmul.mubr.f32.gmra.mxu0 %v2428
      %v2501 = vpop.f32.mrf.mxu0
      %v2502 = vadd.f32 %v2422, %v2501
      %v2503 = vpop.f32.mrf.mxu0
      %2504 = vdwg.mxu0
      %v2505 = vadd.f32 %v2497, %v2502
      %v2506 = vld [vmem:[%s51] sm:$0x3f]
      %v2507 = vld [vmem:[%s53] sm:$0x3f]
      %v2509 = vsel %vm1443, %v2505, 0
      %v2512 = vsel %vm1450, %v2507, 0
      %2514 = vmatprep.subr.mxu0 0.0
      %2515 = vmatpush1.msra.mxu0 0.0
      %2516 = vmatprep.subr.mxu0 0.0
      %2517 = vmatpush1.msra.mxu0 0.0
      %2518 = vmatprep.subr.mxu0 0.0
      %2519 = vmatpush1.msra.mxu0 0.0
      %2520 = vmatprep.subr.mxu0 0.0
      %2521 = vmatpush1.msra.mxu0 0.0
      %2522 = vmatprep.subr.mxu0 0.0
      %2523 = vmatpush1.msra.mxu0 0.0
      %2524 = vmatprep.subr.mxu0 0.0
      %2525 = vmatpush1.msra.mxu0 0.0
      %2526 = vmatprep.subr.mxu0 0.0
      %2527 = vmatpush1.msra.mxu0 0.0
      %2528 = vmatprep.subr.mxu0 0.0
      %2529 = vmatpush1.msra.mxu0 0.0
      %2530 = vmatprep.subr.mxu0 0.0
      %2531 = vmatpush1.msra.mxu0 0.0
      %2532 = vmatprep.subr.mxu0 0.0
      %2533 = vmatpush1.msra.mxu0 0.0
      %2534 = vmatprep.subr.mxu0 0.0
      %2535 = vmatpush1.msra.mxu0 0.0
      %2536 = vmatprep.subr.mxu0 0.0
      %2537 = vmatpush1.msra.mxu0 0.0
      %2538 = vmatprep.subr.mxu0 0.0
      %2539 = vmatpush1.msra.mxu0 0.0
      %2540 = vmatprep.subr.mxu0 0.0
      %2541 = vmatpush1.msra.mxu0 0.0
      %2542 = vmatprep.subr.mxu0 0.0
      %2543 = vmatpush1.msra.mxu0 0.0
      %2544 = vmatprep.subr.mxu0 0.0
      %2545 = vmatpush1.msra.mxu0 %v2512
      %2546 = vmatprep.subr.mxu0 0.0
      %2547 = vmatpush2.msra.mxu0 0.0
      %2548 = vmatprep.subr.mxu0 0.0
      %2549 = vmatpush2.msra.mxu0 0.0
      %2550 = vmatprep.subr.mxu0 0.0
      %2551 = vmatpush2.msra.mxu0 0.0
      %2552 = vmatprep.subr.mxu0 0.0
      %2553 = vmatpush2.msra.mxu0 0.0
      %2554 = vmatprep.subr.mxu0 0.0
      %2555 = vmatpush2.msra.mxu0 0.0
      %2556 = vmatprep.subr.mxu0 0.0
      %2557 = vmatpush2.msra.mxu0 0.0
      %2558 = vmatprep.subr.mxu0 0.0
      %2559 = vmatpush2.msra.mxu0 0.0
      %2560 = vmatprep.subr.mxu0 0.0
      %2561 = vmatpush2.msra.mxu0 0.0
      %2562 = vmatprep.subr.mxu0 0.0
      %2563 = vmatpush2.msra.mxu0 0.0
      %2564 = vmatprep.subr.mxu0 0.0
      %2565 = vmatpush2.msra.mxu0 0.0
      %2566 = vmatprep.subr.mxu0 0.0
      %2567 = vmatpush2.msra.mxu0 0.0
      %2568 = vmatprep.subr.mxu0 0.0
      %2569 = vmatpush2.msra.mxu0 0.0
      %2570 = vmatprep.subr.mxu0 0.0
      %2571 = vmatpush2.msra.mxu0 0.0
      %2572 = vmatprep.subr.mxu0 0.0
      %2573 = vmatpush2.msra.mxu0 0.0
      %2574 = vmatprep.subr.mxu0 0.0
      %2575 = vmatpush2.msra.mxu0 0.0
      %2576 = vmatprep.subr.mxu0 0.0
      %2577 = vmatpush2.msra.mxu0 0.0
      %2578 = vmatprep.mubr.f32.mxu0 0.0
      %2579 = vmatmul.mubr.f32.gmra.mxu0 %v2509
      %v2580 = vpop.f32.mrf.mxu0
      %v2581 = vadd.f32 0.0, %v2580
      %v2582 = vpop.f32.mrf.mxu0
      %2583 = vdwg.mxu0
      %v2585 = vsel %vm1450, %v2506, 0
      %2587 = vmatprep.subr.mxu0 0.0
      %2588 = vmatpush1.msra.mxu0 0.0
      %2589 = vmatprep.subr.mxu0 0.0
      %2590 = vmatpush1.msra.mxu0 0.0
      %2591 = vmatprep.subr.mxu0 0.0
      %2592 = vmatpush1.msra.mxu0 0.0
      %2593 = vmatprep.subr.mxu0 0.0
      %2594 = vmatpush1.msra.mxu0 0.0
      %2595 = vmatprep.subr.mxu0 0.0
      %2596 = vmatpush1.msra.mxu0 0.0
      %2597 = vmatprep.subr.mxu0 0.0
      %2598 = vmatpush1.msra.mxu0 0.0
      %2599 = vmatprep.subr.mxu0 0.0
      %2600 = vmatpush1.msra.mxu0 0.0
      %2601 = vmatprep.subr.mxu0 0.0
      %2602 = vmatpush1.msra.mxu0 0.0
      %2603 = vmatprep.subr.mxu0 0.0
      %2604 = vmatpush1.msra.mxu0 0.0
      %2605 = vmatprep.subr.mxu0 0.0
      %2606 = vmatpush1.msra.mxu0 0.0
      %2607 = vmatprep.subr.mxu0 0.0
      %2608 = vmatpush1.msra.mxu0 0.0
      %2609 = vmatprep.subr.mxu0 0.0
      %2610 = vmatpush1.msra.mxu0 0.0
      %2611 = vmatprep.subr.mxu0 0.0
      %2612 = vmatpush1.msra.mxu0 0.0
      %2613 = vmatprep.subr.mxu0 0.0
      %2614 = vmatpush1.msra.mxu0 0.0
      %2615 = vmatprep.subr.mxu0 0.0
      %2616 = vmatpush1.msra.mxu0 0.0
      %2617 = vmatprep.subr.mxu0 0.0
      %2618 = vmatpush1.msra.mxu0 %v2585
      %2619 = vmatprep.subr.mxu0 0.0
      %2620 = vmatpush2.msra.mxu0 0.0
      %2621 = vmatprep.subr.mxu0 0.0
      %2622 = vmatpush2.msra.mxu0 0.0
      %2623 = vmatprep.subr.mxu0 0.0
      %2624 = vmatpush2.msra.mxu0 0.0
      %2625 = vmatprep.subr.mxu0 0.0
      %2626 = vmatpush2.msra.mxu0 0.0
      %2627 = vmatprep.subr.mxu0 0.0
      %2628 = vmatpush2.msra.mxu0 0.0
      %2629 = vmatprep.subr.mxu0 0.0
      %2630 = vmatpush2.msra.mxu0 0.0
      %2631 = vmatprep.subr.mxu0 0.0
      %2632 = vmatpush2.msra.mxu0 0.0
      %2633 = vmatprep.subr.mxu0 0.0
      %2634 = vmatpush2.msra.mxu0 0.0
      %2635 = vmatprep.subr.mxu0 0.0
      %2636 = vmatpush2.msra.mxu0 0.0
      %2637 = vmatprep.subr.mxu0 0.0
      %2638 = vmatpush2.msra.mxu0 0.0
      %2639 = vmatprep.subr.mxu0 0.0
      %2640 = vmatpush2.msra.mxu0 0.0
      %2641 = vmatprep.subr.mxu0 0.0
      %2642 = vmatpush2.msra.mxu0 0.0
      %2643 = vmatprep.subr.mxu0 0.0
      %2644 = vmatpush2.msra.mxu0 0.0
      %2645 = vmatprep.subr.mxu0 0.0
      %2646 = vmatpush2.msra.mxu0 0.0
      %2647 = vmatprep.subr.mxu0 0.0
      %2648 = vmatpush2.msra.mxu0 0.0
      %2649 = vmatprep.subr.mxu0 0.0
      %2650 = vmatpush2.msra.mxu0 0.0
      %2651 = vmatprep.mubr.f32.mxu0 0.0
      %2652 = vmatmul.mubr.f32.gmra.mxu0 %v2228
      %v2653 = vpop.f32.mrf.mxu0
      %v2654 = vadd.f32 %v2581, %v2653
      %v2655 = vpop.f32.mrf.mxu0
      %2656 = vdwg.mxu0
      %v2657 = vld [vmem:[%s55] sm:$0x1]
      %v2659 = vlaneseq
      %v2660 = vshrl.u32 %v2659, 7
      %v2661 = vsub.s32 0, %v2660
      %v2662 = vrot.slane %v2657, %v2661
      %v2664 = vadd.f32 %v2654, %v2662
      %v2665 = vmax.f32 %v2664, 0.0
      %v2666 = vld [vmem:[%s57] sm:$0xff]
      %v2667 = vld [vmem:[%s57 + $0x8] sm:$0xff]
      %v2668 = vld [vmem:[%s57 + $0x10] sm:$0xff]
      %v2669 = vld [vmem:[%s57 + $0x18] sm:$0xff]
      %v2670 = vld [vmem:[%s59] sm:$0x1]
      %v2672 = vlaneseq
      %v2673 = vshrl.u32 %v2672, 7
      %v2674 = vsub.s32 0, %v2673
      %v2675 = vrot.slane %v2670, %v2674
      %v2678 = vsel %vm1632, %v2665, 0
      %2680 = vmatprep.subr.mxu0 0.0
      %2681 = vmatpush1.msra.mxu0 0.0
      %2682 = vmatprep.subr.mxu0 0.0
      %2683 = vmatpush1.msra.mxu0 0.0
      %2684 = vmatprep.subr.mxu0 0.0
      %2685 = vmatpush1.msra.mxu0 0.0
      %2686 = vmatprep.subr.mxu0 0.0
      %2687 = vmatpush1.msra.mxu0 0.0
      %2688 = vmatprep.subr.mxu0 0.0
      %2689 = vmatpush1.msra.mxu0 0.0
      %2690 = vmatprep.subr.mxu0 0.0
      %2691 = vmatpush1.msra.mxu0 0.0
      %2692 = vmatprep.subr.mxu0 0.0
      %2693 = vmatpush1.msra.mxu0 0.0
      %2694 = vmatprep.subr.mxu0 0.0
      %2695 = vmatpush1.msra.mxu0 0.0
      %2696 = vmatprep.subr.mxu0 0.0
      %2697 = vmatpush1.msra.mxu0 0.0
      %2698 = vmatprep.subr.mxu0 0.0
      %2699 = vmatpush1.msra.mxu0 0.0
      %2700 = vmatprep.subr.mxu0 0.0
      %2701 = vmatpush1.msra.mxu0 0.0
      %2702 = vmatprep.subr.mxu0 0.0
      %2703 = vmatpush1.msra.mxu0 0.0
      %2704 = vmatprep.subr.mxu0 0.0
      %2705 = vmatpush1.msra.mxu0 %v2669
      %2706 = vmatprep.subr.mxu0 0.0
      %2707 = vmatpush1.msra.mxu0 %v2668
      %2708 = vmatprep.subr.mxu0 0.0
      %2709 = vmatpush1.msra.mxu0 %v2667
      %2710 = vmatprep.subr.mxu0 0.0
      %2711 = vmatpush1.msra.mxu0 %v2666
      %2712 = vmatprep.subr.mxu0 0.0
      %2713 = vmatpush2.msra.mxu0 0.0
      %2714 = vmatprep.subr.mxu0 0.0
      %2715 = vmatpush2.msra.mxu0 0.0
      %2716 = vmatprep.subr.mxu0 0.0
      %2717 = vmatpush2.msra.mxu0 0.0
      %2718 = vmatprep.subr.mxu0 0.0
      %2719 = vmatpush2.msra.mxu0 0.0
      %2720 = vmatprep.subr.mxu0 0.0
      %2721 = vmatpush2.msra.mxu0 0.0
      %2722 = vmatprep.subr.mxu0 0.0
      %2723 = vmatpush2.msra.mxu0 0.0
      %2724 = vmatprep.subr.mxu0 0.0
      %2725 = vmatpush2.msra.mxu0 0.0
      %2726 = vmatprep.subr.mxu0 0.0
      %2727 = vmatpush2.msra.mxu0 0.0
      %2728 = vmatprep.subr.mxu0 0.0
      %2729 = vmatpush2.msra.mxu0 0.0
      %2730 = vmatprep.subr.mxu0 0.0
      %2731 = vmatpush2.msra.mxu0 0.0
      %2732 = vmatprep.subr.mxu0 0.0
      %2733 = vmatpush2.msra.mxu0 0.0
      %2734 = vmatprep.subr.mxu0 0.0
      %2735 = vmatpush2.msra.mxu0 0.0
      %2736 = vmatprep.subr.mxu0 0.0
      %2737 = vmatpush2.msra.mxu0 0.0
      %2738 = vmatprep.subr.mxu0 0.0
      %2739 = vmatpush2.msra.mxu0 0.0
      %2740 = vmatprep.subr.mxu0 0.0
      %2741 = vmatpush2.msra.mxu0 0.0
      %2742 = vmatprep.subr.mxu0 0.0
      %2743 = vmatpush2.msra.mxu0 0.0
      %2744 = vmatprep.mubr.f32.mxu0 0.0
      %2745 = vmatmul.mubr.f32.gmra.mxu0 %v2678
      %v2746 = vpop.f32.mrf.mxu0
      %v2747 = vadd.f32 %v2675, %v2746
      %v2748 = vpop.f32.mrf.mxu0
      %2749 = vdwg.mxu0
      %v2750 = vmax.f32 %v2747, 0.0
      %v2751 = vld [vmem:[%s61] sm:$0xff]
      %v2752 = vld [vmem:[%s61 + $0x8] sm:$0xff]
      %v2753 = vld [vmem:[%s61 + $0x10] sm:$0xff]
      %v2754 = vld [vmem:[%s61 + $0x18] sm:$0xff]
      %v2755 = vld [vmem:[%s63] sm:$0x1]
      %v2757 = vlaneseq
      %v2758 = vshrl.u32 %v2757, 7
      %v2759 = vsub.s32 0, %v2758
      %v2760 = vrot.slane %v2755, %v2759
      %v2763 = vsel %vm1632, %v2750, 0
      %2765 = vmatprep.subr.mxu0 0.0
      %2766 = vmatpush1.msra.mxu0 0.0
      %2767 = vmatprep.subr.mxu0 0.0
      %2768 = vmatpush1.msra.mxu0 0.0
      %2769 = vmatprep.subr.mxu0 0.0
      %2770 = vmatpush1.msra.mxu0 0.0
      %2771 = vmatprep.subr.mxu0 0.0
      %2772 = vmatpush1.msra.mxu0 0.0
      %2773 = vmatprep.subr.mxu0 0.0
      %2774 = vmatpush1.msra.mxu0 0.0
      %2775 = vmatprep.subr.mxu0 0.0
      %2776 = vmatpush1.msra.mxu0 0.0
      %2777 = vmatprep.subr.mxu0 0.0
      %2778 = vmatpush1.msra.mxu0 0.0
      %2779 = vmatprep.subr.mxu0 0.0
      %2780 = vmatpush1.msra.mxu0 0.0
      %2781 = vmatprep.subr.mxu0 0.0
      %2782 = vmatpush1.msra.mxu0 0.0
      %2783 = vmatprep.subr.mxu0 0.0
      %2784 = vmatpush1.msra.mxu0 0.0
      %2785 = vmatprep.subr.mxu0 0.0
      %2786 = vmatpush1.msra.mxu0 0.0
      %2787 = vmatprep.subr.mxu0 0.0
      %2788 = vmatpush1.msra.mxu0 0.0
      %2789 = vmatprep.subr.mxu0 0.0
      %2790 = vmatpush1.msra.mxu0 %v2754
      %2791 = vmatprep.subr.mxu0 0.0
      %2792 = vmatpush1.msra.mxu0 %v2753
      %2793 = vmatprep.subr.mxu0 0.0
      %2794 = vmatpush1.msra.mxu0 %v2752
      %2795 = vmatprep.subr.mxu0 0.0
      %2796 = vmatpush1.msra.mxu0 %v2751
      %2797 = vmatprep.subr.mxu0 0.0
      %2798 = vmatpush2.msra.mxu0 0.0
      %2799 = vmatprep.subr.mxu0 0.0
      %2800 = vmatpush2.msra.mxu0 0.0
      %2801 = vmatprep.subr.mxu0 0.0
      %2802 = vmatpush2.msra.mxu0 0.0
      %2803 = vmatprep.subr.mxu0 0.0
      %2804 = vmatpush2.msra.mxu0 0.0
      %2805 = vmatprep.subr.mxu0 0.0
      %2806 = vmatpush2.msra.mxu0 0.0
      %2807 = vmatprep.subr.mxu0 0.0
      %2808 = vmatpush2.msra.mxu0 0.0
      %2809 = vmatprep.subr.mxu0 0.0
      %2810 = vmatpush2.msra.mxu0 0.0
      %2811 = vmatprep.subr.mxu0 0.0
      %2812 = vmatpush2.msra.mxu0 0.0
      %2813 = vmatprep.subr.mxu0 0.0
      %2814 = vmatpush2.msra.mxu0 0.0
      %2815 = vmatprep.subr.mxu0 0.0
      %2816 = vmatpush2.msra.mxu0 0.0
      %2817 = vmatprep.subr.mxu0 0.0
      %2818 = vmatpush2.msra.mxu0 0.0
      %2819 = vmatprep.subr.mxu0 0.0
      %2820 = vmatpush2.msra.mxu0 0.0
      %2821 = vmatprep.subr.mxu0 0.0
      %2822 = vmatpush2.msra.mxu0 0.0
      %2823 = vmatprep.subr.mxu0 0.0
      %2824 = vmatpush2.msra.mxu0 0.0
      %2825 = vmatprep.subr.mxu0 0.0
      %2826 = vmatpush2.msra.mxu0 0.0
      %2827 = vmatprep.subr.mxu0 0.0
      %2828 = vmatpush2.msra.mxu0 0.0
      %2829 = vmatprep.mubr.f32.mxu0 0.0
      %2830 = vmatmul.mubr.f32.gmra.mxu0 %v2763
      %v2831 = vpop.f32.mrf.mxu0
      %v2832 = vadd.f32 %v2760, %v2831
      %v2833 = vpop.f32.mrf.mxu0
      %2834 = vdwg.mxu0
      %v2835 = vadd.f32 %v2138, %v2832
      %v2837 = vsel %vm1224, %v1222, 0
      %2839 = vmatprep.subr.mxu0 0.0
      %2840 = vmatpush1.msra.mxu0 0.0
      %2841 = vmatprep.subr.mxu0 0.0
      %2842 = vmatpush1.msra.mxu0 0.0
      %2843 = vmatprep.subr.mxu0 0.0
      %2844 = vmatpush1.msra.mxu0 0.0
      %2845 = vmatprep.subr.mxu0 0.0
      %2846 = vmatpush1.msra.mxu0 0.0
      %2847 = vmatprep.subr.mxu0 0.0
      %2848 = vmatpush1.msra.mxu0 0.0
      %2849 = vmatprep.subr.mxu0 0.0
      %2850 = vmatpush1.msra.mxu0 0.0
      %2851 = vmatprep.subr.mxu0 0.0
      %2852 = vmatpush1.msra.mxu0 0.0
      %2853 = vmatprep.subr.mxu0 0.0
      %2854 = vmatpush1.msra.mxu0 0.0
      %2855 = vmatprep.subr.mxu0 0.0
      %2856 = vmatpush1.msra.mxu0 0.0
      %2857 = vmatprep.subr.mxu0 0.0
      %2858 = vmatpush1.msra.mxu0 0.0
      %2859 = vmatprep.subr.mxu0 0.0
      %2860 = vmatpush1.msra.mxu0 0.0
      %2861 = vmatprep.subr.mxu0 0.0
      %2862 = vmatpush1.msra.mxu0 0.0
      %2863 = vmatprep.subr.mxu0 0.0
      %2864 = vmatpush1.msra.mxu0 0.0
      %2865 = vmatprep.subr.mxu0 0.0
      %2866 = vmatpush1.msra.mxu0 0.0
      %2867 = vmatprep.subr.mxu0 0.0
      %2868 = vmatpush1.msra.mxu0 0.0
      %2869 = vmatprep.subr.mxu0 0.0
      %2870 = vmatpush1.msra.mxu0 %v1233
      %2871 = vmatprep.subr.mxu0 0.0
      %2872 = vmatpush2.msra.mxu0 0.0
      %2873 = vmatprep.subr.mxu0 0.0
      %2874 = vmatpush2.msra.mxu0 0.0
      %2875 = vmatprep.subr.mxu0 0.0
      %2876 = vmatpush2.msra.mxu0 0.0
      %2877 = vmatprep.subr.mxu0 0.0
      %2878 = vmatpush2.msra.mxu0 0.0
      %2879 = vmatprep.subr.mxu0 0.0
      %2880 = vmatpush2.msra.mxu0 0.0
      %2881 = vmatprep.subr.mxu0 0.0
      %2882 = vmatpush2.msra.mxu0 0.0
      %2883 = vmatprep.subr.mxu0 0.0
      %2884 = vmatpush2.msra.mxu0 0.0
      %2885 = vmatprep.subr.mxu0 0.0
      %2886 = vmatpush2.msra.mxu0 0.0
      %2887 = vmatprep.subr.mxu0 0.0
      %2888 = vmatpush2.msra.mxu0 0.0
      %2889 = vmatprep.subr.mxu0 0.0
      %2890 = vmatpush2.msra.mxu0 0.0
      %2891 = vmatprep.subr.mxu0 0.0
      %2892 = vmatpush2.msra.mxu0 0.0
      %2893 = vmatprep.subr.mxu0 0.0
      %2894 = vmatpush2.msra.mxu0 0.0
      %2895 = vmatprep.subr.mxu0 0.0
      %2896 = vmatpush2.msra.mxu0 0.0
      %2897 = vmatprep.subr.mxu0 0.0
      %2898 = vmatpush2.msra.mxu0 0.0
      %2899 = vmatprep.subr.mxu0 0.0
      %2900 = vmatpush2.msra.mxu0 0.0
      %2901 = vmatprep.subr.mxu0 0.0
      %2902 = vmatpush2.msra.mxu0 0.0
      %2903 = vmatprep.mubr.f32.mxu0 0.0
      %2904 = vmatmul.mubr.f32.gmra.mxu0 %v2837
      %v2905 = vpop.f32.mrf.mxu0
      %v2906 = vadd.f32 0.0, %v2905
      %v2907 = vpop.f32.mrf.mxu0
      %2908 = vdwg.mxu0
      %v2909 = vsel %vm1310, %v2906, -inf
      %2910 = vmax.xlane.f32.xlu0 %v2909
      %v2911 = vpop.xlane.xlu0 %2910
      %v2912 = vsub.f32 %v2906, %v2911
      %v2913 = vmul.f32 %v2912, 1.442695
      %v2914 = vpow.pop %v2913
      %v2915 = vsel %vm1310, %v2914, 0.0
      %2916 = vadd.xlane.f32.xlu0 %v2915
      %v2917 = vpop.xlane.xlu0 %2916
      %v2918 = vrcp.pop %v2917
      %v2919 = vmul.f32 %v2914, %v2918
      %v2921 = vsel %vm1310, %v2919, 0
      %2923 = vmatprep.subr.mxu0 0.0
      %2924 = vmatpush1.msra.mxu0 0.0
      %2925 = vmatprep.subr.mxu0 0.0
      %2926 = vmatpush1.msra.mxu0 0.0
      %2927 = vmatprep.subr.mxu0 0.0
      %2928 = vmatpush1.msra.mxu0 0.0
      %2929 = vmatprep.subr.mxu0 0.0
      %2930 = vmatpush1.msra.mxu0 0.0
      %2931 = vmatprep.subr.mxu0 0.0
      %2932 = vmatpush1.msra.mxu0 0.0
      %2933 = vmatprep.subr.mxu0 0.0
      %2934 = vmatpush1.msra.mxu0 0.0
      %2935 = vmatprep.subr.mxu0 0.0
      %2936 = vmatpush1.msra.mxu0 0.0
      %2937 = vmatprep.subr.mxu0 0.0
      %2938 = vmatpush1.msra.mxu0 0.0
      %2939 = vmatprep.subr.mxu0 0.0
      %2940 = vmatpush1.msra.mxu0 0.0
      %2941 = vmatprep.subr.mxu0 0.0
      %2942 = vmatpush1.msra.mxu0 0.0
      %2943 = vmatprep.subr.mxu0 0.0
      %2944 = vmatpush1.msra.mxu0 0.0
      %2945 = vmatprep.subr.mxu0 0.0
      %2946 = vmatpush1.msra.mxu0 0.0
      %2947 = vmatprep.subr.mxu0 0.0
      %2948 = vmatpush1.msra.mxu0 0.0
      %2949 = vmatprep.subr.mxu0 0.0
      %2950 = vmatpush1.msra.mxu0 0.0
      %2951 = vmatprep.subr.mxu0 0.0
      %2952 = vmatpush1.msra.mxu0 0.0
      %2953 = vmatprep.subr.mxu0 0.0
      %2954 = vmatpush1.msra.mxu0 %v2835
      %2955 = vmatprep.subr.mxu0 0.0
      %2956 = vmatpush2.msra.mxu0 0.0
      %2957 = vmatprep.subr.mxu0 0.0
      %2958 = vmatpush2.msra.mxu0 0.0
      %2959 = vmatprep.subr.mxu0 0.0
      %2960 = vmatpush2.msra.mxu0 0.0
      %2961 = vmatprep.subr.mxu0 0.0
      %2962 = vmatpush2.msra.mxu0 0.0
      %2963 = vmatprep.subr.mxu0 0.0
      %2964 = vmatpush2.msra.mxu0 0.0
      %2965 = vmatprep.subr.mxu0 0.0
      %2966 = vmatpush2.msra.mxu0 0.0
      %2967 = vmatprep.subr.mxu0 0.0
      %2968 = vmatpush2.msra.mxu0 0.0
      %2969 = vmatprep.subr.mxu0 0.0
      %2970 = vmatpush2.msra.mxu0 0.0
      %2971 = vmatprep.subr.mxu0 0.0
      %2972 = vmatpush2.msra.mxu0 0.0
      %2973 = vmatprep.subr.mxu0 0.0
      %2974 = vmatpush2.msra.mxu0 0.0
      %2975 = vmatprep.subr.mxu0 0.0
      %2976 = vmatpush2.msra.mxu0 0.0
      %2977 = vmatprep.subr.mxu0 0.0
      %2978 = vmatpush2.msra.mxu0 0.0
      %2979 = vmatprep.subr.mxu0 0.0
      %2980 = vmatpush2.msra.mxu0 0.0
      %2981 = vmatprep.subr.mxu0 0.0
      %2982 = vmatpush2.msra.mxu0 0.0
      %2983 = vmatprep.subr.mxu0 0.0
      %2984 = vmatpush2.msra.mxu0 0.0
      %2985 = vmatprep.subr.mxu0 0.0
      %2986 = vmatpush2.msra.mxu0 0.0
      %2987 = vmatprep.mubr.f32.mxu0 0.0
      %2988 = vmatmul.mubr.f32.gmra.mxu0 %v2921
      %v2989 = vpop.f32.mrf.mxu0
      %v2990 = vadd.f32 0.0, %v2989
      %v2991 = vpop.f32.mrf.mxu0
      %2992 = vdwg.mxu0
      %v2993 = vld [vmem:[%s65] sm:$0x3f]
      %v2994 = vld [vmem:[%s67] sm:$0xf]
      %v2996 = vsel %vm1231, %v2994, 0
      %2998 = vmatprep.subr.mxu0 0.0
      %2999 = vmatpush1.msra.mxu0 0.0
      %3000 = vmatprep.subr.mxu0 0.0
      %3001 = vmatpush1.msra.mxu0 0.0
      %3002 = vmatprep.subr.mxu0 0.0
      %3003 = vmatpush1.msra.mxu0 0.0
      %3004 = vmatprep.subr.mxu0 0.0
      %3005 = vmatpush1.msra.mxu0 0.0
      %3006 = vmatprep.subr.mxu0 0.0
      %3007 = vmatpush1.msra.mxu0 0.0
      %3008 = vmatprep.subr.mxu0 0.0
      %3009 = vmatpush1.msra.mxu0 0.0
      %3010 = vmatprep.subr.mxu0 0.0
      %3011 = vmatpush1.msra.mxu0 0.0
      %3012 = vmatprep.subr.mxu0 0.0
      %3013 = vmatpush1.msra.mxu0 0.0
      %3014 = vmatprep.subr.mxu0 0.0
      %3015 = vmatpush1.msra.mxu0 0.0
      %3016 = vmatprep.subr.mxu0 0.0
      %3017 = vmatpush1.msra.mxu0 0.0
      %3018 = vmatprep.subr.mxu0 0.0
      %3019 = vmatpush1.msra.mxu0 0.0
      %3020 = vmatprep.subr.mxu0 0.0
      %3021 = vmatpush1.msra.mxu0 0.0
      %3022 = vmatprep.subr.mxu0 0.0
      %3023 = vmatpush1.msra.mxu0 0.0
      %3024 = vmatprep.subr.mxu0 0.0
      %3025 = vmatpush1.msra.mxu0 0.0
      %3026 = vmatprep.subr.mxu0 0.0
      %3027 = vmatpush1.msra.mxu0 0.0
      %3028 = vmatprep.subr.mxu0 0.0
      %3029 = vmatpush1.msra.mxu0 %v2996
      %3030 = vmatprep.subr.mxu0 0.0
      %3031 = vmatpush2.msra.mxu0 0.0
      %3032 = vmatprep.subr.mxu0 0.0
      %3033 = vmatpush2.msra.mxu0 0.0
      %3034 = vmatprep.subr.mxu0 0.0
      %3035 = vmatpush2.msra.mxu0 0.0
      %3036 = vmatprep.subr.mxu0 0.0
      %3037 = vmatpush2.msra.mxu0 0.0
      %3038 = vmatprep.subr.mxu0 0.0
      %3039 = vmatpush2.msra.mxu0 0.0
      %3040 = vmatprep.subr.mxu0 0.0
      %3041 = vmatpush2.msra.mxu0 0.0
      %3042 = vmatprep.subr.mxu0 0.0
      %3043 = vmatpush2.msra.mxu0 0.0
      %3044 = vmatprep.subr.mxu0 0.0
      %3045 = vmatpush2.msra.mxu0 0.0
      %3046 = vmatprep.subr.mxu0 0.0
      %3047 = vmatpush2.msra.mxu0 0.0
      %3048 = vmatprep.subr.mxu0 0.0
      %3049 = vmatpush2.msra.mxu0 0.0
      %3050 = vmatprep.subr.mxu0 0.0
      %3051 = vmatpush2.msra.mxu0 0.0
      %3052 = vmatprep.subr.mxu0 0.0
      %3053 = vmatpush2.msra.mxu0 0.0
      %3054 = vmatprep.subr.mxu0 0.0
      %3055 = vmatpush2.msra.mxu0 0.0
      %3056 = vmatprep.subr.mxu0 0.0
      %3057 = vmatpush2.msra.mxu0 0.0
      %3058 = vmatprep.subr.mxu0 0.0
      %3059 = vmatpush2.msra.mxu0 0.0
      %3060 = vmatprep.subr.mxu0 0.0
      %3061 = vmatpush2.msra.mxu0 0.0
      %3062 = vmatprep.mubr.f32.mxu0 0.0
      %3063 = vmatmul.mubr.f32.gmra.mxu0 %v2837
      %v3064 = vpop.f32.mrf.mxu0
      %v3065 = vadd.f32 0.0, %v3064
      %v3066 = vpop.f32.mrf.mxu0
      %3067 = vdwg.mxu0
      %v3069 = vsel %vm1443, %v2990, 0
      %v3072 = vsel %vm1450, %v2993, 0
      %3074 = vmatprep.subr.mxu0 0.0
      %3075 = vmatpush1.msra.mxu0 0.0
      %3076 = vmatprep.subr.mxu0 0.0
      %3077 = vmatpush1.msra.mxu0 0.0
      %3078 = vmatprep.subr.mxu0 0.0
      %3079 = vmatpush1.msra.mxu0 0.0
      %3080 = vmatprep.subr.mxu0 0.0
      %3081 = vmatpush1.msra.mxu0 0.0
      %3082 = vmatprep.subr.mxu0 0.0
      %3083 = vmatpush1.msra.mxu0 0.0
      %3084 = vmatprep.subr.mxu0 0.0
      %3085 = vmatpush1.msra.mxu0 0.0
      %3086 = vmatprep.subr.mxu0 0.0
      %3087 = vmatpush1.msra.mxu0 0.0
      %3088 = vmatprep.subr.mxu0 0.0
      %3089 = vmatpush1.msra.mxu0 0.0
      %3090 = vmatprep.subr.mxu0 0.0
      %3091 = vmatpush1.msra.mxu0 0.0
      %3092 = vmatprep.subr.mxu0 0.0
      %3093 = vmatpush1.msra.mxu0 0.0
      %3094 = vmatprep.subr.mxu0 0.0
      %3095 = vmatpush1.msra.mxu0 0.0
      %3096 = vmatprep.subr.mxu0 0.0
      %3097 = vmatpush1.msra.mxu0 0.0
      %3098 = vmatprep.subr.mxu0 0.0
      %3099 = vmatpush1.msra.mxu0 0.0
      %3100 = vmatprep.subr.mxu0 0.0
      %3101 = vmatpush1.msra.mxu0 0.0
      %3102 = vmatprep.subr.mxu0 0.0
      %3103 = vmatpush1.msra.mxu0 0.0
      %3104 = vmatprep.subr.mxu0 0.0
      %3105 = vmatpush1.msra.mxu0 %v3072
      %3106 = vmatprep.subr.mxu0 0.0
      %3107 = vmatpush2.msra.mxu0 0.0
      %3108 = vmatprep.subr.mxu0 0.0
      %3109 = vmatpush2.msra.mxu0 0.0
      %3110 = vmatprep.subr.mxu0 0.0
      %3111 = vmatpush2.msra.mxu0 0.0
      %3112 = vmatprep.subr.mxu0 0.0
      %3113 = vmatpush2.msra.mxu0 0.0
      %3114 = vmatprep.subr.mxu0 0.0
      %3115 = vmatpush2.msra.mxu0 0.0
      %3116 = vmatprep.subr.mxu0 0.0
      %3117 = vmatpush2.msra.mxu0 0.0
      %3118 = vmatprep.subr.mxu0 0.0
      %3119 = vmatpush2.msra.mxu0 0.0
      %3120 = vmatprep.subr.mxu0 0.0
      %3121 = vmatpush2.msra.mxu0 0.0
      %3122 = vmatprep.subr.mxu0 0.0
      %3123 = vmatpush2.msra.mxu0 0.0
      %3124 = vmatprep.subr.mxu0 0.0
      %3125 = vmatpush2.msra.mxu0 0.0
      %3126 = vmatprep.subr.mxu0 0.0
      %3127 = vmatpush2.msra.mxu0 0.0
      %3128 = vmatprep.subr.mxu0 0.0
      %3129 = vmatpush2.msra.mxu0 0.0
      %3130 = vmatprep.subr.mxu0 0.0
      %3131 = vmatpush2.msra.mxu0 0.0
      %3132 = vmatprep.subr.mxu0 0.0
      %3133 = vmatpush2.msra.mxu0 0.0
      %3134 = vmatprep.subr.mxu0 0.0
      %3135 = vmatpush2.msra.mxu0 0.0
      %3136 = vmatprep.subr.mxu0 0.0
      %3137 = vmatpush2.msra.mxu0 0.0
      %3138 = vmatprep.mubr.f32.mxu0 0.0
      %3139 = vmatmul.mubr.f32.gmra.mxu0 %v3069
      %v3140 = vpop.f32.mrf.mxu0
      %v3141 = vadd.f32 %v3065, %v3140
      %v3142 = vpop.f32.mrf.mxu0
      %3143 = vdwg.mxu0
      %v3144 = vld [vmem:[%s69] sm:$0x1]
      %v3146 = vlaneseq
      %v3147 = vshrl.u32 %v3146, 7
      %v3148 = vsub.s32 0, %v3147
      %v3149 = vrot.slane %v3144, %v3148
      %v3151 = vadd.f32 %v3141, %v3149
      %v3152 = vmax.f32 %v3151, 0.0
      %v3153 = vld [vmem:[%s71] sm:$0xff]
      %v3154 = vld [vmem:[%s71 + $0x8] sm:$0xff]
      %v3155 = vld [vmem:[%s71 + $0x10] sm:$0xff]
      %v3156 = vld [vmem:[%s71 + $0x18] sm:$0xff]
      %v3157 = vld [vmem:[%s73] sm:$0x1]
      %v3159 = vlaneseq
      %v3160 = vshrl.u32 %v3159, 7
      %v3161 = vsub.s32 0, %v3160
      %v3162 = vrot.slane %v3157, %v3161
      %v3165 = vsel %vm1632, %v3152, 0
      %3167 = vmatprep.subr.mxu0 0.0
      %3168 = vmatpush1.msra.mxu0 0.0
      %3169 = vmatprep.subr.mxu0 0.0
      %3170 = vmatpush1.msra.mxu0 0.0
      %3171 = vmatprep.subr.mxu0 0.0
      %3172 = vmatpush1.msra.mxu0 0.0
      %3173 = vmatprep.subr.mxu0 0.0
      %3174 = vmatpush1.msra.mxu0 0.0
      %3175 = vmatprep.subr.mxu0 0.0
      %3176 = vmatpush1.msra.mxu0 0.0
      %3177 = vmatprep.subr.mxu0 0.0
      %3178 = vmatpush1.msra.mxu0 0.0
      %3179 = vmatprep.subr.mxu0 0.0
      %3180 = vmatpush1.msra.mxu0 0.0
      %3181 = vmatprep.subr.mxu0 0.0
      %3182 = vmatpush1.msra.mxu0 0.0
      %3183 = vmatprep.subr.mxu0 0.0
      %3184 = vmatpush1.msra.mxu0 0.0
      %3185 = vmatprep.subr.mxu0 0.0
      %3186 = vmatpush1.msra.mxu0 0.0
      %3187 = vmatprep.subr.mxu0 0.0
      %3188 = vmatpush1.msra.mxu0 0.0
      %3189 = vmatprep.subr.mxu0 0.0
      %3190 = vmatpush1.msra.mxu0 0.0
      %3191 = vmatprep.subr.mxu0 0.0
      %3192 = vmatpush1.msra.mxu0 %v3156
      %3193 = vmatprep.subr.mxu0 0.0
      %3194 = vmatpush1.msra.mxu0 %v3155
      %3195 = vmatprep.subr.mxu0 0.0
      %3196 = vmatpush1.msra.mxu0 %v3154
      %3197 = vmatprep.subr.mxu0 0.0
      %3198 = vmatpush1.msra.mxu0 %v3153
      %3199 = vmatprep.subr.mxu0 0.0
      %3200 = vmatpush2.msra.mxu0 0.0
      %3201 = vmatprep.subr.mxu0 0.0
      %3202 = vmatpush2.msra.mxu0 0.0
      %3203 = vmatprep.subr.mxu0 0.0
      %3204 = vmatpush2.msra.mxu0 0.0
      %3205 = vmatprep.subr.mxu0 0.0
      %3206 = vmatpush2.msra.mxu0 0.0
      %3207 = vmatprep.subr.mxu0 0.0
      %3208 = vmatpush2.msra.mxu0 0.0
      %3209 = vmatprep.subr.mxu0 0.0
      %3210 = vmatpush2.msra.mxu0 0.0
      %3211 = vmatprep.subr.mxu0 0.0
      %3212 = vmatpush2.msra.mxu0 0.0
      %3213 = vmatprep.subr.mxu0 0.0
      %3214 = vmatpush2.msra.mxu0 0.0
      %3215 = vmatprep.subr.mxu0 0.0
      %3216 = vmatpush2.msra.mxu0 0.0
      %3217 = vmatprep.subr.mxu0 0.0
      %3218 = vmatpush2.msra.mxu0 0.0
      %3219 = vmatprep.subr.mxu0 0.0
      %3220 = vmatpush2.msra.mxu0 0.0
      %3221 = vmatprep.subr.mxu0 0.0
      %3222 = vmatpush2.msra.mxu0 0.0
      %3223 = vmatprep.subr.mxu0 0.0
      %3224 = vmatpush2.msra.mxu0 0.0
      %3225 = vmatprep.subr.mxu0 0.0
      %3226 = vmatpush2.msra.mxu0 0.0
      %3227 = vmatprep.subr.mxu0 0.0
      %3228 = vmatpush2.msra.mxu0 0.0
      %3229 = vmatprep.subr.mxu0 0.0
      %3230 = vmatpush2.msra.mxu0 0.0
      %3231 = vmatprep.mubr.f32.mxu0 0.0
      %3232 = vmatmul.mubr.f32.gmra.mxu0 %v3165
      %v3233 = vpop.f32.mrf.mxu0
      %v3234 = vadd.f32 %v3162, %v3233
      %v3235 = vpop.f32.mrf.mxu0
      %3236 = vdwg.mxu0
      %v3237 = vmax.f32 %v3234, 0.0
      %v3238 = vld [vmem:[%s75] sm:$0xff]
      %v3239 = vld [vmem:[%s75 + $0x8] sm:$0xff]
      %v3240 = vld [vmem:[%s75 + $0x10] sm:$0xff]
      %v3241 = vld [vmem:[%s75 + $0x18] sm:$0xff]
      %v3242 = vld [vmem:[%s77] sm:$0x1]
      %v3244 = vlaneseq
      %v3245 = vshrl.u32 %v3244, 7
      %v3246 = vsub.s32 0, %v3245
      %v3247 = vrot.slane %v3242, %v3246
      %v3250 = vsel %vm1632, %v3237, 0
      %3252 = vmatprep.subr.mxu0 0.0
      %3253 = vmatpush1.msra.mxu0 0.0
      %3254 = vmatprep.subr.mxu0 0.0
      %3255 = vmatpush1.msra.mxu0 0.0
      %3256 = vmatprep.subr.mxu0 0.0
      %3257 = vmatpush1.msra.mxu0 0.0
      %3258 = vmatprep.subr.mxu0 0.0
      %3259 = vmatpush1.msra.mxu0 0.0
      %3260 = vmatprep.subr.mxu0 0.0
      %3261 = vmatpush1.msra.mxu0 0.0
      %3262 = vmatprep.subr.mxu0 0.0
      %3263 = vmatpush1.msra.mxu0 0.0
      %3264 = vmatprep.subr.mxu0 0.0
      %3265 = vmatpush1.msra.mxu0 0.0
      %3266 = vmatprep.subr.mxu0 0.0
      %3267 = vmatpush1.msra.mxu0 0.0
      %3268 = vmatprep.subr.mxu0 0.0
      %3269 = vmatpush1.msra.mxu0 0.0
      %3270 = vmatprep.subr.mxu0 0.0
      %3271 = vmatpush1.msra.mxu0 0.0
      %3272 = vmatprep.subr.mxu0 0.0
      %3273 = vmatpush1.msra.mxu0 0.0
      %3274 = vmatprep.subr.mxu0 0.0
      %3275 = vmatpush1.msra.mxu0 0.0
      %3276 = vmatprep.subr.mxu0 0.0
      %3277 = vmatpush1.msra.mxu0 %v3241
      %3278 = vmatprep.subr.mxu0 0.0
      %3279 = vmatpush1.msra.mxu0 %v3240
      %3280 = vmatprep.subr.mxu0 0.0
      %3281 = vmatpush1.msra.mxu0 %v3239
      %3282 = vmatprep.subr.mxu0 0.0
      %3283 = vmatpush1.msra.mxu0 %v3238
      %3284 = vmatprep.subr.mxu0 0.0
      %3285 = vmatpush2.msra.mxu0 0.0
      %3286 = vmatprep.subr.mxu0 0.0
      %3287 = vmatpush2.msra.mxu0 0.0
      %3288 = vmatprep.subr.mxu0 0.0
      %3289 = vmatpush2.msra.mxu0 0.0
      %3290 = vmatprep.subr.mxu0 0.0
      %3291 = vmatpush2.msra.mxu0 0.0
      %3292 = vmatprep.subr.mxu0 0.0
      %3293 = vmatpush2.msra.mxu0 0.0
      %3294 = vmatprep.subr.mxu0 0.0
      %3295 = vmatpush2.msra.mxu0 0.0
      %3296 = vmatprep.subr.mxu0 0.0
      %3297 = vmatpush2.msra.mxu0 0.0
      %3298 = vmatprep.subr.mxu0 0.0
      %3299 = vmatpush2.msra.mxu0 0.0
      %3300 = vmatprep.subr.mxu0 0.0
      %3301 = vmatpush2.msra.mxu0 0.0
      %3302 = vmatprep.subr.mxu0 0.0
      %3303 = vmatpush2.msra.mxu0 0.0
      %3304 = vmatprep.subr.mxu0 0.0
      %3305 = vmatpush2.msra.mxu0 0.0
      %3306 = vmatprep.subr.mxu0 0.0
      %3307 = vmatpush2.msra.mxu0 0.0
      %3308 = vmatprep.subr.mxu0 0.0
      %3309 = vmatpush2.msra.mxu0 0.0
      %3310 = vmatprep.subr.mxu0 0.0
      %3311 = vmatpush2.msra.mxu0 0.0
      %3312 = vmatprep.subr.mxu0 0.0
      %3313 = vmatpush2.msra.mxu0 0.0
      %3314 = vmatprep.subr.mxu0 0.0
      %3315 = vmatpush2.msra.mxu0 0.0
      %3316 = vmatprep.mubr.f32.mxu0 0.0
      %3317 = vmatmul.mubr.f32.gmra.mxu0 %v3250
      %v3318 = vpop.f32.mrf.mxu0
      %v3319 = vadd.f32 %v3247, %v3318
      %v3320 = vpop.f32.mrf.mxu0
      %3321 = vdwg.mxu0
      %vm3322 = vcmask 15360
      %3323 = vst.msk [vmem:[%s1217] sm:$0xff] %vm3322, %v3319
      %p3324 = scmp.lt.s32.totalorder %s90, 1
      %s3325 = scalar_select %p3324, %s90, 1
      %s3326 = smul.addr %s3325, 8
      %s3327 = scalar_lea.vmem %s79, %s3326
      // Predicated region
      $region177: #{tpu_custom_call.1} parent=175 // pred_check
        %p3328 = pneg %p942
      $region178: #{tpu_custom_call.1} parent=175 // pred_check_branch
        %3330 = sbr.rel (%p3328) target = $region180
      $region179: #{tpu_custom_call.1} parent=175 // pred_region
        _
      $region180: #{tpu_custom_call.1} parent=175 // pred_fallthru
        _
    $region176: #{tpu_custom_call.1} parent=5 // pred_fallthru
      _
    %p3331 = scmp.le.s32.totalorder 2, %s85
    // Predicated region
    $region181: #{tpu_custom_call.1} parent=5 // pred_check
      %p3332 = pneg %p3331
    $region182: #{tpu_custom_call.1} parent=5 // pred_check_branch
      %3334 = sbr.rel (%p3332) target = $region184
    $region183: #{tpu_custom_call.1} parent=5 // pred_region
      %s3335 = ssub.s32 %s85, 2
      // Predicated region
      $region185: #{tpu_custom_call.1} parent=183 // pred_check
        %p3336 = pneg %p948
      $region186: #{tpu_custom_call.1} parent=183 // pred_check_branch
        %3338 = sbr.rel (%p3336) target = $region188
      $region187: #{tpu_custom_call.1} parent=183 // pred_region
        %p3339 = scmp.lt.s32.totalorder %s91, 1
        %s3340 = scalar_select %p3339, %s91, 1
        %s3341 = smul.addr %s3340, 8
        %s3342 = scalar_lea.vmem %s79, %s3341
      $region188: #{tpu_custom_call.1} parent=183 // pred_fallthru
        _
    $region184: #{tpu_custom_call.1} parent=5 // pred_fallthru
      _
  $region6: #{tpu_custom_call.1} parent=0 // loop_footer
    %s89 = sadd.s32 1, %s85
  $region7: #{tpu_custom_call.1} parent=0 // loop_footer_branch
    %84 = sbr.rel target = $region3
  $region8: #{tpu_custom_call.1} parent=0 // loop_exit
    _

</llo_original>
